<compile_context>
chip_gen: v6e
topology: v6e:2x2x1
jax: 0.10.0
libtpu: 0.0.40
codegen_flags: <defaults>
</compile_context>

<pallas_src>
import numpy as np
import jax
import jax.numpy as jnp
from jax.experimental import pallas as pl
from jax.experimental.pallas import tpu as pltpu

# ---- module hyperparameters (from Opt) ----
CHANNELS, IMG_H, IMG_W = 3, 60, 21
IN_DIM = CHANNELS * IMG_H * IMG_W            # 3780
IN_PAD = 3840                                # next multiple of 128 (lane-aligned K)
H1, H2, OUT = 512, 256, 1


def _round_up(x, m):
    return (x + m - 1) // m * m


def _leaky_relu(x, slope=0.2):
    return jnp.where(x > 0, x, slope * x)


def discriminator_kernel(x_ref, w1_ref, b1_ref, w2_ref, b2_ref, w3_ref, b3_ref,
                         out_ref):
    # bf16 x bf16 -> f32 accumulate on the MXU; pointwise math stays f32.
    x = x_ref[...].astype(jnp.bfloat16)                                  # (TB, 3840)

    h1 = jnp.dot(x, w1_ref[...], preferred_element_type=jnp.float32)
    h1 = _leaky_relu(h1 + b1_ref[...])                                   # (TB, 512) f32

    h2 = jnp.dot(h1.astype(jnp.bfloat16), w2_ref[...],
                 preferred_element_type=jnp.float32)
    h2 = _leaky_relu(h2 + b2_ref[...])                                   # (TB, 256) f32

    h3 = jnp.dot(h2.astype(jnp.bfloat16), w3_ref[...],
                 preferred_element_type=jnp.float32)
    out_ref[...] = jax.nn.sigmoid(h3 + b3_ref[...])                      # (TB, 1) f32


def discriminator_forward(img, params, *, tb=256):
    """img: (B, C, H, W) float32; returns validity (B, 1) float32."""
    B = img.shape[0]
    x = img.reshape(B, -1).astype(jnp.float32)        # matches torch .view (row-major)

    # Batch block size: up to `tb`, rounded to the 8-sublane granule for tiny B.
    TB = min(tb, _round_up(B, 8))
    B_pad = _round_up(B, TB)

    # Zero-pad: K to 3840 (lane alignment), batch to a multiple of TB.
    x = jnp.pad(x, ((0, B_pad - B), (0, IN_PAD - IN_DIM)))

    w1, b1, w2, b2, w3, b3 = params
    # bf16 weights (W1 rows zero-padded to match padded K); biases stay f32.
    w1 = jnp.pad(w1, ((0, IN_PAD - IN_DIM), (0, 0))).astype(jnp.bfloat16)
    w2 = w2.astype(jnp.bfloat16)
    w3 = w3.astype(jnp.bfloat16)
    b1 = b1.astype(jnp.float32)
    b2 = b2.astype(jnp.float32)
    b3 = b3.astype(jnp.float32)

    const = lambda i: (0, 0)   # weights/biases: same block every step -> VMEM-resident
    out = pl.pallas_call(
        discriminator_kernel,
        out_shape=jax.ShapeDtypeStruct((B_pad, OUT), jnp.float32),
        grid=(B_pad // TB,),
        in_specs=[
            pl.BlockSpec((TB, IN_PAD), lambda i: (i, 0)),   # x: streamed per batch block
            pl.BlockSpec((IN_PAD, H1), const),              # w1 (bf16, ~3.9 MB)
            pl.BlockSpec((1, H1), const),                   # b1
            pl.BlockSpec((H1, H2), const),                  # w2
            pl.BlockSpec((1, H2), const),                   # b2
            pl.BlockSpec((H2, OUT), const),                 # w3
            pl.BlockSpec((1, OUT), const),                  # b3
        ],
        out_specs=pl.BlockSpec((TB, OUT), lambda i: (i, 0)),
        compiler_params=pltpu.CompilerParams(
            dimension_semantics=("parallel",),   # shard batch blocks across TCs (v7x)
            vmem_limit_bytes=32 << 20,           # weights + 2x double-buffered x block
        ),
    )(x, w1, b1, w2, b2, w3, b3)
    return out[:B]


def init_params(key):
    """Deterministic init mirroring torch.nn.Linear default: U(-1/sqrt(fan_in), +)."""
    ks = jax.random.split(key, 6)

    def lin(kw, kb, fan_in, fan_out):
        bound = 1.0 / np.sqrt(fan_in)
        w = jax.random.uniform(kw, (fan_in, fan_out), jnp.float32, -bound, bound)
        b = jax.random.uniform(kb, (1, fan_out), jnp.float32, -bound, bound)
        return w, b

    w1, b1 = lin(ks[0], ks[1], IN_DIM, H1)
    w2, b2 = lin(ks[2], ks[3], H1, H2)
    w3, b3 = lin(ks[4], ks[5], H2, OUT)
    return (w1, b1, w2, b2, w3, b3)


def reference_forward(img, params):
    """Pure-JAX f32 reference (true PyTorch semantics) for correctness check."""
    w1, b1, w2, b2, w3, b3 = params
    x = img.reshape(img.shape[0], -1)
    h = _leaky_relu(x @ w1 + b1)
    h = _leaky_relu(h @ w2 + b2)
    return jax.nn.sigmoid(h @ w3 + b3)


if __name__ == "__main__":
    key = jax.random.PRNGKey(0)
    k_img, k_params = jax.random.split(key)

    B = 4
    img = jax.random.normal(k_img, (B, CHANNELS, IMG_H, IMG_W), jnp.float32)
    params = init_params(k_params)

    out = discriminator_forward(img, params)
    out = jax.block_until_ready(out)

    ref = reference_forward(img, params)
    assert out.shape == (B, 1), out.shape
    # bf16 weights -> compare against the f32 reference with bf16-level tolerance.
    np.testing.assert_allclose(np.asarray(out), np.asarray(ref), rtol=2e-2, atol=2e-2)

    print("KERNEL_OK")
</pallas_src>

<mosaic_0001>
module attributes {stable_mosaic.version = 11 : i64} {
  func.func @discriminator_kernel(%arg0: i32, %arg1: memref<8x3840xf32, #tpu.memory_space<vmem>>, %arg2: memref<3840x512xbf16, #tpu.memory_space<vmem>>, %arg3: memref<1x512xf32, #tpu.memory_space<vmem>>, %arg4: memref<512x256xbf16, #tpu.memory_space<vmem>>, %arg5: memref<1x256xf32, #tpu.memory_space<vmem>>, %arg6: memref<256x1xbf16, #tpu.memory_space<vmem>>, %arg7: memref<1x1xf32, #tpu.memory_space<vmem>>, %arg8: memref<8x1xf32, #tpu.memory_space<vmem>>) attributes {dimension_semantics = [#tpu.dimension_semantics<parallel>], iteration_bounds = array<i64: 1>, scalar_prefetch = 0 : i64, scratch_operands = 0 : i64, tpu.core_type = #tpu.core_type<tc>, window_params = [{transform_indices = @transform_0, window_bounds = array<i64: 8, 3840>}, {pipeline_mode = #tpu.pipeline_mode<synchronous>, transform_indices = @transform_1, window_bounds = array<i64: 3840, 512>}, {pipeline_mode = #tpu.pipeline_mode<synchronous>, transform_indices = @transform_2, window_bounds = array<i64: 1, 512>}, {pipeline_mode = #tpu.pipeline_mode<synchronous>, transform_indices = @transform_3, window_bounds = array<i64: 512, 256>}, {pipeline_mode = #tpu.pipeline_mode<synchronous>, transform_indices = @transform_4, window_bounds = array<i64: 1, 256>}, {pipeline_mode = #tpu.pipeline_mode<synchronous>, transform_indices = @transform_5, window_bounds = array<i64: 256, 1>}, {pipeline_mode = #tpu.pipeline_mode<synchronous>, transform_indices = @transform_6, window_bounds = array<i64: 1, 1>}, {transform_indices = @transform_7, window_bounds = array<i64: 8, 1>}]} {
    %c0 = arith.constant 0 : index
    %c0_0 = arith.constant 0 : index
    %0 = vector.load %arg1[%c0, %c0_0] : memref<8x3840xf32, #tpu.memory_space<vmem>>, vector<8x3840xf32>
    %1 = arith.truncf %0 : vector<8x3840xf32> to vector<8x3840xbf16>
    %c0_1 = arith.constant 0 : index
    %c0_2 = arith.constant 0 : index
    %2 = vector.load %arg2[%c0_1, %c0_2] : memref<3840x512xbf16, #tpu.memory_space<vmem>>, vector<3840x512xbf16>
    %cst = arith.constant dense<0.000000e+00> : vector<8x512xf32>
    %3 = tpu.matmul %1, %2, %cst {dimension_numbers = #tpu.dot_dimension_numbers<[1], [0], [0], [1], [0, 0, 1, 1], [], []>} : vector<8x3840xbf16>, vector<3840x512xbf16>, vector<8x512xf32> -> vector<8x512xf32>
    %c0_3 = arith.constant 0 : index
    %c0_4 = arith.constant 0 : index
    %4 = vector.load %arg3[%c0_3, %c0_4] : memref<1x512xf32, #tpu.memory_space<vmem>>, vector<1x512xf32>
    %5 = vector.broadcast %4 : vector<1x512xf32> to vector<8x512xf32>
    %6 = arith.addf %3, %5 : vector<8x512xf32>
    %cst_5 = arith.constant 0.000000e+00 : f32
    %7 = vector.broadcast %cst_5 : f32 to vector<8x512xf32>
    %8 = arith.cmpf ogt, %6, %7 : vector<8x512xf32>
    %cst_6 = arith.constant 2.000000e-01 : f32
    %9 = vector.broadcast %cst_6 : f32 to vector<8x512xf32>
    %10 = arith.mulf %9, %6 : vector<8x512xf32>
    %11 = arith.select %8, %6, %10 : vector<8x512xi1>, vector<8x512xf32>
    %12 = arith.truncf %11 : vector<8x512xf32> to vector<8x512xbf16>
    %c0_7 = arith.constant 0 : index
    %c0_8 = arith.constant 0 : index
    %13 = vector.load %arg4[%c0_7, %c0_8] : memref<512x256xbf16, #tpu.memory_space<vmem>>, vector<512x256xbf16>
    %cst_9 = arith.constant dense<0.000000e+00> : vector<8x256xf32>
    %14 = tpu.matmul %12, %13, %cst_9 {dimension_numbers = #tpu.dot_dimension_numbers<[1], [0], [0], [1], [0, 0, 1, 1], [], []>} : vector<8x512xbf16>, vector<512x256xbf16>, vector<8x256xf32> -> vector<8x256xf32>
    %c0_10 = arith.constant 0 : index
    %c0_11 = arith.constant 0 : index
    %15 = vector.load %arg5[%c0_10, %c0_11] : memref<1x256xf32, #tpu.memory_space<vmem>>, vector<1x256xf32>
    %16 = vector.broadcast %15 : vector<1x256xf32> to vector<8x256xf32>
    %17 = arith.addf %14, %16 : vector<8x256xf32>
    %cst_12 = arith.constant 0.000000e+00 : f32
    %18 = vector.broadcast %cst_12 : f32 to vector<8x256xf32>
    %19 = arith.cmpf ogt, %17, %18 : vector<8x256xf32>
    %cst_13 = arith.constant 2.000000e-01 : f32
    %20 = vector.broadcast %cst_13 : f32 to vector<8x256xf32>
    %21 = arith.mulf %20, %17 : vector<8x256xf32>
    %22 = arith.select %19, %17, %21 : vector<8x256xi1>, vector<8x256xf32>
    %23 = arith.truncf %22 : vector<8x256xf32> to vector<8x256xbf16>
    %c0_14 = arith.constant 0 : index
    %c0_15 = arith.constant 0 : index
    %24 = vector.load %arg6[%c0_14, %c0_15] : memref<256x1xbf16, #tpu.memory_space<vmem>>, vector<256x1xbf16>
    %cst_16 = arith.constant dense<0.000000e+00> : vector<8x1xf32>
    %25 = tpu.matmul %23, %24, %cst_16 {dimension_numbers = #tpu.dot_dimension_numbers<[1], [0], [0], [1], [0, 0, 1, 1], [], []>} : vector<8x256xbf16>, vector<256x1xbf16>, vector<8x1xf32> -> vector<8x1xf32>
    %c0_17 = arith.constant 0 : index
    %c0_18 = arith.constant 0 : index
    %26 = vector.load %arg7[%c0_17, %c0_18] : memref<1x1xf32, #tpu.memory_space<vmem>>, vector<1x1xf32>
    %27 = vector.broadcast %26 : vector<1x1xf32> to vector<8x1xf32>
    %28 = arith.addf %25, %27 : vector<8x1xf32>
    %29 = arith.negf %28 : vector<8x1xf32>
    %30 = math.exp %29 : vector<8x1xf32>
    %cst_19 = arith.constant 1.000000e+00 : f32
    %31 = vector.broadcast %cst_19 : f32 to vector<8x1xf32>
    %32 = arith.addf %31, %30 : vector<8x1xf32>
    %33 = arith.divf %31, %32 : vector<8x1xf32>
    %c0_20 = arith.constant 0 : index
    %c0_21 = arith.constant 0 : index
    %34 = vector.load %arg8[%c0_20, %c0_21] : memref<8x1xf32, #tpu.memory_space<vmem>>, vector<8x1xf32>
    tpu.vector_store %arg8[%c0_20, %c0_21], %33 {strides = array<i32>} : memref<8x1xf32, #tpu.memory_space<vmem>>, vector<8x1xf32>,
    return
  }
  func.func @transform_0(%arg0: i32) -> (i32, i32) {
    %c0_i32 = arith.constant 0 : i32
    %c0_i32_0 = arith.constant 0 : i32
    return %arg0, %c0_i32 : i32, i32
  }
  func.func @transform_1(%arg0: i32) -> (i32, i32) {
    %c0_i32 = arith.constant 0 : i32
    %c0_i32_0 = arith.constant 0 : i32
    %c0_i32_1 = arith.constant 0 : i32
    return %c0_i32, %c0_i32_0 : i32, i32
  }
  func.func @transform_2(%arg0: i32) -> (i32, i32) {
    %c0_i32 = arith.constant 0 : i32
    %c0_i32_0 = arith.constant 0 : i32
    %c0_i32_1 = arith.constant 0 : i32
    return %c0_i32, %c0_i32_0 : i32, i32
  }
  func.func @transform_3(%arg0: i32) -> (i32, i32) {
    %c0_i32 = arith.constant 0 : i32
    %c0_i32_0 = arith.constant 0 : i32
    %c0_i32_1 = arith.constant 0 : i32
    return %c0_i32, %c0_i32_0 : i32, i32
  }
  func.func @transform_4(%arg0: i32) -> (i32, i32) {
    %c0_i32 = arith.constant 0 : i32
    %c0_i32_0 = arith.constant 0 : i32
    %c0_i32_1 = arith.constant 0 : i32
    return %c0_i32, %c0_i32_0 : i32, i32
  }
  func.func @transform_5(%arg0: i32) -> (i32, i32) {
    %c0_i32 = arith.constant 0 : i32
    %c0_i32_0 = arith.constant 0 : i32
    %c0_i32_1 = arith.constant 0 : i32
    return %c0_i32, %c0_i32_0 : i32, i32
  }
  func.func @transform_6(%arg0: i32) -> (i32, i32) {
    %c0_i32 = arith.constant 0 : i32
    %c0_i32_0 = arith.constant 0 : i32
    %c0_i32_1 = arith.constant 0 : i32
    return %c0_i32, %c0_i32_0 : i32, i32
  }
  func.func @transform_7(%arg0: i32) -> (i32, i32) {
    %c0_i32 = arith.constant 0 : i32
    %c0_i32_0 = arith.constant 0 : i32
    return %arg0, %c0_i32 : i32, i32
  }
}

</mosaic_0001>

<llo_original>
// kernel: tpu_custom_call.1
$region0: #{tpu_custom_call.1}
  #allocation0 [shape = 'u32[]', space=smem, size = 0x4, offset = 0x4, fixed_abs, tag = 'smem constant byte address 0x4 - core index']
  #allocation1 [shape = 'u32[144,128]{1,0:T(1,128)}', space=vmem, size = 0x12000, scoped, tag = 'internal scratch']
  #allocation2 [shape = 'f32[1,1]{1,0:T(1,128)S(1)}', space=vmem, size = 0x200, scoped, tag = 'scoped memory for tpu_custom_call.1']
  %s0 = inlined_call_operand.hbm [shape: f32[8,3840], index: 0, kind: input, shape index: {}]
  %s1 = inlined_call_operand.hbm [shape: bf16[3840,512], index: 1, kind: input, shape index: {}]
  %s2 = inlined_call_operand.hbm [shape: f32[1,512], index: 2, kind: input, shape index: {}]
  %s3 = inlined_call_operand.hbm [shape: bf16[512,256], index: 3, kind: input, shape index: {}]
  %s4 = inlined_call_operand.hbm [shape: f32[1,256], index: 4, kind: input, shape index: {}]
  %s5 = inlined_call_operand.vmem [shape: bf16[256,1], index: 5, kind: input, shape index: {}]
  %s6 = inlined_call_operand.<no memory space> [shape: f32[1,1], index: 6, kind: input, shape index: {}]
  %s7 = inlined_call_operand.vmem [shape: f32[8,1], index: 7, kind: output, shape index: {}]
  %s8 = sld [smem:[#allocation0]]
  $region58: #{tpu_custom_call.1} parent=0
    _
  %s10 = ssub.s32 1, %s8
  %s11 = scalar_select 0, %s10, %s8
  %v12 = vstv %s6
  %13 = vst [vmem:[#allocation2] sm:$0x1] %v12
  $region1: #{tpu_custom_call.1} parent=0
    #allocation3 [shape = 'u8[122880]{0}', space=vmem, size = 0x1e000, scoped, tag = 'input window, operand 0, single buffered']
    #allocation4 [shape = 's32[1]{0}', space=sflag, size = 0x4, scoped, tag = 'scoped memory for tpu_custom_call.1']
    #allocation5 [shape = 'u8[3932160]{0}', space=vmem, size = 0x3c0000, scoped, tag = 'input window, operand 1, single buffered']
    #allocation6 [shape = 's32[1]{0}', space=sflag, size = 0x4, scoped, tag = 'scoped memory for tpu_custom_call.1']
    #allocation7 [shape = 'u8[2048]{0}', space=vmem, size = 0x800, scoped, tag = 'input window, operand 2, single buffered']
    #allocation8 [shape = 'u8[262144]{0}', space=vmem, size = 0x40000, scoped, tag = 'input window, operand 3, single buffered']
    #allocation9 [shape = 's32[1]{0}', space=sflag, size = 0x4, scoped, tag = 'scoped memory for tpu_custom_call.1']
    #allocation10 [shape = 'u8[1024]{0}', space=vmem, size = 0x400, scoped, tag = 'input window, operand 4, single buffered']
    %14 = vsyncpa [#allocation4], 0
    %15 = vsyncpa [#allocation6], 0
    %16 = vsyncpa [#allocation9], 0
    // Predicated region
    $region2: #{tpu_custom_call.1} parent=1 // pred_check
      _
    $region3: #{tpu_custom_call.1} parent=1 // pred_check_branch
      %18 = sbr.rel (0) target = $region5
    $region4: #{tpu_custom_call.1} parent=1 // pred_region
      %s20 = ssub.s32 3840, 3840
      %21 = vsyncadd [#allocation4], %s20
      %s23 = sshll.u32 [#allocation3], 4
      %s24 = int_to_ptr.vmem [resolvable:$true] %s23
      %26 = dma.hbm_to_vmem [thread:$0]  %s0, 3840, %s24, [#allocation4]
    $region5: #{tpu_custom_call.1} parent=1 // pred_fallthru
      _
    // Predicated region
    $region6: #{tpu_custom_call.1} parent=1 // pred_check
      _
    $region7: #{tpu_custom_call.1} parent=1 // pred_check_branch
      %28 = sbr.rel (0) target = $region9
    $region8: #{tpu_custom_call.1} parent=1 // pred_region
      %s30 = ssub.s32 122880, 122880
      %31 = vsyncadd [#allocation6], %s30
      %s32 = sshll.u32 [#allocation5], 4
      %s33 = int_to_ptr.vmem [resolvable:$true] %s32
      %38 = dma.hbm_to_vmem [thread:$0]  %s1, 122880, %s33, [#allocation6], 256, 256, 16
    $region9: #{tpu_custom_call.1} parent=1 // pred_fallthru
      _
    // Predicated region
    $region10: #{tpu_custom_call.1} parent=1 // pred_check
      _
    $region11: #{tpu_custom_call.1} parent=1 // pred_check_branch
      %40 = sbr.rel (0) target = $region13
    $region12: #{tpu_custom_call.1} parent=1 // pred_region
      %s42 = ssub.s32 64, 64
      %43 = vsyncadd [#allocation6], %s42
      %s45 = sshll.u32 [#allocation7], 4
      %s46 = int_to_ptr.vmem [resolvable:$true] %s45
      %48 = dma.hbm_to_vmem [thread:$0]  %s2, 64, %s46, [#allocation6]
    $region13: #{tpu_custom_call.1} parent=1 // pred_fallthru
      _
    // Predicated region
    $region14: #{tpu_custom_call.1} parent=1 // pred_check
      _
    $region15: #{tpu_custom_call.1} parent=1 // pred_check_branch
      %50 = sbr.rel (0) target = $region17
    $region16: #{tpu_custom_call.1} parent=1 // pred_region
      %s52 = ssub.s32 8192, 8192
      %53 = vsyncadd [#allocation9], %s52
      %s54 = sshll.u32 [#allocation8], 4
      %s55 = int_to_ptr.vmem [resolvable:$true] %s54
      %60 = dma.hbm_to_vmem [thread:$0]  %s3, 8192, %s55, [#allocation9], 128, 128, 8
    $region17: #{tpu_custom_call.1} parent=1 // pred_fallthru
      _
    // Predicated region
    $region18: #{tpu_custom_call.1} parent=1 // pred_check
      _
    $region19: #{tpu_custom_call.1} parent=1 // pred_check_branch
      %62 = sbr.rel (0) target = $region21
    $region20: #{tpu_custom_call.1} parent=1 // pred_region
      %s64 = ssub.s32 32, 32
      %65 = vsyncadd [#allocation9], %s64
      %s67 = sshll.u32 [#allocation10], 4
      %s68 = int_to_ptr.vmem [resolvable:$true] %s67
      %70 = dma.hbm_to_vmem [thread:$0]  %s4, 32, %s68, [#allocation9]
    $region21: #{tpu_custom_call.1} parent=1 // pred_fallthru
      _
    // Predicated region
    $region22: #{tpu_custom_call.1} parent=1 // pred_check
      _
    $region23: #{tpu_custom_call.1} parent=1 // pred_check_branch
      %72 = sbr.rel (0) target = $region25
    $region24: #{tpu_custom_call.1} parent=1 // pred_region
      _
    $region25: #{tpu_custom_call.1} parent=1 // pred_fallthru
      _
    // Predicated region
    $region26: #{tpu_custom_call.1} parent=1 // pred_check
      _
    $region27: #{tpu_custom_call.1} parent=1 // pred_check_branch
      %74 = sbr.rel (0) target = $region29
    $region28: #{tpu_custom_call.1} parent=1 // pred_region
      _
    $region29: #{tpu_custom_call.1} parent=1 // pred_fallthru
      _
    // Predicated region
    $region30: #{tpu_custom_call.1} parent=1 // pred_check
      _
    $region31: #{tpu_custom_call.1} parent=1 // pred_check_branch
      %76 = sbr.rel (0) target = $region33
    $region32: #{tpu_custom_call.1} parent=1 // pred_region
      %77 = dma.done [#allocation4], 3840
    $region33: #{tpu_custom_call.1} parent=1 // pred_fallthru
      _
    // Predicated region
    $region34: #{tpu_custom_call.1} parent=1 // pred_check
      _
    $region35: #{tpu_custom_call.1} parent=1 // pred_check_branch
      %79 = sbr.rel (0) target = $region37
    $region36: #{tpu_custom_call.1} parent=1 // pred_region
      %80 = dma.done [#allocation6], 122880
    $region37: #{tpu_custom_call.1} parent=1 // pred_fallthru
      _
    // Predicated region
    $region38: #{tpu_custom_call.1} parent=1 // pred_check
      _
    $region39: #{tpu_custom_call.1} parent=1 // pred_check_branch
      %82 = sbr.rel (0) target = $region41
    $region40: #{tpu_custom_call.1} parent=1 // pred_region
      %83 = dma.done [#allocation6], 64
    $region41: #{tpu_custom_call.1} parent=1 // pred_fallthru
      _
    // Predicated region
    $region42: #{tpu_custom_call.1} parent=1 // pred_check
      _
    $region43: #{tpu_custom_call.1} parent=1 // pred_check_branch
      %85 = sbr.rel (0) target = $region45
    $region44: #{tpu_custom_call.1} parent=1 // pred_region
      %86 = dma.done [#allocation9], 8192
    $region45: #{tpu_custom_call.1} parent=1 // pred_fallthru
      _
    // Predicated region
    $region46: #{tpu_custom_call.1} parent=1 // pred_check
      _
    $region47: #{tpu_custom_call.1} parent=1 // pred_check_branch
      %88 = sbr.rel (0) target = $region49
    $region48: #{tpu_custom_call.1} parent=1 // pred_region
      %89 = dma.done [#allocation9], 32
    $region49: #{tpu_custom_call.1} parent=1 // pred_fallthru
      _
    %v91 = vld [vmem:[#allocation3] sm:$0xff]
    %v92 = vld [vmem:[#allocation3 + $0x8] sm:$0xff]
    %v93 = vld [vmem:[#allocation3 + $0x10] sm:$0xff]
    %v94 = vld [vmem:[#allocation3 + $0x18] sm:$0xff]
    %v95 = vld [vmem:[#allocation3 + $0x20] sm:$0xff]
    %v96 = vld [vmem:[#allocation3 + $0x28] sm:$0xff]
    %v97 = vld [vmem:[#allocation3 + $0x30] sm:$0xff]
    %v98 = vld [vmem:[#allocation3 + $0x38] sm:$0xff]
    %v99 = vld [vmem:[#allocation3 + $0x40] sm:$0xff]
    %v100 = vld [vmem:[#allocation3 + $0x48] sm:$0xff]
    %v101 = vld [vmem:[#allocation3 + $0x50] sm:$0xff]
    %v102 = vld [vmem:[#allocation3 + $0x58] sm:$0xff]
    %v103 = vld [vmem:[#allocation3 + $0x60] sm:$0xff]
    %v104 = vld [vmem:[#allocation3 + $0x68] sm:$0xff]
    %v105 = vld [vmem:[#allocation3 + $0x70] sm:$0xff]
    %v106 = vld [vmem:[#allocation3 + $0x78] sm:$0xff]
    %v107 = vld [vmem:[#allocation3 + $0x80] sm:$0xff]
    %v108 = vld [vmem:[#allocation3 + $0x88] sm:$0xff]
    %v109 = vld [vmem:[#allocation3 + $0x90] sm:$0xff]
    %v110 = vld [vmem:[#allocation3 + $0x98] sm:$0xff]
    %v111 = vld [vmem:[#allocation3 + $0xa0] sm:$0xff]
    %v112 = vld [vmem:[#allocation3 + $0xa8] sm:$0xff]
    %v113 = vld [vmem:[#allocation3 + $0xb0] sm:$0xff]
    %v114 = vld [vmem:[#allocation3 + $0xb8] sm:$0xff]
    %v115 = vld [vmem:[#allocation3 + $0xc0] sm:$0xff]
    %v116 = vld [vmem:[#allocation3 + $0xc8] sm:$0xff]
    %v117 = vld [vmem:[#allocation3 + $0xd0] sm:$0xff]
    %v118 = vld [vmem:[#allocation3 + $0xd8] sm:$0xff]
    %v119 = vld [vmem:[#allocation3 + $0xe0] sm:$0xff]
    %v120 = vld [vmem:[#allocation3 + $0xe8] sm:$0xff]
    %v121 = vpack.c.bf16 %v91, %v91
    %v122 = vpack.c.bf16 %v92, %v92
    %v123 = vpack.c.bf16 %v93, %v93
    %v124 = vpack.c.bf16 %v94, %v94
    %v125 = vpack.c.bf16 %v95, %v95
    %v126 = vpack.c.bf16 %v96, %v96
    %v127 = vpack.c.bf16 %v97, %v97
    %v128 = vpack.c.bf16 %v98, %v98
    %v129 = vpack.c.bf16 %v99, %v99
    %v130 = vpack.c.bf16 %v100, %v100
    %v131 = vpack.c.bf16 %v101, %v101
    %v132 = vpack.c.bf16 %v102, %v102
    %v133 = vpack.c.bf16 %v103, %v103
    %v134 = vpack.c.bf16 %v104, %v104
    %v135 = vpack.c.bf16 %v105, %v105
    %v136 = vpack.c.bf16 %v106, %v106
    %v137 = vpack.c.bf16 %v107, %v107
    %v138 = vpack.c.bf16 %v108, %v108
    %v139 = vpack.c.bf16 %v109, %v109
    %v140 = vpack.c.bf16 %v110, %v110
    %v141 = vpack.c.bf16 %v111, %v111
    %v142 = vpack.c.bf16 %v112, %v112
    %v143 = vpack.c.bf16 %v113, %v113
    %v144 = vpack.c.bf16 %v114, %v114
    %v145 = vpack.c.bf16 %v115, %v115
    %v146 = vpack.c.bf16 %v116, %v116
    %v147 = vpack.c.bf16 %v117, %v117
    %v148 = vpack.c.bf16 %v118, %v118
    %v149 = vpack.c.bf16 %v119, %v119
    %v150 = vpack.c.bf16 %v120, %v120
    %v151 = vld [vmem:[#allocation5] sm:$0xff]
    %v152 = vld [vmem:[#allocation5 + $0x8] sm:$0xff]
    %v153 = vld [vmem:[#allocation5 + $0x10] sm:$0xff]
    %v154 = vld [vmem:[#allocation5 + $0x18] sm:$0xff]
    %v155 = vld [vmem:[#allocation5 + $0x20] sm:$0xff]
    %v156 = vld [vmem:[#allocation5 + $0x28] sm:$0xff]
    %v157 = vld [vmem:[#allocation5 + $0x30] sm:$0xff]
    %v158 = vld [vmem:[#allocation5 + $0x38] sm:$0xff]
    %v159 = vld [vmem:[#allocation5 + $0x40] sm:$0xff]
    %v160 = vld [vmem:[#allocation5 + $0x48] sm:$0xff]
    %v161 = vld [vmem:[#allocation5 + $0x50] sm:$0xff]
    %v162 = vld [vmem:[#allocation5 + $0x58] sm:$0xff]
    %v163 = vld [vmem:[#allocation5 + $0x60] sm:$0xff]
    %v164 = vld [vmem:[#allocation5 + $0x68] sm:$0xff]
    %v165 = vld [vmem:[#allocation5 + $0x70] sm:$0xff]
    %v166 = vld [vmem:[#allocation5 + $0x78] sm:$0xff]
    %v167 = vld [vmem:[#allocation5 + $0x80] sm:$0xff]
    %v168 = vld [vmem:[#allocation5 + $0x88] sm:$0xff]
    %v169 = vld [vmem:[#allocation5 + $0x90] sm:$0xff]
    %v170 = vld [vmem:[#allocation5 + $0x98] sm:$0xff]
    %v171 = vld [vmem:[#allocation5 + $0xa0] sm:$0xff]
    %v172 = vld [vmem:[#allocation5 + $0xa8] sm:$0xff]
    %v173 = vld [vmem:[#allocation5 + $0xb0] sm:$0xff]
    %v174 = vld [vmem:[#allocation5 + $0xb8] sm:$0xff]
    %v175 = vld [vmem:[#allocation5 + $0xc0] sm:$0xff]
    %v176 = vld [vmem:[#allocation5 + $0xc8] sm:$0xff]
    %v177 = vld [vmem:[#allocation5 + $0xd0] sm:$0xff]
    %v178 = vld [vmem:[#allocation5 + $0xd8] sm:$0xff]
    %v179 = vld [vmem:[#allocation5 + $0xe0] sm:$0xff]
    %v180 = vld [vmem:[#allocation5 + $0xe8] sm:$0xff]
    %v181 = vld [vmem:[#allocation5 + $0xf0] sm:$0xff]
    %v182 = vld [vmem:[#allocation5 + $0xf8] sm:$0xff]
    %v183 = vld [vmem:[#allocation5 + $0x100] sm:$0xff]
    %v184 = vld [vmem:[#allocation5 + $0x108] sm:$0xff]
    %v185 = vld [vmem:[#allocation5 + $0x110] sm:$0xff]
    %v186 = vld [vmem:[#allocation5 + $0x118] sm:$0xff]
    %v187 = vld [vmem:[#allocation5 + $0x120] sm:$0xff]
    %v188 = vld [vmem:[#allocation5 + $0x128] sm:$0xff]
    %v189 = vld [vmem:[#allocation5 + $0x130] sm:$0xff]
    %v190 = vld [vmem:[#allocation5 + $0x138] sm:$0xff]
    %v191 = vld [vmem:[#allocation5 + $0x140] sm:$0xff]
    %v192 = vld [vmem:[#allocation5 + $0x148] sm:$0xff]
    %v193 = vld [vmem:[#allocation5 + $0x150] sm:$0xff]
    %v194 = vld [vmem:[#allocation5 + $0x158] sm:$0xff]
    %v195 = vld [vmem:[#allocation5 + $0x160] sm:$0xff]
    %v196 = vld [vmem:[#allocation5 + $0x168] sm:$0xff]
    %v197 = vld [vmem:[#allocation5 + $0x170] sm:$0xff]
    %v198 = vld [vmem:[#allocation5 + $0x178] sm:$0xff]
    %v199 = vld [vmem:[#allocation5 + $0x180] sm:$0xff]
    %v200 = vld [vmem:[#allocation5 + $0x188] sm:$0xff]
    %v201 = vld [vmem:[#allocation5 + $0x190] sm:$0xff]
    %v202 = vld [vmem:[#allocation5 + $0x198] sm:$0xff]
    %v203 = vld [vmem:[#allocation5 + $0x1a0] sm:$0xff]
    %v204 = vld [vmem:[#allocation5 + $0x1a8] sm:$0xff]
    %v205 = vld [vmem:[#allocation5 + $0x1b0] sm:$0xff]
    %v206 = vld [vmem:[#allocation5 + $0x1b8] sm:$0xff]
    %v207 = vld [vmem:[#allocation5 + $0x1c0] sm:$0xff]
    %v208 = vld [vmem:[#allocation5 + $0x1c8] sm:$0xff]
    %v209 = vld [vmem:[#allocation5 + $0x1d0] sm:$0xff]
    %v210 = vld [vmem:[#allocation5 + $0x1d8] sm:$0xff]
    %v211 = vld [vmem:[#allocation5 + $0x1e0] sm:$0xff]
    %v212 = vld [vmem:[#allocation5 + $0x1e8] sm:$0xff]
    %v213 = vld [vmem:[#allocation5 + $0x1f0] sm:$0xff]
    %v214 = vld [vmem:[#allocation5 + $0x1f8] sm:$0xff]
    %v215 = vld [vmem:[#allocation5 + $0x200] sm:$0xff]
    %v216 = vld [vmem:[#allocation5 + $0x208] sm:$0xff]
    %v217 = vld [vmem:[#allocation5 + $0x210] sm:$0xff]
    %v218 = vld [vmem:[#allocation5 + $0x218] sm:$0xff]
    %v219 = vld [vmem:[#allocation5 + $0x220] sm:$0xff]
    %v220 = vld [vmem:[#allocation5 + $0x228] sm:$0xff]
    %v221 = vld [vmem:[#allocation5 + $0x230] sm:$0xff]
    %v222 = vld [vmem:[#allocation5 + $0x238] sm:$0xff]
    %v223 = vld [vmem:[#allocation5 + $0x240] sm:$0xff]
    %v224 = vld [vmem:[#allocation5 + $0x248] sm:$0xff]
    %v225 = vld [vmem:[#allocation5 + $0x250] sm:$0xff]
    %v226 = vld [vmem:[#allocation5 + $0x258] sm:$0xff]
    %v227 = vld [vmem:[#allocation5 + $0x260] sm:$0xff]
    %v228 = vld [vmem:[#allocation5 + $0x268] sm:$0xff]
    %v229 = vld [vmem:[#allocation5 + $0x270] sm:$0xff]
    %v230 = vld [vmem:[#allocation5 + $0x278] sm:$0xff]
    %v231 = vld [vmem:[#allocation5 + $0x280] sm:$0xff]
    %v232 = vld [vmem:[#allocation5 + $0x288] sm:$0xff]
    %v233 = vld [vmem:[#allocation5 + $0x290] sm:$0xff]
    %v234 = vld [vmem:[#allocation5 + $0x298] sm:$0xff]
    %v235 = vld [vmem:[#allocation5 + $0x2a0] sm:$0xff]
    %v236 = vld [vmem:[#allocation5 + $0x2a8] sm:$0xff]
    %v237 = vld [vmem:[#allocation5 + $0x2b0] sm:$0xff]
    %v238 = vld [vmem:[#allocation5 + $0x2b8] sm:$0xff]
    %v239 = vld [vmem:[#allocation5 + $0x2c0] sm:$0xff]
    %v240 = vld [vmem:[#allocation5 + $0x2c8] sm:$0xff]
    %v241 = vld [vmem:[#allocation5 + $0x2d0] sm:$0xff]
    %v242 = vld [vmem:[#allocation5 + $0x2d8] sm:$0xff]
    %v243 = vld [vmem:[#allocation5 + $0x2e0] sm:$0xff]
    %v244 = vld [vmem:[#allocation5 + $0x2e8] sm:$0xff]
    %v245 = vld [vmem:[#allocation5 + $0x2f0] sm:$0xff]
    %v246 = vld [vmem:[#allocation5 + $0x2f8] sm:$0xff]
    %v247 = vld [vmem:[#allocation5 + $0x300] sm:$0xff]
    %v248 = vld [vmem:[#allocation5 + $0x308] sm:$0xff]
    %v249 = vld [vmem:[#allocation5 + $0x310] sm:$0xff]
    %v250 = vld [vmem:[#allocation5 + $0x318] sm:$0xff]
    %v251 = vld [vmem:[#allocation5 + $0x320] sm:$0xff]
    %v252 = vld [vmem:[#allocation5 + $0x328] sm:$0xff]
    %v253 = vld [vmem:[#allocation5 + $0x330] sm:$0xff]
    %v254 = vld [vmem:[#allocation5 + $0x338] sm:$0xff]
    %v255 = vld [vmem:[#allocation5 + $0x340] sm:$0xff]
    %v256 = vld [vmem:[#allocation5 + $0x348] sm:$0xff]
    %v257 = vld [vmem:[#allocation5 + $0x350] sm:$0xff]
    %v258 = vld [vmem:[#allocation5 + $0x358] sm:$0xff]
    %v259 = vld [vmem:[#allocation5 + $0x360] sm:$0xff]
    %v260 = vld [vmem:[#allocation5 + $0x368] sm:$0xff]
    %v261 = vld [vmem:[#allocation5 + $0x370] sm:$0xff]
    %v262 = vld [vmem:[#allocation5 + $0x378] sm:$0xff]
    %v263 = vld [vmem:[#allocation5 + $0x380] sm:$0xff]
    %v264 = vld [vmem:[#allocation5 + $0x388] sm:$0xff]
    %v265 = vld [vmem:[#allocation5 + $0x390] sm:$0xff]
    %v266 = vld [vmem:[#allocation5 + $0x398] sm:$0xff]
    %v267 = vld [vmem:[#allocation5 + $0x3a0] sm:$0xff]
    %v268 = vld [vmem:[#allocation5 + $0x3a8] sm:$0xff]
    %v269 = vld [vmem:[#allocation5 + $0x3b0] sm:$0xff]
    %v270 = vld [vmem:[#allocation5 + $0x3b8] sm:$0xff]
    %v271 = vld [vmem:[#allocation5 + $0x3c0] sm:$0xff]
    %v272 = vld [vmem:[#allocation5 + $0x3c8] sm:$0xff]
    %v273 = vld [vmem:[#allocation5 + $0x3d0] sm:$0xff]
    %v274 = vld [vmem:[#allocation5 + $0x3d8] sm:$0xff]
    %v275 = vld [vmem:[#allocation5 + $0x3e0] sm:$0xff]
    %v276 = vld [vmem:[#allocation5 + $0x3e8] sm:$0xff]
    %v277 = vld [vmem:[#allocation5 + $0x3f0] sm:$0xff]
    %v278 = vld [vmem:[#allocation5 + $0x3f8] sm:$0xff]
    %v279 = vld [vmem:[#allocation5 + $0x400] sm:$0xff]
    %v280 = vld [vmem:[#allocation5 + $0x408] sm:$0xff]
    %v281 = vld [vmem:[#allocation5 + $0x410] sm:$0xff]
    %v282 = vld [vmem:[#allocation5 + $0x418] sm:$0xff]
    %v283 = vld [vmem:[#allocation5 + $0x420] sm:$0xff]
    %v284 = vld [vmem:[#allocation5 + $0x428] sm:$0xff]
    %v285 = vld [vmem:[#allocation5 + $0x430] sm:$0xff]
    %v286 = vld [vmem:[#allocation5 + $0x438] sm:$0xff]
    %v287 = vld [vmem:[#allocation5 + $0x440] sm:$0xff]
    %v288 = vld [vmem:[#allocation5 + $0x448] sm:$0xff]
    %v289 = vld [vmem:[#allocation5 + $0x450] sm:$0xff]
    %v290 = vld [vmem:[#allocation5 + $0x458] sm:$0xff]
    %v291 = vld [vmem:[#allocation5 + $0x460] sm:$0xff]
    %v292 = vld [vmem:[#allocation5 + $0x468] sm:$0xff]
    %v293 = vld [vmem:[#allocation5 + $0x470] sm:$0xff]
    %v294 = vld [vmem:[#allocation5 + $0x478] sm:$0xff]
    %v295 = vld [vmem:[#allocation5 + $0x480] sm:$0xff]
    %v296 = vld [vmem:[#allocation5 + $0x488] sm:$0xff]
    %v297 = vld [vmem:[#allocation5 + $0x490] sm:$0xff]
    %v298 = vld [vmem:[#allocation5 + $0x498] sm:$0xff]
    %v299 = vld [vmem:[#allocation5 + $0x4a0] sm:$0xff]
    %v300 = vld [vmem:[#allocation5 + $0x4a8] sm:$0xff]
    %v301 = vld [vmem:[#allocation5 + $0x4b0] sm:$0xff]
    %v302 = vld [vmem:[#allocation5 + $0x4b8] sm:$0xff]
    %v303 = vld [vmem:[#allocation5 + $0x4c0] sm:$0xff]
    %v304 = vld [vmem:[#allocation5 + $0x4c8] sm:$0xff]
    %v305 = vld [vmem:[#allocation5 + $0x4d0] sm:$0xff]
    %v306 = vld [vmem:[#allocation5 + $0x4d8] sm:$0xff]
    %v307 = vld [vmem:[#allocation5 + $0x4e0] sm:$0xff]
    %v308 = vld [vmem:[#allocation5 + $0x4e8] sm:$0xff]
    %v309 = vld [vmem:[#allocation5 + $0x4f0] sm:$0xff]
    %v310 = vld [vmem:[#allocation5 + $0x4f8] sm:$0xff]
    %v311 = vld [vmem:[#allocation5 + $0x500] sm:$0xff]
    %v312 = vld [vmem:[#allocation5 + $0x508] sm:$0xff]
    %v313 = vld [vmem:[#allocation5 + $0x510] sm:$0xff]
    %v314 = vld [vmem:[#allocation5 + $0x518] sm:$0xff]
    %v315 = vld [vmem:[#allocation5 + $0x520] sm:$0xff]
    %v316 = vld [vmem:[#allocation5 + $0x528] sm:$0xff]
    %v317 = vld [vmem:[#allocation5 + $0x530] sm:$0xff]
    %v318 = vld [vmem:[#allocation5 + $0x538] sm:$0xff]
    %v319 = vld [vmem:[#allocation5 + $0x540] sm:$0xff]
    %v320 = vld [vmem:[#allocation5 + $0x548] sm:$0xff]
    %v321 = vld [vmem:[#allocation5 + $0x550] sm:$0xff]
    %v322 = vld [vmem:[#allocation5 + $0x558] sm:$0xff]
    %v323 = vld [vmem:[#allocation5 + $0x560] sm:$0xff]
    %v324 = vld [vmem:[#allocation5 + $0x568] sm:$0xff]
    %v325 = vld [vmem:[#allocation5 + $0x570] sm:$0xff]
    %v326 = vld [vmem:[#allocation5 + $0x578] sm:$0xff]
    %v327 = vld [vmem:[#allocation5 + $0x580] sm:$0xff]
    %v328 = vld [vmem:[#allocation5 + $0x588] sm:$0xff]
    %v329 = vld [vmem:[#allocation5 + $0x590] sm:$0xff]
    %v330 = vld [vmem:[#allocation5 + $0x598] sm:$0xff]
    %v331 = vld [vmem:[#allocation5 + $0x5a0] sm:$0xff]
    %v332 = vld [vmem:[#allocation5 + $0x5a8] sm:$0xff]
    %v333 = vld [vmem:[#allocation5 + $0x5b0] sm:$0xff]
    %v334 = vld [vmem:[#allocation5 + $0x5b8] sm:$0xff]
    %v335 = vld [vmem:[#allocation5 + $0x5c0] sm:$0xff]
    %v336 = vld [vmem:[#allocation5 + $0x5c8] sm:$0xff]
    %v337 = vld [vmem:[#allocation5 + $0x5d0] sm:$0xff]
    %v338 = vld [vmem:[#allocation5 + $0x5d8] sm:$0xff]
    %v339 = vld [vmem:[#allocation5 + $0x5e0] sm:$0xff]
    %v340 = vld [vmem:[#allocation5 + $0x5e8] sm:$0xff]
    %v341 = vld [vmem:[#allocation5 + $0x5f0] sm:$0xff]
    %v342 = vld [vmem:[#allocation5 + $0x5f8] sm:$0xff]
    %v343 = vld [vmem:[#allocation5 + $0x600] sm:$0xff]
    %v344 = vld [vmem:[#allocation5 + $0x608] sm:$0xff]
    %v345 = vld [vmem:[#allocation5 + $0x610] sm:$0xff]
    %v346 = vld [vmem:[#allocation5 + $0x618] sm:$0xff]
    %v347 = vld [vmem:[#allocation5 + $0x620] sm:$0xff]
    %v348 = vld [vmem:[#allocation5 + $0x628] sm:$0xff]
    %v349 = vld [vmem:[#allocation5 + $0x630] sm:$0xff]
    %v350 = vld [vmem:[#allocation5 + $0x638] sm:$0xff]
    %v351 = vld [vmem:[#allocation5 + $0x640] sm:$0xff]
    %v352 = vld [vmem:[#allocation5 + $0x648] sm:$0xff]
    %v353 = vld [vmem:[#allocation5 + $0x650] sm:$0xff]
    %v354 = vld [vmem:[#allocation5 + $0x658] sm:$0xff]
    %v355 = vld [vmem:[#allocation5 + $0x660] sm:$0xff]
    %v356 = vld [vmem:[#allocation5 + $0x668] sm:$0xff]
    %v357 = vld [vmem:[#allocation5 + $0x670] sm:$0xff]
    %v358 = vld [vmem:[#allocation5 + $0x678] sm:$0xff]
    %v359 = vld [vmem:[#allocation5 + $0x680] sm:$0xff]
    %v360 = vld [vmem:[#allocation5 + $0x688] sm:$0xff]
    %v361 = vld [vmem:[#allocation5 + $0x690] sm:$0xff]
    %v362 = vld [vmem:[#allocation5 + $0x698] sm:$0xff]
    %v363 = vld [vmem:[#allocation5 + $0x6a0] sm:$0xff]
    %v364 = vld [vmem:[#allocation5 + $0x6a8] sm:$0xff]
    %v365 = vld [vmem:[#allocation5 + $0x6b0] sm:$0xff]
    %v366 = vld [vmem:[#allocation5 + $0x6b8] sm:$0xff]
    %v367 = vld [vmem:[#allocation5 + $0x6c0] sm:$0xff]
    %v368 = vld [vmem:[#allocation5 + $0x6c8] sm:$0xff]
    %v369 = vld [vmem:[#allocation5 + $0x6d0] sm:$0xff]
    %v370 = vld [vmem:[#allocation5 + $0x6d8] sm:$0xff]
    %v371 = vld [vmem:[#allocation5 + $0x6e0] sm:$0xff]
    %v372 = vld [vmem:[#allocation5 + $0x6e8] sm:$0xff]
    %v373 = vld [vmem:[#allocation5 + $0x6f0] sm:$0xff]
    %v374 = vld [vmem:[#allocation5 + $0x6f8] sm:$0xff]
    %v375 = vld [vmem:[#allocation5 + $0x700] sm:$0xff]
    %v376 = vld [vmem:[#allocation5 + $0x708] sm:$0xff]
    %v377 = vld [vmem:[#allocation5 + $0x710] sm:$0xff]
    %v378 = vld [vmem:[#allocation5 + $0x718] sm:$0xff]
    %v379 = vld [vmem:[#allocation5 + $0x720] sm:$0xff]
    %v380 = vld [vmem:[#allocation5 + $0x728] sm:$0xff]
    %v381 = vld [vmem:[#allocation5 + $0x730] sm:$0xff]
    %v382 = vld [vmem:[#allocation5 + $0x738] sm:$0xff]
    %v383 = vld [vmem:[#allocation5 + $0x740] sm:$0xff]
    %v384 = vld [vmem:[#allocation5 + $0x748] sm:$0xff]
    %v385 = vld [vmem:[#allocation5 + $0x750] sm:$0xff]
    %v386 = vld [vmem:[#allocation5 + $0x758] sm:$0xff]
    %v387 = vld [vmem:[#allocation5 + $0x760] sm:$0xff]
    %v388 = vld [vmem:[#allocation5 + $0x768] sm:$0xff]
    %v389 = vld [vmem:[#allocation5 + $0x770] sm:$0xff]
    %v390 = vld [vmem:[#allocation5 + $0x778] sm:$0xff]
    %v391 = vld [vmem:[#allocation5 + $0x780] sm:$0xff]
    %v392 = vld [vmem:[#allocation5 + $0x788] sm:$0xff]
    %v393 = vld [vmem:[#allocation5 + $0x790] sm:$0xff]
    %v394 = vld [vmem:[#allocation5 + $0x798] sm:$0xff]
    %v395 = vld [vmem:[#allocation5 + $0x7a0] sm:$0xff]
    %v396 = vld [vmem:[#allocation5 + $0x7a8] sm:$0xff]
    %v397 = vld [vmem:[#allocation5 + $0x7b0] sm:$0xff]
    %v398 = vld [vmem:[#allocation5 + $0x7b8] sm:$0xff]
    %v399 = vld [vmem:[#allocation5 + $0x7c0] sm:$0xff]
    %v400 = vld [vmem:[#allocation5 + $0x7c8] sm:$0xff]
    %v401 = vld [vmem:[#allocation5 + $0x7d0] sm:$0xff]
    %v402 = vld [vmem:[#allocation5 + $0x7d8] sm:$0xff]
    %v403 = vld [vmem:[#allocation5 + $0x7e0] sm:$0xff]
    %v404 = vld [vmem:[#allocation5 + $0x7e8] sm:$0xff]
    %v405 = vld [vmem:[#allocation5 + $0x7f0] sm:$0xff]
    %v406 = vld [vmem:[#allocation5 + $0x7f8] sm:$0xff]
    %v407 = vld [vmem:[#allocation5 + $0x800] sm:$0xff]
    %v408 = vld [vmem:[#allocation5 + $0x808] sm:$0xff]
    %v409 = vld [vmem:[#allocation5 + $0x810] sm:$0xff]
    %v410 = vld [vmem:[#allocation5 + $0x818] sm:$0xff]
    %v411 = vld [vmem:[#allocation5 + $0x820] sm:$0xff]
    %v412 = vld [vmem:[#allocation5 + $0x828] sm:$0xff]
    %v413 = vld [vmem:[#allocation5 + $0x830] sm:$0xff]
    %v414 = vld [vmem:[#allocation5 + $0x838] sm:$0xff]
    %v415 = vld [vmem:[#allocation5 + $0x840] sm:$0xff]
    %v416 = vld [vmem:[#allocation5 + $0x848] sm:$0xff]
    %v417 = vld [vmem:[#allocation5 + $0x850] sm:$0xff]
    %v418 = vld [vmem:[#allocation5 + $0x858] sm:$0xff]
    %v419 = vld [vmem:[#allocation5 + $0x860] sm:$0xff]
    %v420 = vld [vmem:[#allocation5 + $0x868] sm:$0xff]
    %v421 = vld [vmem:[#allocation5 + $0x870] sm:$0xff]
    %v422 = vld [vmem:[#allocation5 + $0x878] sm:$0xff]
    %v423 = vld [vmem:[#allocation5 + $0x880] sm:$0xff]
    %v424 = vld [vmem:[#allocation5 + $0x888] sm:$0xff]
    %v425 = vld [vmem:[#allocation5 + $0x890] sm:$0xff]
    %v426 = vld [vmem:[#allocation5 + $0x898] sm:$0xff]
    %v427 = vld [vmem:[#allocation5 + $0x8a0] sm:$0xff]
    %v428 = vld [vmem:[#allocation5 + $0x8a8] sm:$0xff]
    %v429 = vld [vmem:[#allocation5 + $0x8b0] sm:$0xff]
    %v430 = vld [vmem:[#allocation5 + $0x8b8] sm:$0xff]
    %v431 = vld [vmem:[#allocation5 + $0x8c0] sm:$0xff]
    %v432 = vld [vmem:[#allocation5 + $0x8c8] sm:$0xff]
    %v433 = vld [vmem:[#allocation5 + $0x8d0] sm:$0xff]
    %v434 = vld [vmem:[#allocation5 + $0x8d8] sm:$0xff]
    %v435 = vld [vmem:[#allocation5 + $0x8e0] sm:$0xff]
    %v436 = vld [vmem:[#allocation5 + $0x8e8] sm:$0xff]
    %v437 = vld [vmem:[#allocation5 + $0x8f0] sm:$0xff]
    %v438 = vld [vmem:[#allocation5 + $0x8f8] sm:$0xff]
    %v439 = vld [vmem:[#allocation5 + $0x900] sm:$0xff]
    %v440 = vld [vmem:[#allocation5 + $0x908] sm:$0xff]
    %v441 = vld [vmem:[#allocation5 + $0x910] sm:$0xff]
    %v442 = vld [vmem:[#allocation5 + $0x918] sm:$0xff]
    %v443 = vld [vmem:[#allocation5 + $0x920] sm:$0xff]
    %v444 = vld [vmem:[#allocation5 + $0x928] sm:$0xff]
    %v445 = vld [vmem:[#allocation5 + $0x930] sm:$0xff]
    %v446 = vld [vmem:[#allocation5 + $0x938] sm:$0xff]
    %v447 = vld [vmem:[#allocation5 + $0x940] sm:$0xff]
    %v448 = vld [vmem:[#allocation5 + $0x948] sm:$0xff]
    %v449 = vld [vmem:[#allocation5 + $0x950] sm:$0xff]
    %v450 = vld [vmem:[#allocation5 + $0x958] sm:$0xff]
    %v451 = vld [vmem:[#allocation5 + $0x960] sm:$0xff]
    %v452 = vld [vmem:[#allocation5 + $0x968] sm:$0xff]
    %v453 = vld [vmem:[#allocation5 + $0x970] sm:$0xff]
    %v454 = vld [vmem:[#allocation5 + $0x978] sm:$0xff]
    %v455 = vld [vmem:[#allocation5 + $0x980] sm:$0xff]
    %v456 = vld [vmem:[#allocation5 + $0x988] sm:$0xff]
    %v457 = vld [vmem:[#allocation5 + $0x990] sm:$0xff]
    %v458 = vld [vmem:[#allocation5 + $0x998] sm:$0xff]
    %v459 = vld [vmem:[#allocation5 + $0x9a0] sm:$0xff]
    %v460 = vld [vmem:[#allocation5 + $0x9a8] sm:$0xff]
    %v461 = vld [vmem:[#allocation5 + $0x9b0] sm:$0xff]
    %v462 = vld [vmem:[#allocation5 + $0x9b8] sm:$0xff]
    %v463 = vld [vmem:[#allocation5 + $0x9c0] sm:$0xff]
    %v464 = vld [vmem:[#allocation5 + $0x9c8] sm:$0xff]
    %v465 = vld [vmem:[#allocation5 + $0x9d0] sm:$0xff]
    %v466 = vld [vmem:[#allocation5 + $0x9d8] sm:$0xff]
    %v467 = vld [vmem:[#allocation5 + $0x9e0] sm:$0xff]
    %v468 = vld [vmem:[#allocation5 + $0x9e8] sm:$0xff]
    %v469 = vld [vmem:[#allocation5 + $0x9f0] sm:$0xff]
    %v470 = vld [vmem:[#allocation5 + $0x9f8] sm:$0xff]
    %v471 = vld [vmem:[#allocation5 + $0xa00] sm:$0xff]
    %v472 = vld [vmem:[#allocation5 + $0xa08] sm:$0xff]
    %v473 = vld [vmem:[#allocation5 + $0xa10] sm:$0xff]
    %v474 = vld [vmem:[#allocation5 + $0xa18] sm:$0xff]
    %v475 = vld [vmem:[#allocation5 + $0xa20] sm:$0xff]
    %v476 = vld [vmem:[#allocation5 + $0xa28] sm:$0xff]
    %v477 = vld [vmem:[#allocation5 + $0xa30] sm:$0xff]
    %v478 = vld [vmem:[#allocation5 + $0xa38] sm:$0xff]
    %v479 = vld [vmem:[#allocation5 + $0xa40] sm:$0xff]
    %v480 = vld [vmem:[#allocation5 + $0xa48] sm:$0xff]
    %v481 = vld [vmem:[#allocation5 + $0xa50] sm:$0xff]
    %v482 = vld [vmem:[#allocation5 + $0xa58] sm:$0xff]
    %v483 = vld [vmem:[#allocation5 + $0xa60] sm:$0xff]
    %v484 = vld [vmem:[#allocation5 + $0xa68] sm:$0xff]
    %v485 = vld [vmem:[#allocation5 + $0xa70] sm:$0xff]
    %v486 = vld [vmem:[#allocation5 + $0xa78] sm:$0xff]
    %v487 = vld [vmem:[#allocation5 + $0xa80] sm:$0xff]
    %v488 = vld [vmem:[#allocation5 + $0xa88] sm:$0xff]
    %v489 = vld [vmem:[#allocation5 + $0xa90] sm:$0xff]
    %v490 = vld [vmem:[#allocation5 + $0xa98] sm:$0xff]
    %v491 = vld [vmem:[#allocation5 + $0xaa0] sm:$0xff]
    %v492 = vld [vmem:[#allocation5 + $0xaa8] sm:$0xff]
    %v493 = vld [vmem:[#allocation5 + $0xab0] sm:$0xff]
    %v494 = vld [vmem:[#allocation5 + $0xab8] sm:$0xff]
    %v495 = vld [vmem:[#allocation5 + $0xac0] sm:$0xff]
    %v496 = vld [vmem:[#allocation5 + $0xac8] sm:$0xff]
    %v497 = vld [vmem:[#allocation5 + $0xad0] sm:$0xff]
    %v498 = vld [vmem:[#allocation5 + $0xad8] sm:$0xff]
    %v499 = vld [vmem:[#allocation5 + $0xae0] sm:$0xff]
    %v500 = vld [vmem:[#allocation5 + $0xae8] sm:$0xff]
    %v501 = vld [vmem:[#allocation5 + $0xaf0] sm:$0xff]
    %v502 = vld [vmem:[#allocation5 + $0xaf8] sm:$0xff]
    %v503 = vld [vmem:[#allocation5 + $0xb00] sm:$0xff]
    %v504 = vld [vmem:[#allocation5 + $0xb08] sm:$0xff]
    %v505 = vld [vmem:[#allocation5 + $0xb10] sm:$0xff]
    %v506 = vld [vmem:[#allocation5 + $0xb18] sm:$0xff]
    %v507 = vld [vmem:[#allocation5 + $0xb20] sm:$0xff]
    %v508 = vld [vmem:[#allocation5 + $0xb28] sm:$0xff]
    %v509 = vld [vmem:[#allocation5 + $0xb30] sm:$0xff]
    %v510 = vld [vmem:[#allocation5 + $0xb38] sm:$0xff]
    %v511 = vld [vmem:[#allocation5 + $0xb40] sm:$0xff]
    %v512 = vld [vmem:[#allocation5 + $0xb48] sm:$0xff]
    %v513 = vld [vmem:[#allocation5 + $0xb50] sm:$0xff]
    %v514 = vld [vmem:[#allocation5 + $0xb58] sm:$0xff]
    %v515 = vld [vmem:[#allocation5 + $0xb60] sm:$0xff]
    %v516 = vld [vmem:[#allocation5 + $0xb68] sm:$0xff]
    %v517 = vld [vmem:[#allocation5 + $0xb70] sm:$0xff]
    %v518 = vld [vmem:[#allocation5 + $0xb78] sm:$0xff]
    %v519 = vld [vmem:[#allocation5 + $0xb80] sm:$0xff]
    %v520 = vld [vmem:[#allocation5 + $0xb88] sm:$0xff]
    %v521 = vld [vmem:[#allocation5 + $0xb90] sm:$0xff]
    %v522 = vld [vmem:[#allocation5 + $0xb98] sm:$0xff]
    %v523 = vld [vmem:[#allocation5 + $0xba0] sm:$0xff]
    %v524 = vld [vmem:[#allocation5 + $0xba8] sm:$0xff]
    %v525 = vld [vmem:[#allocation5 + $0xbb0] sm:$0xff]
    %v526 = vld [vmem:[#allocation5 + $0xbb8] sm:$0xff]
    %v527 = vld [vmem:[#allocation5 + $0xbc0] sm:$0xff]
    %v528 = vld [vmem:[#allocation5 + $0xbc8] sm:$0xff]
    %v529 = vld [vmem:[#allocation5 + $0xbd0] sm:$0xff]
    %v530 = vld [vmem:[#allocation5 + $0xbd8] sm:$0xff]
    %v531 = vld [vmem:[#allocation5 + $0xbe0] sm:$0xff]
    %v532 = vld [vmem:[#allocation5 + $0xbe8] sm:$0xff]
    %v533 = vld [vmem:[#allocation5 + $0xbf0] sm:$0xff]
    %v534 = vld [vmem:[#allocation5 + $0xbf8] sm:$0xff]
    %v535 = vld [vmem:[#allocation5 + $0xc00] sm:$0xff]
    %v536 = vld [vmem:[#allocation5 + $0xc08] sm:$0xff]
    %v537 = vld [vmem:[#allocation5 + $0xc10] sm:$0xff]
    %v538 = vld [vmem:[#allocation5 + $0xc18] sm:$0xff]
    %v539 = vld [vmem:[#allocation5 + $0xc20] sm:$0xff]
    %v540 = vld [vmem:[#allocation5 + $0xc28] sm:$0xff]
    %v541 = vld [vmem:[#allocation5 + $0xc30] sm:$0xff]
    %v542 = vld [vmem:[#allocation5 + $0xc38] sm:$0xff]
    %v543 = vld [vmem:[#allocation5 + $0xc40] sm:$0xff]
    %v544 = vld [vmem:[#allocation5 + $0xc48] sm:$0xff]
    %v545 = vld [vmem:[#allocation5 + $0xc50] sm:$0xff]
    %v546 = vld [vmem:[#allocation5 + $0xc58] sm:$0xff]
    %v547 = vld [vmem:[#allocation5 + $0xc60] sm:$0xff]
    %v548 = vld [vmem:[#allocation5 + $0xc68] sm:$0xff]
    %v549 = vld [vmem:[#allocation5 + $0xc70] sm:$0xff]
    %v550 = vld [vmem:[#allocation5 + $0xc78] sm:$0xff]
    %v551 = vld [vmem:[#allocation5 + $0xc80] sm:$0xff]
    %v552 = vld [vmem:[#allocation5 + $0xc88] sm:$0xff]
    %v553 = vld [vmem:[#allocation5 + $0xc90] sm:$0xff]
    %v554 = vld [vmem:[#allocation5 + $0xc98] sm:$0xff]
    %v555 = vld [vmem:[#allocation5 + $0xca0] sm:$0xff]
    %v556 = vld [vmem:[#allocation5 + $0xca8] sm:$0xff]
    %v557 = vld [vmem:[#allocation5 + $0xcb0] sm:$0xff]
    %v558 = vld [vmem:[#allocation5 + $0xcb8] sm:$0xff]
    %v559 = vld [vmem:[#allocation5 + $0xcc0] sm:$0xff]
    %v560 = vld [vmem:[#allocation5 + $0xcc8] sm:$0xff]
    %v561 = vld [vmem:[#allocation5 + $0xcd0] sm:$0xff]
    %v562 = vld [vmem:[#allocation5 + $0xcd8] sm:$0xff]
    %v563 = vld [vmem:[#allocation5 + $0xce0] sm:$0xff]
    %v564 = vld [vmem:[#allocation5 + $0xce8] sm:$0xff]
    %v565 = vld [vmem:[#allocation5 + $0xcf0] sm:$0xff]
    %v566 = vld [vmem:[#allocation5 + $0xcf8] sm:$0xff]
    %v567 = vld [vmem:[#allocation5 + $0xd00] sm:$0xff]
    %v568 = vld [vmem:[#allocation5 + $0xd08] sm:$0xff]
    %v569 = vld [vmem:[#allocation5 + $0xd10] sm:$0xff]
    %v570 = vld [vmem:[#allocation5 + $0xd18] sm:$0xff]
    %v571 = vld [vmem:[#allocation5 + $0xd20] sm:$0xff]
    %v572 = vld [vmem:[#allocation5 + $0xd28] sm:$0xff]
    %v573 = vld [vmem:[#allocation5 + $0xd30] sm:$0xff]
    %v574 = vld [vmem:[#allocation5 + $0xd38] sm:$0xff]
    %v575 = vld [vmem:[#allocation5 + $0xd40] sm:$0xff]
    %v576 = vld [vmem:[#allocation5 + $0xd48] sm:$0xff]
    %v577 = vld [vmem:[#allocation5 + $0xd50] sm:$0xff]
    %v578 = vld [vmem:[#allocation5 + $0xd58] sm:$0xff]
    %v579 = vld [vmem:[#allocation5 + $0xd60] sm:$0xff]
    %v580 = vld [vmem:[#allocation5 + $0xd68] sm:$0xff]
    %v581 = vld [vmem:[#allocation5 + $0xd70] sm:$0xff]
    %v582 = vld [vmem:[#allocation5 + $0xd78] sm:$0xff]
    %v583 = vld [vmem:[#allocation5 + $0xd80] sm:$0xff]
    %v584 = vld [vmem:[#allocation5 + $0xd88] sm:$0xff]
    %v585 = vld [vmem:[#allocation5 + $0xd90] sm:$0xff]
    %v586 = vld [vmem:[#allocation5 + $0xd98] sm:$0xff]
    %v587 = vld [vmem:[#allocation5 + $0xda0] sm:$0xff]
    %v588 = vld [vmem:[#allocation5 + $0xda8] sm:$0xff]
    %v589 = vld [vmem:[#allocation5 + $0xdb0] sm:$0xff]
    %v590 = vld [vmem:[#allocation5 + $0xdb8] sm:$0xff]
    %v591 = vld [vmem:[#allocation5 + $0xdc0] sm:$0xff]
    %v592 = vld [vmem:[#allocation5 + $0xdc8] sm:$0xff]
    %v593 = vld [vmem:[#allocation5 + $0xdd0] sm:$0xff]
    %v594 = vld [vmem:[#allocation5 + $0xdd8] sm:$0xff]
    %v595 = vld [vmem:[#allocation5 + $0xde0] sm:$0xff]
    %v596 = vld [vmem:[#allocation5 + $0xde8] sm:$0xff]
    %v597 = vld [vmem:[#allocation5 + $0xdf0] sm:$0xff]
    %v598 = vld [vmem:[#allocation5 + $0xdf8] sm:$0xff]
    %v599 = vld [vmem:[#allocation5 + $0xe00] sm:$0xff]
    %v600 = vld [vmem:[#allocation5 + $0xe08] sm:$0xff]
    %v601 = vld [vmem:[#allocation5 + $0xe10] sm:$0xff]
    %v602 = vld [vmem:[#allocation5 + $0xe18] sm:$0xff]
    %v603 = vld [vmem:[#allocation5 + $0xe20] sm:$0xff]
    %v604 = vld [vmem:[#allocation5 + $0xe28] sm:$0xff]
    %v605 = vld [vmem:[#allocation5 + $0xe30] sm:$0xff]
    %v606 = vld [vmem:[#allocation5 + $0xe38] sm:$0xff]
    %v607 = vld [vmem:[#allocation5 + $0xe40] sm:$0xff]
    %v608 = vld [vmem:[#allocation5 + $0xe48] sm:$0xff]
    %v609 = vld [vmem:[#allocation5 + $0xe50] sm:$0xff]
    %v610 = vld [vmem:[#allocation5 + $0xe58] sm:$0xff]
    %v611 = vld [vmem:[#allocation5 + $0xe60] sm:$0xff]
    %v612 = vld [vmem:[#allocation5 + $0xe68] sm:$0xff]
    %v613 = vld [vmem:[#allocation5 + $0xe70] sm:$0xff]
    %v614 = vld [vmem:[#allocation5 + $0xe78] sm:$0xff]
    %v615 = vld [vmem:[#allocation5 + $0xe80] sm:$0xff]
    %v616 = vld [vmem:[#allocation5 + $0xe88] sm:$0xff]
    %v617 = vld [vmem:[#allocation5 + $0xe90] sm:$0xff]
    %v618 = vld [vmem:[#allocation5 + $0xe98] sm:$0xff]
    %v619 = vld [vmem:[#allocation5 + $0xea0] sm:$0xff]
    %v620 = vld [vmem:[#allocation5 + $0xea8] sm:$0xff]
    %v621 = vld [vmem:[#allocation5 + $0xeb0] sm:$0xff]
    %v622 = vld [vmem:[#allocation5 + $0xeb8] sm:$0xff]
    %v623 = vld [vmem:[#allocation5 + $0xec0] sm:$0xff]
    %v624 = vld [vmem:[#allocation5 + $0xec8] sm:$0xff]
    %v625 = vld [vmem:[#allocation5 + $0xed0] sm:$0xff]
    %v626 = vld [vmem:[#allocation5 + $0xed8] sm:$0xff]
    %v627 = vld [vmem:[#allocation5 + $0xee0] sm:$0xff]
    %v628 = vld [vmem:[#allocation5 + $0xee8] sm:$0xff]
    %v629 = vld [vmem:[#allocation5 + $0xef0] sm:$0xff]
    %v630 = vld [vmem:[#allocation5 + $0xef8] sm:$0xff]
    %v631 = vld [vmem:[#allocation5 + $0xf00] sm:$0xff]
    %v632 = vld [vmem:[#allocation5 + $0xf08] sm:$0xff]
    %v633 = vld [vmem:[#allocation5 + $0xf10] sm:$0xff]
    %v634 = vld [vmem:[#allocation5 + $0xf18] sm:$0xff]
    %v635 = vld [vmem:[#allocation5 + $0xf20] sm:$0xff]
    %v636 = vld [vmem:[#allocation5 + $0xf28] sm:$0xff]
    %v637 = vld [vmem:[#allocation5 + $0xf30] sm:$0xff]
    %v638 = vld [vmem:[#allocation5 + $0xf38] sm:$0xff]
    %v639 = vld [vmem:[#allocation5 + $0xf40] sm:$0xff]
    %v640 = vld [vmem:[#allocation5 + $0xf48] sm:$0xff]
    %v641 = vld [vmem:[#allocation5 + $0xf50] sm:$0xff]
    %v642 = vld [vmem:[#allocation5 + $0xf58] sm:$0xff]
    %v643 = vld [vmem:[#allocation5 + $0xf60] sm:$0xff]
    %v644 = vld [vmem:[#allocation5 + $0xf68] sm:$0xff]
    %v645 = vld [vmem:[#allocation5 + $0xf70] sm:$0xff]
    %v646 = vld [vmem:[#allocation5 + $0xf78] sm:$0xff]
    %v647 = vld [vmem:[#allocation5 + $0xf80] sm:$0xff]
    %v648 = vld [vmem:[#allocation5 + $0xf88] sm:$0xff]
    %v649 = vld [vmem:[#allocation5 + $0xf90] sm:$0xff]
    %v650 = vld [vmem:[#allocation5 + $0xf98] sm:$0xff]
    %v651 = vld [vmem:[#allocation5 + $0xfa0] sm:$0xff]
    %v652 = vld [vmem:[#allocation5 + $0xfa8] sm:$0xff]
    %v653 = vld [vmem:[#allocation5 + $0xfb0] sm:$0xff]
    %v654 = vld [vmem:[#allocation5 + $0xfb8] sm:$0xff]
    %v655 = vld [vmem:[#allocation5 + $0xfc0] sm:$0xff]
    %v656 = vld [vmem:[#allocation5 + $0xfc8] sm:$0xff]
    %v657 = vld [vmem:[#allocation5 + $0xfd0] sm:$0xff]
    %v658 = vld [vmem:[#allocation5 + $0xfd8] sm:$0xff]
    %v659 = vld [vmem:[#allocation5 + $0xfe0] sm:$0xff]
    %v660 = vld [vmem:[#allocation5 + $0xfe8] sm:$0xff]
    %v661 = vld [vmem:[#allocation5 + $0xff0] sm:$0xff]
    %v662 = vld [vmem:[#allocation5 + $0xff8] sm:$0xff]
    %v663 = vld [vmem:[#allocation5 + $0x1000] sm:$0xff]
    %v664 = vld [vmem:[#allocation5 + $0x1008] sm:$0xff]
    %v665 = vld [vmem:[#allocation5 + $0x1010] sm:$0xff]
    %v666 = vld [vmem:[#allocation5 + $0x1018] sm:$0xff]
    %v667 = vld [vmem:[#allocation5 + $0x1020] sm:$0xff]
    %v668 = vld [vmem:[#allocation5 + $0x1028] sm:$0xff]
    %v669 = vld [vmem:[#allocation5 + $0x1030] sm:$0xff]
    %v670 = vld [vmem:[#allocation5 + $0x1038] sm:$0xff]
    %v671 = vld [vmem:[#allocation5 + $0x1040] sm:$0xff]
    %v672 = vld [vmem:[#allocation5 + $0x1048] sm:$0xff]
    %v673 = vld [vmem:[#allocation5 + $0x1050] sm:$0xff]
    %v674 = vld [vmem:[#allocation5 + $0x1058] sm:$0xff]
    %v675 = vld [vmem:[#allocation5 + $0x1060] sm:$0xff]
    %v676 = vld [vmem:[#allocation5 + $0x1068] sm:$0xff]
    %v677 = vld [vmem:[#allocation5 + $0x1070] sm:$0xff]
    %v678 = vld [vmem:[#allocation5 + $0x1078] sm:$0xff]
    %v679 = vld [vmem:[#allocation5 + $0x1080] sm:$0xff]
    %v680 = vld [vmem:[#allocation5 + $0x1088] sm:$0xff]
    %v681 = vld [vmem:[#allocation5 + $0x1090] sm:$0xff]
    %v682 = vld [vmem:[#allocation5 + $0x1098] sm:$0xff]
    %v683 = vld [vmem:[#allocation5 + $0x10a0] sm:$0xff]
    %v684 = vld [vmem:[#allocation5 + $0x10a8] sm:$0xff]
    %v685 = vld [vmem:[#allocation5 + $0x10b0] sm:$0xff]
    %v686 = vld [vmem:[#allocation5 + $0x10b8] sm:$0xff]
    %v687 = vld [vmem:[#allocation5 + $0x10c0] sm:$0xff]
    %v688 = vld [vmem:[#allocation5 + $0x10c8] sm:$0xff]
    %v689 = vld [vmem:[#allocation5 + $0x10d0] sm:$0xff]
    %v690 = vld [vmem:[#allocation5 + $0x10d8] sm:$0xff]
    %v691 = vld [vmem:[#allocation5 + $0x10e0] sm:$0xff]
    %v692 = vld [vmem:[#allocation5 + $0x10e8] sm:$0xff]
    %v693 = vld [vmem:[#allocation5 + $0x10f0] sm:$0xff]
    %v694 = vld [vmem:[#allocation5 + $0x10f8] sm:$0xff]
    %v695 = vld [vmem:[#allocation5 + $0x1100] sm:$0xff]
    %v696 = vld [vmem:[#allocation5 + $0x1108] sm:$0xff]
    %v697 = vld [vmem:[#allocation5 + $0x1110] sm:$0xff]
    %v698 = vld [vmem:[#allocation5 + $0x1118] sm:$0xff]
    %v699 = vld [vmem:[#allocation5 + $0x1120] sm:$0xff]
    %v700 = vld [vmem:[#allocation5 + $0x1128] sm:$0xff]
    %v701 = vld [vmem:[#allocation5 + $0x1130] sm:$0xff]
    %v702 = vld [vmem:[#allocation5 + $0x1138] sm:$0xff]
    %v703 = vld [vmem:[#allocation5 + $0x1140] sm:$0xff]
    %v704 = vld [vmem:[#allocation5 + $0x1148] sm:$0xff]
    %v705 = vld [vmem:[#allocation5 + $0x1150] sm:$0xff]
    %v706 = vld [vmem:[#allocation5 + $0x1158] sm:$0xff]
    %v707 = vld [vmem:[#allocation5 + $0x1160] sm:$0xff]
    %v708 = vld [vmem:[#allocation5 + $0x1168] sm:$0xff]
    %v709 = vld [vmem:[#allocation5 + $0x1170] sm:$0xff]
    %v710 = vld [vmem:[#allocation5 + $0x1178] sm:$0xff]
    %v711 = vld [vmem:[#allocation5 + $0x1180] sm:$0xff]
    %v712 = vld [vmem:[#allocation5 + $0x1188] sm:$0xff]
    %v713 = vld [vmem:[#allocation5 + $0x1190] sm:$0xff]
    %v714 = vld [vmem:[#allocation5 + $0x1198] sm:$0xff]
    %v715 = vld [vmem:[#allocation5 + $0x11a0] sm:$0xff]
    %v716 = vld [vmem:[#allocation5 + $0x11a8] sm:$0xff]
    %v717 = vld [vmem:[#allocation5 + $0x11b0] sm:$0xff]
    %v718 = vld [vmem:[#allocation5 + $0x11b8] sm:$0xff]
    %v719 = vld [vmem:[#allocation5 + $0x11c0] sm:$0xff]
    %v720 = vld [vmem:[#allocation5 + $0x11c8] sm:$0xff]
    %v721 = vld [vmem:[#allocation5 + $0x11d0] sm:$0xff]
    %v722 = vld [vmem:[#allocation5 + $0x11d8] sm:$0xff]
    %v723 = vld [vmem:[#allocation5 + $0x11e0] sm:$0xff]
    %v724 = vld [vmem:[#allocation5 + $0x11e8] sm:$0xff]
    %v725 = vld [vmem:[#allocation5 + $0x11f0] sm:$0xff]
    %v726 = vld [vmem:[#allocation5 + $0x11f8] sm:$0xff]
    %v727 = vld [vmem:[#allocation5 + $0x1200] sm:$0xff]
    %v728 = vld [vmem:[#allocation5 + $0x1208] sm:$0xff]
    %v729 = vld [vmem:[#allocation5 + $0x1210] sm:$0xff]
    %v730 = vld [vmem:[#allocation5 + $0x1218] sm:$0xff]
    %v731 = vld [vmem:[#allocation5 + $0x1220] sm:$0xff]
    %v732 = vld [vmem:[#allocation5 + $0x1228] sm:$0xff]
    %v733 = vld [vmem:[#allocation5 + $0x1230] sm:$0xff]
    %v734 = vld [vmem:[#allocation5 + $0x1238] sm:$0xff]
    %v735 = vld [vmem:[#allocation5 + $0x1240] sm:$0xff]
    %v736 = vld [vmem:[#allocation5 + $0x1248] sm:$0xff]
    %v737 = vld [vmem:[#allocation5 + $0x1250] sm:$0xff]
    %v738 = vld [vmem:[#allocation5 + $0x1258] sm:$0xff]
    %v739 = vld [vmem:[#allocation5 + $0x1260] sm:$0xff]
    %v740 = vld [vmem:[#allocation5 + $0x1268] sm:$0xff]
    %v741 = vld [vmem:[#allocation5 + $0x1270] sm:$0xff]
    %v742 = vld [vmem:[#allocation5 + $0x1278] sm:$0xff]
    %v743 = vld [vmem:[#allocation5 + $0x1280] sm:$0xff]
    %v744 = vld [vmem:[#allocation5 + $0x1288] sm:$0xff]
    %v745 = vld [vmem:[#allocation5 + $0x1290] sm:$0xff]
    %v746 = vld [vmem:[#allocation5 + $0x1298] sm:$0xff]
    %v747 = vld [vmem:[#allocation5 + $0x12a0] sm:$0xff]
    %v748 = vld [vmem:[#allocation5 + $0x12a8] sm:$0xff]
    %v749 = vld [vmem:[#allocation5 + $0x12b0] sm:$0xff]
    %v750 = vld [vmem:[#allocation5 + $0x12b8] sm:$0xff]
    %v751 = vld [vmem:[#allocation5 + $0x12c0] sm:$0xff]
    %v752 = vld [vmem:[#allocation5 + $0x12c8] sm:$0xff]
    %v753 = vld [vmem:[#allocation5 + $0x12d0] sm:$0xff]
    %v754 = vld [vmem:[#allocation5 + $0x12d8] sm:$0xff]
    %v755 = vld [vmem:[#allocation5 + $0x12e0] sm:$0xff]
    %v756 = vld [vmem:[#allocation5 + $0x12e8] sm:$0xff]
    %v757 = vld [vmem:[#allocation5 + $0x12f0] sm:$0xff]
    %v758 = vld [vmem:[#allocation5 + $0x12f8] sm:$0xff]
    %v759 = vld [vmem:[#allocation5 + $0x1300] sm:$0xff]
    %v760 = vld [vmem:[#allocation5 + $0x1308] sm:$0xff]
    %v761 = vld [vmem:[#allocation5 + $0x1310] sm:$0xff]
    %v762 = vld [vmem:[#allocation5 + $0x1318] sm:$0xff]
    %v763 = vld [vmem:[#allocation5 + $0x1320] sm:$0xff]
    %v764 = vld [vmem:[#allocation5 + $0x1328] sm:$0xff]
    %v765 = vld [vmem:[#allocation5 + $0x1330] sm:$0xff]
    %v766 = vld [vmem:[#allocation5 + $0x1338] sm:$0xff]
    %v767 = vld [vmem:[#allocation5 + $0x1340] sm:$0xff]
    %v768 = vld [vmem:[#allocation5 + $0x1348] sm:$0xff]
    %v769 = vld [vmem:[#allocation5 + $0x1350] sm:$0xff]
    %v770 = vld [vmem:[#allocation5 + $0x1358] sm:$0xff]
    %v771 = vld [vmem:[#allocation5 + $0x1360] sm:$0xff]
    %v772 = vld [vmem:[#allocation5 + $0x1368] sm:$0xff]
    %v773 = vld [vmem:[#allocation5 + $0x1370] sm:$0xff]
    %v774 = vld [vmem:[#allocation5 + $0x1378] sm:$0xff]
    %v775 = vld [vmem:[#allocation5 + $0x1380] sm:$0xff]
    %v776 = vld [vmem:[#allocation5 + $0x1388] sm:$0xff]
    %v777 = vld [vmem:[#allocation5 + $0x1390] sm:$0xff]
    %v778 = vld [vmem:[#allocation5 + $0x1398] sm:$0xff]
    %v779 = vld [vmem:[#allocation5 + $0x13a0] sm:$0xff]
    %v780 = vld [vmem:[#allocation5 + $0x13a8] sm:$0xff]
    %v781 = vld [vmem:[#allocation5 + $0x13b0] sm:$0xff]
    %v782 = vld [vmem:[#allocation5 + $0x13b8] sm:$0xff]
    %v783 = vld [vmem:[#allocation5 + $0x13c0] sm:$0xff]
    %v784 = vld [vmem:[#allocation5 + $0x13c8] sm:$0xff]
    %v785 = vld [vmem:[#allocation5 + $0x13d0] sm:$0xff]
    %v786 = vld [vmem:[#allocation5 + $0x13d8] sm:$0xff]
    %v787 = vld [vmem:[#allocation5 + $0x13e0] sm:$0xff]
    %v788 = vld [vmem:[#allocation5 + $0x13e8] sm:$0xff]
    %v789 = vld [vmem:[#allocation5 + $0x13f0] sm:$0xff]
    %v790 = vld [vmem:[#allocation5 + $0x13f8] sm:$0xff]
    %v791 = vld [vmem:[#allocation5 + $0x1400] sm:$0xff]
    %v792 = vld [vmem:[#allocation5 + $0x1408] sm:$0xff]
    %v793 = vld [vmem:[#allocation5 + $0x1410] sm:$0xff]
    %v794 = vld [vmem:[#allocation5 + $0x1418] sm:$0xff]
    %v795 = vld [vmem:[#allocation5 + $0x1420] sm:$0xff]
    %v796 = vld [vmem:[#allocation5 + $0x1428] sm:$0xff]
    %v797 = vld [vmem:[#allocation5 + $0x1430] sm:$0xff]
    %v798 = vld [vmem:[#allocation5 + $0x1438] sm:$0xff]
    %v799 = vld [vmem:[#allocation5 + $0x1440] sm:$0xff]
    %v800 = vld [vmem:[#allocation5 + $0x1448] sm:$0xff]
    %v801 = vld [vmem:[#allocation5 + $0x1450] sm:$0xff]
    %v802 = vld [vmem:[#allocation5 + $0x1458] sm:$0xff]
    %v803 = vld [vmem:[#allocation5 + $0x1460] sm:$0xff]
    %v804 = vld [vmem:[#allocation5 + $0x1468] sm:$0xff]
    %v805 = vld [vmem:[#allocation5 + $0x1470] sm:$0xff]
    %v806 = vld [vmem:[#allocation5 + $0x1478] sm:$0xff]
    %v807 = vld [vmem:[#allocation5 + $0x1480] sm:$0xff]
    %v808 = vld [vmem:[#allocation5 + $0x1488] sm:$0xff]
    %v809 = vld [vmem:[#allocation5 + $0x1490] sm:$0xff]
    %v810 = vld [vmem:[#allocation5 + $0x1498] sm:$0xff]
    %v811 = vld [vmem:[#allocation5 + $0x14a0] sm:$0xff]
    %v812 = vld [vmem:[#allocation5 + $0x14a8] sm:$0xff]
    %v813 = vld [vmem:[#allocation5 + $0x14b0] sm:$0xff]
    %v814 = vld [vmem:[#allocation5 + $0x14b8] sm:$0xff]
    %v815 = vld [vmem:[#allocation5 + $0x14c0] sm:$0xff]
    %v816 = vld [vmem:[#allocation5 + $0x14c8] sm:$0xff]
    %v817 = vld [vmem:[#allocation5 + $0x14d0] sm:$0xff]
    %v818 = vld [vmem:[#allocation5 + $0x14d8] sm:$0xff]
    %v819 = vld [vmem:[#allocation5 + $0x14e0] sm:$0xff]
    %v820 = vld [vmem:[#allocation5 + $0x14e8] sm:$0xff]
    %v821 = vld [vmem:[#allocation5 + $0x14f0] sm:$0xff]
    %v822 = vld [vmem:[#allocation5 + $0x14f8] sm:$0xff]
    %v823 = vld [vmem:[#allocation5 + $0x1500] sm:$0xff]
    %v824 = vld [vmem:[#allocation5 + $0x1508] sm:$0xff]
    %v825 = vld [vmem:[#allocation5 + $0x1510] sm:$0xff]
    %v826 = vld [vmem:[#allocation5 + $0x1518] sm:$0xff]
    %v827 = vld [vmem:[#allocation5 + $0x1520] sm:$0xff]
    %v828 = vld [vmem:[#allocation5 + $0x1528] sm:$0xff]
    %v829 = vld [vmem:[#allocation5 + $0x1530] sm:$0xff]
    %v830 = vld [vmem:[#allocation5 + $0x1538] sm:$0xff]
    %v831 = vld [vmem:[#allocation5 + $0x1540] sm:$0xff]
    %v832 = vld [vmem:[#allocation5 + $0x1548] sm:$0xff]
    %v833 = vld [vmem:[#allocation5 + $0x1550] sm:$0xff]
    %v834 = vld [vmem:[#allocation5 + $0x1558] sm:$0xff]
    %v835 = vld [vmem:[#allocation5 + $0x1560] sm:$0xff]
    %v836 = vld [vmem:[#allocation5 + $0x1568] sm:$0xff]
    %v837 = vld [vmem:[#allocation5 + $0x1570] sm:$0xff]
    %v838 = vld [vmem:[#allocation5 + $0x1578] sm:$0xff]
    %v839 = vld [vmem:[#allocation5 + $0x1580] sm:$0xff]
    %v840 = vld [vmem:[#allocation5 + $0x1588] sm:$0xff]
    %v841 = vld [vmem:[#allocation5 + $0x1590] sm:$0xff]
    %v842 = vld [vmem:[#allocation5 + $0x1598] sm:$0xff]
    %v843 = vld [vmem:[#allocation5 + $0x15a0] sm:$0xff]
    %v844 = vld [vmem:[#allocation5 + $0x15a8] sm:$0xff]
    %v845 = vld [vmem:[#allocation5 + $0x15b0] sm:$0xff]
    %v846 = vld [vmem:[#allocation5 + $0x15b8] sm:$0xff]
    %v847 = vld [vmem:[#allocation5 + $0x15c0] sm:$0xff]
    %v848 = vld [vmem:[#allocation5 + $0x15c8] sm:$0xff]
    %v849 = vld [vmem:[#allocation5 + $0x15d0] sm:$0xff]
    %v850 = vld [vmem:[#allocation5 + $0x15d8] sm:$0xff]
    %v851 = vld [vmem:[#allocation5 + $0x15e0] sm:$0xff]
    %v852 = vld [vmem:[#allocation5 + $0x15e8] sm:$0xff]
    %v853 = vld [vmem:[#allocation5 + $0x15f0] sm:$0xff]
    %v854 = vld [vmem:[#allocation5 + $0x15f8] sm:$0xff]
    %v855 = vld [vmem:[#allocation5 + $0x1600] sm:$0xff]
    %v856 = vld [vmem:[#allocation5 + $0x1608] sm:$0xff]
    %v857 = vld [vmem:[#allocation5 + $0x1610] sm:$0xff]
    %v858 = vld [vmem:[#allocation5 + $0x1618] sm:$0xff]
    %v859 = vld [vmem:[#allocation5 + $0x1620] sm:$0xff]
    %v860 = vld [vmem:[#allocation5 + $0x1628] sm:$0xff]
    %v861 = vld [vmem:[#allocation5 + $0x1630] sm:$0xff]
    %v862 = vld [vmem:[#allocation5 + $0x1638] sm:$0xff]
    %v863 = vld [vmem:[#allocation5 + $0x1640] sm:$0xff]
    %v864 = vld [vmem:[#allocation5 + $0x1648] sm:$0xff]
    %v865 = vld [vmem:[#allocation5 + $0x1650] sm:$0xff]
    %v866 = vld [vmem:[#allocation5 + $0x1658] sm:$0xff]
    %v867 = vld [vmem:[#allocation5 + $0x1660] sm:$0xff]
    %v868 = vld [vmem:[#allocation5 + $0x1668] sm:$0xff]
    %v869 = vld [vmem:[#allocation5 + $0x1670] sm:$0xff]
    %v870 = vld [vmem:[#allocation5 + $0x1678] sm:$0xff]
    %v871 = vld [vmem:[#allocation5 + $0x1680] sm:$0xff]
    %v872 = vld [vmem:[#allocation5 + $0x1688] sm:$0xff]
    %v873 = vld [vmem:[#allocation5 + $0x1690] sm:$0xff]
    %v874 = vld [vmem:[#allocation5 + $0x1698] sm:$0xff]
    %v875 = vld [vmem:[#allocation5 + $0x16a0] sm:$0xff]
    %v876 = vld [vmem:[#allocation5 + $0x16a8] sm:$0xff]
    %v877 = vld [vmem:[#allocation5 + $0x16b0] sm:$0xff]
    %v878 = vld [vmem:[#allocation5 + $0x16b8] sm:$0xff]
    %v879 = vld [vmem:[#allocation5 + $0x16c0] sm:$0xff]
    %v880 = vld [vmem:[#allocation5 + $0x16c8] sm:$0xff]
    %v881 = vld [vmem:[#allocation5 + $0x16d0] sm:$0xff]
    %v882 = vld [vmem:[#allocation5 + $0x16d8] sm:$0xff]
    %v883 = vld [vmem:[#allocation5 + $0x16e0] sm:$0xff]
    %v884 = vld [vmem:[#allocation5 + $0x16e8] sm:$0xff]
    %v885 = vld [vmem:[#allocation5 + $0x16f0] sm:$0xff]
    %v886 = vld [vmem:[#allocation5 + $0x16f8] sm:$0xff]
    %v887 = vld [vmem:[#allocation5 + $0x1700] sm:$0xff]
    %v888 = vld [vmem:[#allocation5 + $0x1708] sm:$0xff]
    %v889 = vld [vmem:[#allocation5 + $0x1710] sm:$0xff]
    %v890 = vld [vmem:[#allocation5 + $0x1718] sm:$0xff]
    %v891 = vld [vmem:[#allocation5 + $0x1720] sm:$0xff]
    %v892 = vld [vmem:[#allocation5 + $0x1728] sm:$0xff]
    %v893 = vld [vmem:[#allocation5 + $0x1730] sm:$0xff]
    %v894 = vld [vmem:[#allocation5 + $0x1738] sm:$0xff]
    %v895 = vld [vmem:[#allocation5 + $0x1740] sm:$0xff]
    %v896 = vld [vmem:[#allocation5 + $0x1748] sm:$0xff]
    %v897 = vld [vmem:[#allocation5 + $0x1750] sm:$0xff]
    %v898 = vld [vmem:[#allocation5 + $0x1758] sm:$0xff]
    %v899 = vld [vmem:[#allocation5 + $0x1760] sm:$0xff]
    %v900 = vld [vmem:[#allocation5 + $0x1768] sm:$0xff]
    %v901 = vld [vmem:[#allocation5 + $0x1770] sm:$0xff]
    %v902 = vld [vmem:[#allocation5 + $0x1778] sm:$0xff]
    %v903 = vld [vmem:[#allocation5 + $0x1780] sm:$0xff]
    %v904 = vld [vmem:[#allocation5 + $0x1788] sm:$0xff]
    %v905 = vld [vmem:[#allocation5 + $0x1790] sm:$0xff]
    %v906 = vld [vmem:[#allocation5 + $0x1798] sm:$0xff]
    %v907 = vld [vmem:[#allocation5 + $0x17a0] sm:$0xff]
    %v908 = vld [vmem:[#allocation5 + $0x17a8] sm:$0xff]
    %v909 = vld [vmem:[#allocation5 + $0x17b0] sm:$0xff]
    %v910 = vld [vmem:[#allocation5 + $0x17b8] sm:$0xff]
    %v911 = vld [vmem:[#allocation5 + $0x17c0] sm:$0xff]
    %v912 = vld [vmem:[#allocation5 + $0x17c8] sm:$0xff]
    %v913 = vld [vmem:[#allocation5 + $0x17d0] sm:$0xff]
    %v914 = vld [vmem:[#allocation5 + $0x17d8] sm:$0xff]
    %v915 = vld [vmem:[#allocation5 + $0x17e0] sm:$0xff]
    %v916 = vld [vmem:[#allocation5 + $0x17e8] sm:$0xff]
    %v917 = vld [vmem:[#allocation5 + $0x17f0] sm:$0xff]
    %v918 = vld [vmem:[#allocation5 + $0x17f8] sm:$0xff]
    %v919 = vld [vmem:[#allocation5 + $0x1800] sm:$0xff]
    %v920 = vld [vmem:[#allocation5 + $0x1808] sm:$0xff]
    %v921 = vld [vmem:[#allocation5 + $0x1810] sm:$0xff]
    %v922 = vld [vmem:[#allocation5 + $0x1818] sm:$0xff]
    %v923 = vld [vmem:[#allocation5 + $0x1820] sm:$0xff]
    %v924 = vld [vmem:[#allocation5 + $0x1828] sm:$0xff]
    %v925 = vld [vmem:[#allocation5 + $0x1830] sm:$0xff]
    %v926 = vld [vmem:[#allocation5 + $0x1838] sm:$0xff]
    %v927 = vld [vmem:[#allocation5 + $0x1840] sm:$0xff]
    %v928 = vld [vmem:[#allocation5 + $0x1848] sm:$0xff]
    %v929 = vld [vmem:[#allocation5 + $0x1850] sm:$0xff]
    %v930 = vld [vmem:[#allocation5 + $0x1858] sm:$0xff]
    %v931 = vld [vmem:[#allocation5 + $0x1860] sm:$0xff]
    %v932 = vld [vmem:[#allocation5 + $0x1868] sm:$0xff]
    %v933 = vld [vmem:[#allocation5 + $0x1870] sm:$0xff]
    %v934 = vld [vmem:[#allocation5 + $0x1878] sm:$0xff]
    %v935 = vld [vmem:[#allocation5 + $0x1880] sm:$0xff]
    %v936 = vld [vmem:[#allocation5 + $0x1888] sm:$0xff]
    %v937 = vld [vmem:[#allocation5 + $0x1890] sm:$0xff]
    %v938 = vld [vmem:[#allocation5 + $0x1898] sm:$0xff]
    %v939 = vld [vmem:[#allocation5 + $0x18a0] sm:$0xff]
    %v940 = vld [vmem:[#allocation5 + $0x18a8] sm:$0xff]
    %v941 = vld [vmem:[#allocation5 + $0x18b0] sm:$0xff]
    %v942 = vld [vmem:[#allocation5 + $0x18b8] sm:$0xff]
    %v943 = vld [vmem:[#allocation5 + $0x18c0] sm:$0xff]
    %v944 = vld [vmem:[#allocation5 + $0x18c8] sm:$0xff]
    %v945 = vld [vmem:[#allocation5 + $0x18d0] sm:$0xff]
    %v946 = vld [vmem:[#allocation5 + $0x18d8] sm:$0xff]
    %v947 = vld [vmem:[#allocation5 + $0x18e0] sm:$0xff]
    %v948 = vld [vmem:[#allocation5 + $0x18e8] sm:$0xff]
    %v949 = vld [vmem:[#allocation5 + $0x18f0] sm:$0xff]
    %v950 = vld [vmem:[#allocation5 + $0x18f8] sm:$0xff]
    %v951 = vld [vmem:[#allocation5 + $0x1900] sm:$0xff]
    %v952 = vld [vmem:[#allocation5 + $0x1908] sm:$0xff]
    %v953 = vld [vmem:[#allocation5 + $0x1910] sm:$0xff]
    %v954 = vld [vmem:[#allocation5 + $0x1918] sm:$0xff]
    %v955 = vld [vmem:[#allocation5 + $0x1920] sm:$0xff]
    %v956 = vld [vmem:[#allocation5 + $0x1928] sm:$0xff]
    %v957 = vld [vmem:[#allocation5 + $0x1930] sm:$0xff]
    %v958 = vld [vmem:[#allocation5 + $0x1938] sm:$0xff]
    %v959 = vld [vmem:[#allocation5 + $0x1940] sm:$0xff]
    %v960 = vld [vmem:[#allocation5 + $0x1948] sm:$0xff]
    %v961 = vld [vmem:[#allocation5 + $0x1950] sm:$0xff]
    %v962 = vld [vmem:[#allocation5 + $0x1958] sm:$0xff]
    %v963 = vld [vmem:[#allocation5 + $0x1960] sm:$0xff]
    %v964 = vld [vmem:[#allocation5 + $0x1968] sm:$0xff]
    %v965 = vld [vmem:[#allocation5 + $0x1970] sm:$0xff]
    %v966 = vld [vmem:[#allocation5 + $0x1978] sm:$0xff]
    %v967 = vld [vmem:[#allocation5 + $0x1980] sm:$0xff]
    %v968 = vld [vmem:[#allocation5 + $0x1988] sm:$0xff]
    %v969 = vld [vmem:[#allocation5 + $0x1990] sm:$0xff]
    %v970 = vld [vmem:[#allocation5 + $0x1998] sm:$0xff]
    %v971 = vld [vmem:[#allocation5 + $0x19a0] sm:$0xff]
    %v972 = vld [vmem:[#allocation5 + $0x19a8] sm:$0xff]
    %v973 = vld [vmem:[#allocation5 + $0x19b0] sm:$0xff]
    %v974 = vld [vmem:[#allocation5 + $0x19b8] sm:$0xff]
    %v975 = vld [vmem:[#allocation5 + $0x19c0] sm:$0xff]
    %v976 = vld [vmem:[#allocation5 + $0x19c8] sm:$0xff]
    %v977 = vld [vmem:[#allocation5 + $0x19d0] sm:$0xff]
    %v978 = vld [vmem:[#allocation5 + $0x19d8] sm:$0xff]
    %v979 = vld [vmem:[#allocation5 + $0x19e0] sm:$0xff]
    %v980 = vld [vmem:[#allocation5 + $0x19e8] sm:$0xff]
    %v981 = vld [vmem:[#allocation5 + $0x19f0] sm:$0xff]
    %v982 = vld [vmem:[#allocation5 + $0x19f8] sm:$0xff]
    %v983 = vld [vmem:[#allocation5 + $0x1a00] sm:$0xff]
    %v984 = vld [vmem:[#allocation5 + $0x1a08] sm:$0xff]
    %v985 = vld [vmem:[#allocation5 + $0x1a10] sm:$0xff]
    %v986 = vld [vmem:[#allocation5 + $0x1a18] sm:$0xff]
    %v987 = vld [vmem:[#allocation5 + $0x1a20] sm:$0xff]
    %v988 = vld [vmem:[#allocation5 + $0x1a28] sm:$0xff]
    %v989 = vld [vmem:[#allocation5 + $0x1a30] sm:$0xff]
    %v990 = vld [vmem:[#allocation5 + $0x1a38] sm:$0xff]
    %v991 = vld [vmem:[#allocation5 + $0x1a40] sm:$0xff]
    %v992 = vld [vmem:[#allocation5 + $0x1a48] sm:$0xff]
    %v993 = vld [vmem:[#allocation5 + $0x1a50] sm:$0xff]
    %v994 = vld [vmem:[#allocation5 + $0x1a58] sm:$0xff]
    %v995 = vld [vmem:[#allocation5 + $0x1a60] sm:$0xff]
    %v996 = vld [vmem:[#allocation5 + $0x1a68] sm:$0xff]
    %v997 = vld [vmem:[#allocation5 + $0x1a70] sm:$0xff]
    %v998 = vld [vmem:[#allocation5 + $0x1a78] sm:$0xff]
    %v999 = vld [vmem:[#allocation5 + $0x1a80] sm:$0xff]
    %v1000 = vld [vmem:[#allocation5 + $0x1a88] sm:$0xff]
    %v1001 = vld [vmem:[#allocation5 + $0x1a90] sm:$0xff]
    %v1002 = vld [vmem:[#allocation5 + $0x1a98] sm:$0xff]
    %v1003 = vld [vmem:[#allocation5 + $0x1aa0] sm:$0xff]
    %v1004 = vld [vmem:[#allocation5 + $0x1aa8] sm:$0xff]
    %v1005 = vld [vmem:[#allocation5 + $0x1ab0] sm:$0xff]
    %v1006 = vld [vmem:[#allocation5 + $0x1ab8] sm:$0xff]
    %v1007 = vld [vmem:[#allocation5 + $0x1ac0] sm:$0xff]
    %v1008 = vld [vmem:[#allocation5 + $0x1ac8] sm:$0xff]
    %v1009 = vld [vmem:[#allocation5 + $0x1ad0] sm:$0xff]
    %v1010 = vld [vmem:[#allocation5 + $0x1ad8] sm:$0xff]
    %v1011 = vld [vmem:[#allocation5 + $0x1ae0] sm:$0xff]
    %v1012 = vld [vmem:[#allocation5 + $0x1ae8] sm:$0xff]
    %v1013 = vld [vmem:[#allocation5 + $0x1af0] sm:$0xff]
    %v1014 = vld [vmem:[#allocation5 + $0x1af8] sm:$0xff]
    %v1015 = vld [vmem:[#allocation5 + $0x1b00] sm:$0xff]
    %v1016 = vld [vmem:[#allocation5 + $0x1b08] sm:$0xff]
    %v1017 = vld [vmem:[#allocation5 + $0x1b10] sm:$0xff]
    %v1018 = vld [vmem:[#allocation5 + $0x1b18] sm:$0xff]
    %v1019 = vld [vmem:[#allocation5 + $0x1b20] sm:$0xff]
    %v1020 = vld [vmem:[#allocation5 + $0x1b28] sm:$0xff]
    %v1021 = vld [vmem:[#allocation5 + $0x1b30] sm:$0xff]
    %v1022 = vld [vmem:[#allocation5 + $0x1b38] sm:$0xff]
    %v1023 = vld [vmem:[#allocation5 + $0x1b40] sm:$0xff]
    %v1024 = vld [vmem:[#allocation5 + $0x1b48] sm:$0xff]
    %v1025 = vld [vmem:[#allocation5 + $0x1b50] sm:$0xff]
    %v1026 = vld [vmem:[#allocation5 + $0x1b58] sm:$0xff]
    %v1027 = vld [vmem:[#allocation5 + $0x1b60] sm:$0xff]
    %v1028 = vld [vmem:[#allocation5 + $0x1b68] sm:$0xff]
    %v1029 = vld [vmem:[#allocation5 + $0x1b70] sm:$0xff]
    %v1030 = vld [vmem:[#allocation5 + $0x1b78] sm:$0xff]
    %v1031 = vld [vmem:[#allocation5 + $0x1b80] sm:$0xff]
    %v1032 = vld [vmem:[#allocation5 + $0x1b88] sm:$0xff]
    %v1033 = vld [vmem:[#allocation5 + $0x1b90] sm:$0xff]
    %v1034 = vld [vmem:[#allocation5 + $0x1b98] sm:$0xff]
    %v1035 = vld [vmem:[#allocation5 + $0x1ba0] sm:$0xff]
    %v1036 = vld [vmem:[#allocation5 + $0x1ba8] sm:$0xff]
    %v1037 = vld [vmem:[#allocation5 + $0x1bb0] sm:$0xff]
    %v1038 = vld [vmem:[#allocation5 + $0x1bb8] sm:$0xff]
    %v1039 = vld [vmem:[#allocation5 + $0x1bc0] sm:$0xff]
    %v1040 = vld [vmem:[#allocation5 + $0x1bc8] sm:$0xff]
    %v1041 = vld [vmem:[#allocation5 + $0x1bd0] sm:$0xff]
    %v1042 = vld [vmem:[#allocation5 + $0x1bd8] sm:$0xff]
    %v1043 = vld [vmem:[#allocation5 + $0x1be0] sm:$0xff]
    %v1044 = vld [vmem:[#allocation5 + $0x1be8] sm:$0xff]
    %v1045 = vld [vmem:[#allocation5 + $0x1bf0] sm:$0xff]
    %v1046 = vld [vmem:[#allocation5 + $0x1bf8] sm:$0xff]
    %v1047 = vld [vmem:[#allocation5 + $0x1c00] sm:$0xff]
    %v1048 = vld [vmem:[#allocation5 + $0x1c08] sm:$0xff]
    %v1049 = vld [vmem:[#allocation5 + $0x1c10] sm:$0xff]
    %v1050 = vld [vmem:[#allocation5 + $0x1c18] sm:$0xff]
    %v1051 = vld [vmem:[#allocation5 + $0x1c20] sm:$0xff]
    %v1052 = vld [vmem:[#allocation5 + $0x1c28] sm:$0xff]
    %v1053 = vld [vmem:[#allocation5 + $0x1c30] sm:$0xff]
    %v1054 = vld [vmem:[#allocation5 + $0x1c38] sm:$0xff]
    %v1055 = vld [vmem:[#allocation5 + $0x1c40] sm:$0xff]
    %v1056 = vld [vmem:[#allocation5 + $0x1c48] sm:$0xff]
    %v1057 = vld [vmem:[#allocation5 + $0x1c50] sm:$0xff]
    %v1058 = vld [vmem:[#allocation5 + $0x1c58] sm:$0xff]
    %v1059 = vld [vmem:[#allocation5 + $0x1c60] sm:$0xff]
    %v1060 = vld [vmem:[#allocation5 + $0x1c68] sm:$0xff]
    %v1061 = vld [vmem:[#allocation5 + $0x1c70] sm:$0xff]
    %v1062 = vld [vmem:[#allocation5 + $0x1c78] sm:$0xff]
    %v1063 = vld [vmem:[#allocation5 + $0x1c80] sm:$0xff]
    %v1064 = vld [vmem:[#allocation5 + $0x1c88] sm:$0xff]
    %v1065 = vld [vmem:[#allocation5 + $0x1c90] sm:$0xff]
    %v1066 = vld [vmem:[#allocation5 + $0x1c98] sm:$0xff]
    %v1067 = vld [vmem:[#allocation5 + $0x1ca0] sm:$0xff]
    %v1068 = vld [vmem:[#allocation5 + $0x1ca8] sm:$0xff]
    %v1069 = vld [vmem:[#allocation5 + $0x1cb0] sm:$0xff]
    %v1070 = vld [vmem:[#allocation5 + $0x1cb8] sm:$0xff]
    %v1071 = vld [vmem:[#allocation5 + $0x1cc0] sm:$0xff]
    %v1072 = vld [vmem:[#allocation5 + $0x1cc8] sm:$0xff]
    %v1073 = vld [vmem:[#allocation5 + $0x1cd0] sm:$0xff]
    %v1074 = vld [vmem:[#allocation5 + $0x1cd8] sm:$0xff]
    %v1075 = vld [vmem:[#allocation5 + $0x1ce0] sm:$0xff]
    %v1076 = vld [vmem:[#allocation5 + $0x1ce8] sm:$0xff]
    %v1077 = vld [vmem:[#allocation5 + $0x1cf0] sm:$0xff]
    %v1078 = vld [vmem:[#allocation5 + $0x1cf8] sm:$0xff]
    %v1079 = vld [vmem:[#allocation5 + $0x1d00] sm:$0xff]
    %v1080 = vld [vmem:[#allocation5 + $0x1d08] sm:$0xff]
    %v1081 = vld [vmem:[#allocation5 + $0x1d10] sm:$0xff]
    %v1082 = vld [vmem:[#allocation5 + $0x1d18] sm:$0xff]
    %v1083 = vld [vmem:[#allocation5 + $0x1d20] sm:$0xff]
    %v1084 = vld [vmem:[#allocation5 + $0x1d28] sm:$0xff]
    %v1085 = vld [vmem:[#allocation5 + $0x1d30] sm:$0xff]
    %v1086 = vld [vmem:[#allocation5 + $0x1d38] sm:$0xff]
    %v1087 = vld [vmem:[#allocation5 + $0x1d40] sm:$0xff]
    %v1088 = vld [vmem:[#allocation5 + $0x1d48] sm:$0xff]
    %v1089 = vld [vmem:[#allocation5 + $0x1d50] sm:$0xff]
    %v1090 = vld [vmem:[#allocation5 + $0x1d58] sm:$0xff]
    %v1091 = vld [vmem:[#allocation5 + $0x1d60] sm:$0xff]
    %v1092 = vld [vmem:[#allocation5 + $0x1d68] sm:$0xff]
    %v1093 = vld [vmem:[#allocation5 + $0x1d70] sm:$0xff]
    %v1094 = vld [vmem:[#allocation5 + $0x1d78] sm:$0xff]
    %v1095 = vld [vmem:[#allocation5 + $0x1d80] sm:$0xff]
    %v1096 = vld [vmem:[#allocation5 + $0x1d88] sm:$0xff]
    %v1097 = vld [vmem:[#allocation5 + $0x1d90] sm:$0xff]
    %v1098 = vld [vmem:[#allocation5 + $0x1d98] sm:$0xff]
    %v1099 = vld [vmem:[#allocation5 + $0x1da0] sm:$0xff]
    %v1100 = vld [vmem:[#allocation5 + $0x1da8] sm:$0xff]
    %v1101 = vld [vmem:[#allocation5 + $0x1db0] sm:$0xff]
    %v1102 = vld [vmem:[#allocation5 + $0x1db8] sm:$0xff]
    %v1103 = vld [vmem:[#allocation5 + $0x1dc0] sm:$0xff]
    %v1104 = vld [vmem:[#allocation5 + $0x1dc8] sm:$0xff]
    %v1105 = vld [vmem:[#allocation5 + $0x1dd0] sm:$0xff]
    %v1106 = vld [vmem:[#allocation5 + $0x1dd8] sm:$0xff]
    %v1107 = vld [vmem:[#allocation5 + $0x1de0] sm:$0xff]
    %v1108 = vld [vmem:[#allocation5 + $0x1de8] sm:$0xff]
    %v1109 = vld [vmem:[#allocation5 + $0x1df0] sm:$0xff]
    %v1110 = vld [vmem:[#allocation5 + $0x1df8] sm:$0xff]
    %v1111 = vld [vmem:[#allocation7] sm:$0xf]
    %v1113 = vlaneseq
    %v1114 = vshrl.u32 %v1113, 7
    %v1115 = vsub.s32 0, %v1114
    %v1116 = vrot.slane %v1111, %v1115
    %v1117 = vlaneseq
    %v1118 = vshrl.u32 %v1117, 7
    %v1119 = vsub.s32 1, %v1118
    %v1120 = vrot.slane %v1111, %v1119
    %v1121 = vlaneseq
    %v1122 = vshrl.u32 %v1121, 7
    %v1123 = vsub.s32 2, %v1122
    %v1124 = vrot.slane %v1111, %v1123
    %v1125 = vlaneseq
    %v1126 = vshrl.u32 %v1125, 7
    %v1127 = vsub.s32 3, %v1126
    %v1128 = vrot.slane %v1111, %v1127
    %v2093 = vunpack.c.l.b16 %v151
    %v2094 = vunpack.c.h.b16 %v151
    %v2095 = vunpack.c.l.b16 %v152
    %v2096 = vunpack.c.h.b16 %v152
    %v2097 = vunpack.c.l.b16 %v153
    %v2098 = vunpack.c.h.b16 %v153
    %v2099 = vunpack.c.l.b16 %v154
    %v2100 = vunpack.c.h.b16 %v154
    %v2101 = vunpack.c.l.b16 %v155
    %v2102 = vunpack.c.h.b16 %v155
    %v2103 = vunpack.c.l.b16 %v156
    %v2104 = vunpack.c.h.b16 %v156
    %v2105 = vunpack.c.l.b16 %v157
    %v2106 = vunpack.c.h.b16 %v157
    %v2107 = vunpack.c.l.b16 %v158
    %v2108 = vunpack.c.h.b16 %v158
    %v2109 = vunpack.c.l.b16 %v159
    %v2110 = vunpack.c.h.b16 %v159
    %v2111 = vunpack.c.l.b16 %v160
    %v2112 = vunpack.c.h.b16 %v160
    %v2113 = vunpack.c.l.b16 %v161
    %v2114 = vunpack.c.h.b16 %v161
    %v2115 = vunpack.c.l.b16 %v162
    %v2116 = vunpack.c.h.b16 %v162
    %v2117 = vunpack.c.l.b16 %v163
    %v2118 = vunpack.c.h.b16 %v163
    %v2119 = vunpack.c.l.b16 %v164
    %v2120 = vunpack.c.h.b16 %v164
    %v2121 = vunpack.c.l.b16 %v165
    %v2122 = vunpack.c.h.b16 %v165
    %v2123 = vunpack.c.l.b16 %v166
    %v2124 = vunpack.c.h.b16 %v166
    %v2125 = vunpack.c.l.b16 %v167
    %v2126 = vunpack.c.h.b16 %v167
    %v2127 = vunpack.c.l.b16 %v168
    %v2128 = vunpack.c.h.b16 %v168
    %v2129 = vunpack.c.l.b16 %v169
    %v2130 = vunpack.c.h.b16 %v169
    %v2131 = vunpack.c.l.b16 %v170
    %v2132 = vunpack.c.h.b16 %v170
    %v2133 = vunpack.c.l.b16 %v171
    %v2134 = vunpack.c.h.b16 %v171
    %v2135 = vunpack.c.l.b16 %v172
    %v2136 = vunpack.c.h.b16 %v172
    %v2137 = vunpack.c.l.b16 %v173
    %v2138 = vunpack.c.h.b16 %v173
    %v2139 = vunpack.c.l.b16 %v174
    %v2140 = vunpack.c.h.b16 %v174
    %v2141 = vunpack.c.l.b16 %v175
    %v2142 = vunpack.c.h.b16 %v175
    %v2143 = vunpack.c.l.b16 %v176
    %v2144 = vunpack.c.h.b16 %v176
    %v2145 = vunpack.c.l.b16 %v177
    %v2146 = vunpack.c.h.b16 %v177
    %v2147 = vunpack.c.l.b16 %v178
    %v2148 = vunpack.c.h.b16 %v178
    %v2149 = vunpack.c.l.b16 %v179
    %v2150 = vunpack.c.h.b16 %v179
    %v2151 = vunpack.c.l.b16 %v180
    %v2152 = vunpack.c.h.b16 %v180
    %v2153 = vunpack.c.l.b16 %v181
    %v2154 = vunpack.c.h.b16 %v181
    %v2155 = vunpack.c.l.b16 %v182
    %v2156 = vunpack.c.h.b16 %v182
    %v2157 = vunpack.c.l.b16 %v183
    %v2158 = vunpack.c.h.b16 %v183
    %v2159 = vunpack.c.l.b16 %v184
    %v2160 = vunpack.c.h.b16 %v184
    %v2161 = vunpack.c.l.b16 %v185
    %v2162 = vunpack.c.h.b16 %v185
    %v2163 = vunpack.c.l.b16 %v186
    %v2164 = vunpack.c.h.b16 %v186
    %v2165 = vunpack.c.l.b16 %v187
    %v2166 = vunpack.c.h.b16 %v187
    %v2167 = vunpack.c.l.b16 %v188
    %v2168 = vunpack.c.h.b16 %v188
    %v2169 = vunpack.c.l.b16 %v189
    %v2170 = vunpack.c.h.b16 %v189
    %v2171 = vunpack.c.l.b16 %v190
    %v2172 = vunpack.c.h.b16 %v190
    %v2173 = vunpack.c.l.b16 %v191
    %v2174 = vunpack.c.h.b16 %v191
    %v2175 = vunpack.c.l.b16 %v192
    %v2176 = vunpack.c.h.b16 %v192
    %v2177 = vunpack.c.l.b16 %v193
    %v2178 = vunpack.c.h.b16 %v193
    %v2179 = vunpack.c.l.b16 %v194
    %v2180 = vunpack.c.h.b16 %v194
    %v2181 = vunpack.c.l.b16 %v195
    %v2182 = vunpack.c.h.b16 %v195
    %v2183 = vunpack.c.l.b16 %v196
    %v2184 = vunpack.c.h.b16 %v196
    %v2185 = vunpack.c.l.b16 %v197
    %v2186 = vunpack.c.h.b16 %v197
    %v2187 = vunpack.c.l.b16 %v198
    %v2188 = vunpack.c.h.b16 %v198
    %v2189 = vunpack.c.l.b16 %v199
    %v2190 = vunpack.c.h.b16 %v199
    %v2191 = vunpack.c.l.b16 %v200
    %v2192 = vunpack.c.h.b16 %v200
    %v2193 = vunpack.c.l.b16 %v201
    %v2194 = vunpack.c.h.b16 %v201
    %v2195 = vunpack.c.l.b16 %v202
    %v2196 = vunpack.c.h.b16 %v202
    %v2197 = vunpack.c.l.b16 %v203
    %v2198 = vunpack.c.h.b16 %v203
    %v2199 = vunpack.c.l.b16 %v204
    %v2200 = vunpack.c.h.b16 %v204
    %v2201 = vunpack.c.l.b16 %v205
    %v2202 = vunpack.c.h.b16 %v205
    %v2203 = vunpack.c.l.b16 %v206
    %v2204 = vunpack.c.h.b16 %v206
    %v2205 = vunpack.c.l.b16 %v207
    %v2206 = vunpack.c.h.b16 %v207
    %v2207 = vunpack.c.l.b16 %v208
    %v2208 = vunpack.c.h.b16 %v208
    %v2209 = vunpack.c.l.b16 %v209
    %v2210 = vunpack.c.h.b16 %v209
    %v2211 = vunpack.c.l.b16 %v210
    %v2212 = vunpack.c.h.b16 %v210
    %v2213 = vunpack.c.l.b16 %v211
    %v2214 = vunpack.c.h.b16 %v211
    %v2215 = vunpack.c.l.b16 %v212
    %v2216 = vunpack.c.h.b16 %v212
    %v2217 = vunpack.c.l.b16 %v213
    %v2218 = vunpack.c.h.b16 %v213
    %v2219 = vunpack.c.l.b16 %v214
    %v2220 = vunpack.c.h.b16 %v214
    %v2221 = vunpack.c.l.b16 %v215
    %v2222 = vunpack.c.h.b16 %v215
    %v2223 = vunpack.c.l.b16 %v216
    %v2224 = vunpack.c.h.b16 %v216
    %v2225 = vunpack.c.l.b16 %v217
    %v2226 = vunpack.c.h.b16 %v217
    %v2227 = vunpack.c.l.b16 %v218
    %v2228 = vunpack.c.h.b16 %v218
    %v2229 = vunpack.c.l.b16 %v219
    %v2230 = vunpack.c.h.b16 %v219
    %v2231 = vunpack.c.l.b16 %v220
    %v2232 = vunpack.c.h.b16 %v220
    %v2233 = vunpack.c.l.b16 %v221
    %v2234 = vunpack.c.h.b16 %v221
    %v2235 = vunpack.c.l.b16 %v222
    %v2236 = vunpack.c.h.b16 %v222
    %v2237 = vunpack.c.l.b16 %v223
    %v2238 = vunpack.c.h.b16 %v223
    %v2239 = vunpack.c.l.b16 %v224
    %v2240 = vunpack.c.h.b16 %v224
    %v2241 = vunpack.c.l.b16 %v225
    %v2242 = vunpack.c.h.b16 %v225
    %v2243 = vunpack.c.l.b16 %v226
    %v2244 = vunpack.c.h.b16 %v226
    %v2245 = vunpack.c.l.b16 %v227
    %v2246 = vunpack.c.h.b16 %v227
    %v2247 = vunpack.c.l.b16 %v228
    %v2248 = vunpack.c.h.b16 %v228
    %v2249 = vunpack.c.l.b16 %v229
    %v2250 = vunpack.c.h.b16 %v229
    %v2251 = vunpack.c.l.b16 %v230
    %v2252 = vunpack.c.h.b16 %v230
    %v2253 = vunpack.c.l.b16 %v231
    %v2254 = vunpack.c.h.b16 %v231
    %v2255 = vunpack.c.l.b16 %v232
    %v2256 = vunpack.c.h.b16 %v232
    %v2257 = vunpack.c.l.b16 %v233
    %v2258 = vunpack.c.h.b16 %v233
    %v2259 = vunpack.c.l.b16 %v234
    %v2260 = vunpack.c.h.b16 %v234
    %v2261 = vunpack.c.l.b16 %v235
    %v2262 = vunpack.c.h.b16 %v235
    %v2263 = vunpack.c.l.b16 %v236
    %v2264 = vunpack.c.h.b16 %v236
    %v2265 = vunpack.c.l.b16 %v237
    %v2266 = vunpack.c.h.b16 %v237
    %v2267 = vunpack.c.l.b16 %v238
    %v2268 = vunpack.c.h.b16 %v238
    %v2269 = vunpack.c.l.b16 %v239
    %v2270 = vunpack.c.h.b16 %v239
    %v2271 = vunpack.c.l.b16 %v240
    %v2272 = vunpack.c.h.b16 %v240
    %v2273 = vunpack.c.l.b16 %v241
    %v2274 = vunpack.c.h.b16 %v241
    %v2275 = vunpack.c.l.b16 %v242
    %v2276 = vunpack.c.h.b16 %v242
    %v2277 = vunpack.c.l.b16 %v243
    %v2278 = vunpack.c.h.b16 %v243
    %v2279 = vunpack.c.l.b16 %v244
    %v2280 = vunpack.c.h.b16 %v244
    %v2281 = vunpack.c.l.b16 %v245
    %v2282 = vunpack.c.h.b16 %v245
    %v2283 = vunpack.c.l.b16 %v246
    %v2284 = vunpack.c.h.b16 %v246
    %v2285 = vunpack.c.l.b16 %v247
    %v2286 = vunpack.c.h.b16 %v247
    %v2287 = vunpack.c.l.b16 %v248
    %v2288 = vunpack.c.h.b16 %v248
    %v2289 = vunpack.c.l.b16 %v249
    %v2290 = vunpack.c.h.b16 %v249
    %v2291 = vunpack.c.l.b16 %v250
    %v2292 = vunpack.c.h.b16 %v250
    %v2293 = vunpack.c.l.b16 %v251
    %v2294 = vunpack.c.h.b16 %v251
    %v2295 = vunpack.c.l.b16 %v252
    %v2296 = vunpack.c.h.b16 %v252
    %v2297 = vunpack.c.l.b16 %v253
    %v2298 = vunpack.c.h.b16 %v253
    %v2299 = vunpack.c.l.b16 %v254
    %v2300 = vunpack.c.h.b16 %v254
    %v2301 = vunpack.c.l.b16 %v255
    %v2302 = vunpack.c.h.b16 %v255
    %v2303 = vunpack.c.l.b16 %v256
    %v2304 = vunpack.c.h.b16 %v256
    %v2305 = vunpack.c.l.b16 %v257
    %v2306 = vunpack.c.h.b16 %v257
    %v2307 = vunpack.c.l.b16 %v258
    %v2308 = vunpack.c.h.b16 %v258
    %v2309 = vunpack.c.l.b16 %v259
    %v2310 = vunpack.c.h.b16 %v259
    %v2311 = vunpack.c.l.b16 %v260
    %v2312 = vunpack.c.h.b16 %v260
    %v2313 = vunpack.c.l.b16 %v261
    %v2314 = vunpack.c.h.b16 %v261
    %v2315 = vunpack.c.l.b16 %v262
    %v2316 = vunpack.c.h.b16 %v262
    %v2317 = vunpack.c.l.b16 %v263
    %v2318 = vunpack.c.h.b16 %v263
    %v2319 = vunpack.c.l.b16 %v264
    %v2320 = vunpack.c.h.b16 %v264
    %v2321 = vunpack.c.l.b16 %v265
    %v2322 = vunpack.c.h.b16 %v265
    %v2323 = vunpack.c.l.b16 %v266
    %v2324 = vunpack.c.h.b16 %v266
    %v2325 = vunpack.c.l.b16 %v267
    %v2326 = vunpack.c.h.b16 %v267
    %v2327 = vunpack.c.l.b16 %v268
    %v2328 = vunpack.c.h.b16 %v268
    %v2329 = vunpack.c.l.b16 %v269
    %v2330 = vunpack.c.h.b16 %v269
    %v2331 = vunpack.c.l.b16 %v270
    %v2332 = vunpack.c.h.b16 %v270
    %v2333 = vunpack.c.l.b16 %v271
    %v2334 = vunpack.c.h.b16 %v271
    %v2335 = vunpack.c.l.b16 %v272
    %v2336 = vunpack.c.h.b16 %v272
    %v2337 = vunpack.c.l.b16 %v273
    %v2338 = vunpack.c.h.b16 %v273
    %v2339 = vunpack.c.l.b16 %v274
    %v2340 = vunpack.c.h.b16 %v274
    %v2341 = vunpack.c.l.b16 %v275
    %v2342 = vunpack.c.h.b16 %v275
    %v2343 = vunpack.c.l.b16 %v276
    %v2344 = vunpack.c.h.b16 %v276
    %v2345 = vunpack.c.l.b16 %v277
    %v2346 = vunpack.c.h.b16 %v277
    %v2347 = vunpack.c.l.b16 %v278
    %v2348 = vunpack.c.h.b16 %v278
    %v2349 = vunpack.c.l.b16 %v279
    %v2350 = vunpack.c.h.b16 %v279
    %v2351 = vunpack.c.l.b16 %v280
    %v2352 = vunpack.c.h.b16 %v280
    %v2353 = vunpack.c.l.b16 %v281
    %v2354 = vunpack.c.h.b16 %v281
    %v2355 = vunpack.c.l.b16 %v282
    %v2356 = vunpack.c.h.b16 %v282
    %v2357 = vunpack.c.l.b16 %v283
    %v2358 = vunpack.c.h.b16 %v283
    %v2359 = vunpack.c.l.b16 %v284
    %v2360 = vunpack.c.h.b16 %v284
    %v2361 = vunpack.c.l.b16 %v285
    %v2362 = vunpack.c.h.b16 %v285
    %v2363 = vunpack.c.l.b16 %v286
    %v2364 = vunpack.c.h.b16 %v286
    %v2365 = vunpack.c.l.b16 %v287
    %v2366 = vunpack.c.h.b16 %v287
    %v2367 = vunpack.c.l.b16 %v288
    %v2368 = vunpack.c.h.b16 %v288
    %v2369 = vunpack.c.l.b16 %v289
    %v2370 = vunpack.c.h.b16 %v289
    %v2371 = vunpack.c.l.b16 %v290
    %v2372 = vunpack.c.h.b16 %v290
    %v2373 = vunpack.c.l.b16 %v291
    %v2374 = vunpack.c.h.b16 %v291
    %v2375 = vunpack.c.l.b16 %v292
    %v2376 = vunpack.c.h.b16 %v292
    %v2377 = vunpack.c.l.b16 %v293
    %v2378 = vunpack.c.h.b16 %v293
    %v2379 = vunpack.c.l.b16 %v294
    %v2380 = vunpack.c.h.b16 %v294
    %v2381 = vunpack.c.l.b16 %v295
    %v2382 = vunpack.c.h.b16 %v295
    %v2383 = vunpack.c.l.b16 %v296
    %v2384 = vunpack.c.h.b16 %v296
    %v2385 = vunpack.c.l.b16 %v297
    %v2386 = vunpack.c.h.b16 %v297
    %v2387 = vunpack.c.l.b16 %v298
    %v2388 = vunpack.c.h.b16 %v298
    %v2389 = vunpack.c.l.b16 %v299
    %v2390 = vunpack.c.h.b16 %v299
    %v2391 = vunpack.c.l.b16 %v300
    %v2392 = vunpack.c.h.b16 %v300
    %v2393 = vunpack.c.l.b16 %v301
    %v2394 = vunpack.c.h.b16 %v301
    %v2395 = vunpack.c.l.b16 %v302
    %v2396 = vunpack.c.h.b16 %v302
    %v2397 = vunpack.c.l.b16 %v303
    %v2398 = vunpack.c.h.b16 %v303
    %v2399 = vunpack.c.l.b16 %v304
    %v2400 = vunpack.c.h.b16 %v304
    %v2401 = vunpack.c.l.b16 %v305
    %v2402 = vunpack.c.h.b16 %v305
    %v2403 = vunpack.c.l.b16 %v306
    %v2404 = vunpack.c.h.b16 %v306
    %v2405 = vunpack.c.l.b16 %v307
    %v2406 = vunpack.c.h.b16 %v307
    %v2407 = vunpack.c.l.b16 %v308
    %v2408 = vunpack.c.h.b16 %v308
    %v2409 = vunpack.c.l.b16 %v309
    %v2410 = vunpack.c.h.b16 %v309
    %v2411 = vunpack.c.l.b16 %v310
    %v2412 = vunpack.c.h.b16 %v310
    %v2413 = vunpack.c.l.b16 %v311
    %v2414 = vunpack.c.h.b16 %v311
    %v2415 = vunpack.c.l.b16 %v312
    %v2416 = vunpack.c.h.b16 %v312
    %v2417 = vunpack.c.l.b16 %v313
    %v2418 = vunpack.c.h.b16 %v313
    %v2419 = vunpack.c.l.b16 %v314
    %v2420 = vunpack.c.h.b16 %v314
    %v2421 = vunpack.c.l.b16 %v315
    %v2422 = vunpack.c.h.b16 %v315
    %v2423 = vunpack.c.l.b16 %v316
    %v2424 = vunpack.c.h.b16 %v316
    %v2425 = vunpack.c.l.b16 %v317
    %v2426 = vunpack.c.h.b16 %v317
    %v2427 = vunpack.c.l.b16 %v318
    %v2428 = vunpack.c.h.b16 %v318
    %v2429 = vunpack.c.l.b16 %v319
    %v2430 = vunpack.c.h.b16 %v319
    %v2431 = vunpack.c.l.b16 %v320
    %v2432 = vunpack.c.h.b16 %v320
    %v2433 = vunpack.c.l.b16 %v321
    %v2434 = vunpack.c.h.b16 %v321
    %v2435 = vunpack.c.l.b16 %v322
    %v2436 = vunpack.c.h.b16 %v322
    %v2437 = vunpack.c.l.b16 %v323
    %v2438 = vunpack.c.h.b16 %v323
    %v2439 = vunpack.c.l.b16 %v324
    %v2440 = vunpack.c.h.b16 %v324
    %v2441 = vunpack.c.l.b16 %v325
    %v2442 = vunpack.c.h.b16 %v325
    %v2443 = vunpack.c.l.b16 %v326
    %v2444 = vunpack.c.h.b16 %v326
    %v2445 = vunpack.c.l.b16 %v327
    %v2446 = vunpack.c.h.b16 %v327
    %v2447 = vunpack.c.l.b16 %v328
    %v2448 = vunpack.c.h.b16 %v328
    %v2449 = vunpack.c.l.b16 %v329
    %v2450 = vunpack.c.h.b16 %v329
    %v2451 = vunpack.c.l.b16 %v330
    %v2452 = vunpack.c.h.b16 %v330
    %v2453 = vunpack.c.l.b16 %v331
    %v2454 = vunpack.c.h.b16 %v331
    %v2455 = vunpack.c.l.b16 %v332
    %v2456 = vunpack.c.h.b16 %v332
    %v2457 = vunpack.c.l.b16 %v333
    %v2458 = vunpack.c.h.b16 %v333
    %v2459 = vunpack.c.l.b16 %v334
    %v2460 = vunpack.c.h.b16 %v334
    %v2461 = vunpack.c.l.b16 %v335
    %v2462 = vunpack.c.h.b16 %v335
    %v2463 = vunpack.c.l.b16 %v336
    %v2464 = vunpack.c.h.b16 %v336
    %v2465 = vunpack.c.l.b16 %v337
    %v2466 = vunpack.c.h.b16 %v337
    %v2467 = vunpack.c.l.b16 %v338
    %v2468 = vunpack.c.h.b16 %v338
    %v2469 = vunpack.c.l.b16 %v339
    %v2470 = vunpack.c.h.b16 %v339
    %v2471 = vunpack.c.l.b16 %v340
    %v2472 = vunpack.c.h.b16 %v340
    %v2473 = vunpack.c.l.b16 %v341
    %v2474 = vunpack.c.h.b16 %v341
    %v2475 = vunpack.c.l.b16 %v342
    %v2476 = vunpack.c.h.b16 %v342
    %v2477 = vunpack.c.l.b16 %v343
    %v2478 = vunpack.c.h.b16 %v343
    %v2479 = vunpack.c.l.b16 %v344
    %v2480 = vunpack.c.h.b16 %v344
    %v2481 = vunpack.c.l.b16 %v345
    %v2482 = vunpack.c.h.b16 %v345
    %v2483 = vunpack.c.l.b16 %v346
    %v2484 = vunpack.c.h.b16 %v346
    %v2485 = vunpack.c.l.b16 %v347
    %v2486 = vunpack.c.h.b16 %v347
    %v2487 = vunpack.c.l.b16 %v348
    %v2488 = vunpack.c.h.b16 %v348
    %v2489 = vunpack.c.l.b16 %v349
    %v2490 = vunpack.c.h.b16 %v349
    %v2491 = vunpack.c.l.b16 %v350
    %v2492 = vunpack.c.h.b16 %v350
    %v2493 = vunpack.c.l.b16 %v351
    %v2494 = vunpack.c.h.b16 %v351
    %v2495 = vunpack.c.l.b16 %v352
    %v2496 = vunpack.c.h.b16 %v352
    %v2497 = vunpack.c.l.b16 %v353
    %v2498 = vunpack.c.h.b16 %v353
    %v2499 = vunpack.c.l.b16 %v354
    %v2500 = vunpack.c.h.b16 %v354
    %v2501 = vunpack.c.l.b16 %v355
    %v2502 = vunpack.c.h.b16 %v355
    %v2503 = vunpack.c.l.b16 %v356
    %v2504 = vunpack.c.h.b16 %v356
    %v2505 = vunpack.c.l.b16 %v357
    %v2506 = vunpack.c.h.b16 %v357
    %v2507 = vunpack.c.l.b16 %v358
    %v2508 = vunpack.c.h.b16 %v358
    %v2509 = vunpack.c.l.b16 %v359
    %v2510 = vunpack.c.h.b16 %v359
    %v2511 = vunpack.c.l.b16 %v360
    %v2512 = vunpack.c.h.b16 %v360
    %v2513 = vunpack.c.l.b16 %v361
    %v2514 = vunpack.c.h.b16 %v361
    %v2515 = vunpack.c.l.b16 %v362
    %v2516 = vunpack.c.h.b16 %v362
    %v2517 = vunpack.c.l.b16 %v363
    %v2518 = vunpack.c.h.b16 %v363
    %v2519 = vunpack.c.l.b16 %v364
    %v2520 = vunpack.c.h.b16 %v364
    %v2521 = vunpack.c.l.b16 %v365
    %v2522 = vunpack.c.h.b16 %v365
    %v2523 = vunpack.c.l.b16 %v366
    %v2524 = vunpack.c.h.b16 %v366
    %v2525 = vunpack.c.l.b16 %v367
    %v2526 = vunpack.c.h.b16 %v367
    %v2527 = vunpack.c.l.b16 %v368
    %v2528 = vunpack.c.h.b16 %v368
    %v2529 = vunpack.c.l.b16 %v369
    %v2530 = vunpack.c.h.b16 %v369
    %v2531 = vunpack.c.l.b16 %v370
    %v2532 = vunpack.c.h.b16 %v370
    %v2533 = vunpack.c.l.b16 %v371
    %v2534 = vunpack.c.h.b16 %v371
    %v2535 = vunpack.c.l.b16 %v372
    %v2536 = vunpack.c.h.b16 %v372
    %v2537 = vunpack.c.l.b16 %v373
    %v2538 = vunpack.c.h.b16 %v373
    %v2539 = vunpack.c.l.b16 %v374
    %v2540 = vunpack.c.h.b16 %v374
    %v2541 = vunpack.c.l.b16 %v375
    %v2542 = vunpack.c.h.b16 %v375
    %v2543 = vunpack.c.l.b16 %v376
    %v2544 = vunpack.c.h.b16 %v376
    %v2545 = vunpack.c.l.b16 %v377
    %v2546 = vunpack.c.h.b16 %v377
    %v2547 = vunpack.c.l.b16 %v378
    %v2548 = vunpack.c.h.b16 %v378
    %v2549 = vunpack.c.l.b16 %v379
    %v2550 = vunpack.c.h.b16 %v379
    %v2551 = vunpack.c.l.b16 %v380
    %v2552 = vunpack.c.h.b16 %v380
    %v2553 = vunpack.c.l.b16 %v381
    %v2554 = vunpack.c.h.b16 %v381
    %v2555 = vunpack.c.l.b16 %v382
    %v2556 = vunpack.c.h.b16 %v382
    %v2557 = vunpack.c.l.b16 %v383
    %v2558 = vunpack.c.h.b16 %v383
    %v2559 = vunpack.c.l.b16 %v384
    %v2560 = vunpack.c.h.b16 %v384
    %v2561 = vunpack.c.l.b16 %v385
    %v2562 = vunpack.c.h.b16 %v385
    %v2563 = vunpack.c.l.b16 %v386
    %v2564 = vunpack.c.h.b16 %v386
    %v2565 = vunpack.c.l.b16 %v387
    %v2566 = vunpack.c.h.b16 %v387
    %v2567 = vunpack.c.l.b16 %v388
    %v2568 = vunpack.c.h.b16 %v388
    %v2569 = vunpack.c.l.b16 %v389
    %v2570 = vunpack.c.h.b16 %v389
    %v2571 = vunpack.c.l.b16 %v390
    %v2572 = vunpack.c.h.b16 %v390
    %v2573 = vunpack.c.l.b16 %v391
    %v2574 = vunpack.c.h.b16 %v391
    %v2575 = vunpack.c.l.b16 %v392
    %v2576 = vunpack.c.h.b16 %v392
    %v2577 = vunpack.c.l.b16 %v393
    %v2578 = vunpack.c.h.b16 %v393
    %v2579 = vunpack.c.l.b16 %v394
    %v2580 = vunpack.c.h.b16 %v394
    %v2581 = vunpack.c.l.b16 %v395
    %v2582 = vunpack.c.h.b16 %v395
    %v2583 = vunpack.c.l.b16 %v396
    %v2584 = vunpack.c.h.b16 %v396
    %v2585 = vunpack.c.l.b16 %v397
    %v2586 = vunpack.c.h.b16 %v397
    %v2587 = vunpack.c.l.b16 %v398
    %v2588 = vunpack.c.h.b16 %v398
    %v2589 = vunpack.c.l.b16 %v399
    %v2590 = vunpack.c.h.b16 %v399
    %v2591 = vunpack.c.l.b16 %v400
    %v2592 = vunpack.c.h.b16 %v400
    %v2593 = vunpack.c.l.b16 %v401
    %v2594 = vunpack.c.h.b16 %v401
    %v2595 = vunpack.c.l.b16 %v402
    %v2596 = vunpack.c.h.b16 %v402
    %v2597 = vunpack.c.l.b16 %v403
    %v2598 = vunpack.c.h.b16 %v403
    %v2599 = vunpack.c.l.b16 %v404
    %v2600 = vunpack.c.h.b16 %v404
    %v2601 = vunpack.c.l.b16 %v405
    %v2602 = vunpack.c.h.b16 %v405
    %v2603 = vunpack.c.l.b16 %v406
    %v2604 = vunpack.c.h.b16 %v406
    %v2605 = vunpack.c.l.b16 %v407
    %v2606 = vunpack.c.h.b16 %v407
    %v2607 = vunpack.c.l.b16 %v408
    %v2608 = vunpack.c.h.b16 %v408
    %v2609 = vunpack.c.l.b16 %v409
    %v2610 = vunpack.c.h.b16 %v409
    %v2611 = vunpack.c.l.b16 %v410
    %v2612 = vunpack.c.h.b16 %v410
    %v2613 = vunpack.c.l.b16 %v411
    %v2614 = vunpack.c.h.b16 %v411
    %v2615 = vunpack.c.l.b16 %v412
    %v2616 = vunpack.c.h.b16 %v412
    %v2617 = vunpack.c.l.b16 %v413
    %v2618 = vunpack.c.h.b16 %v413
    %v2619 = vunpack.c.l.b16 %v414
    %v2620 = vunpack.c.h.b16 %v414
    %v2621 = vunpack.c.l.b16 %v415
    %v2622 = vunpack.c.h.b16 %v415
    %v2623 = vunpack.c.l.b16 %v416
    %v2624 = vunpack.c.h.b16 %v416
    %v2625 = vunpack.c.l.b16 %v417
    %v2626 = vunpack.c.h.b16 %v417
    %v2627 = vunpack.c.l.b16 %v418
    %v2628 = vunpack.c.h.b16 %v418
    %v2629 = vunpack.c.l.b16 %v419
    %v2630 = vunpack.c.h.b16 %v419
    %v2631 = vunpack.c.l.b16 %v420
    %v2632 = vunpack.c.h.b16 %v420
    %v2633 = vunpack.c.l.b16 %v421
    %v2634 = vunpack.c.h.b16 %v421
    %v2635 = vunpack.c.l.b16 %v422
    %v2636 = vunpack.c.h.b16 %v422
    %v2637 = vunpack.c.l.b16 %v423
    %v2638 = vunpack.c.h.b16 %v423
    %v2639 = vunpack.c.l.b16 %v424
    %v2640 = vunpack.c.h.b16 %v424
    %v2641 = vunpack.c.l.b16 %v425
    %v2642 = vunpack.c.h.b16 %v425
    %v2643 = vunpack.c.l.b16 %v426
    %v2644 = vunpack.c.h.b16 %v426
    %v2645 = vunpack.c.l.b16 %v427
    %v2646 = vunpack.c.h.b16 %v427
    %v2647 = vunpack.c.l.b16 %v428
    %v2648 = vunpack.c.h.b16 %v428
    %v2649 = vunpack.c.l.b16 %v429
    %v2650 = vunpack.c.h.b16 %v429
    %v2651 = vunpack.c.l.b16 %v430
    %v2652 = vunpack.c.h.b16 %v430
    %v2653 = vunpack.c.l.b16 %v431
    %v2654 = vunpack.c.h.b16 %v431
    %v2655 = vunpack.c.l.b16 %v432
    %v2656 = vunpack.c.h.b16 %v432
    %v2657 = vunpack.c.l.b16 %v433
    %v2658 = vunpack.c.h.b16 %v433
    %v2659 = vunpack.c.l.b16 %v434
    %v2660 = vunpack.c.h.b16 %v434
    %v2661 = vunpack.c.l.b16 %v435
    %v2662 = vunpack.c.h.b16 %v435
    %v2663 = vunpack.c.l.b16 %v436
    %v2664 = vunpack.c.h.b16 %v436
    %v2665 = vunpack.c.l.b16 %v437
    %v2666 = vunpack.c.h.b16 %v437
    %v2667 = vunpack.c.l.b16 %v438
    %v2668 = vunpack.c.h.b16 %v438
    %v2669 = vunpack.c.l.b16 %v439
    %v2670 = vunpack.c.h.b16 %v439
    %v2671 = vunpack.c.l.b16 %v440
    %v2672 = vunpack.c.h.b16 %v440
    %v2673 = vunpack.c.l.b16 %v441
    %v2674 = vunpack.c.h.b16 %v441
    %v2675 = vunpack.c.l.b16 %v442
    %v2676 = vunpack.c.h.b16 %v442
    %v2677 = vunpack.c.l.b16 %v443
    %v2678 = vunpack.c.h.b16 %v443
    %v2679 = vunpack.c.l.b16 %v444
    %v2680 = vunpack.c.h.b16 %v444
    %v2681 = vunpack.c.l.b16 %v445
    %v2682 = vunpack.c.h.b16 %v445
    %v2683 = vunpack.c.l.b16 %v446
    %v2684 = vunpack.c.h.b16 %v446
    %v2685 = vunpack.c.l.b16 %v447
    %v2686 = vunpack.c.h.b16 %v447
    %v2687 = vunpack.c.l.b16 %v448
    %v2688 = vunpack.c.h.b16 %v448
    %v2689 = vunpack.c.l.b16 %v449
    %v2690 = vunpack.c.h.b16 %v449
    %v2691 = vunpack.c.l.b16 %v450
    %v2692 = vunpack.c.h.b16 %v450
    %v2693 = vunpack.c.l.b16 %v451
    %v2694 = vunpack.c.h.b16 %v451
    %v2695 = vunpack.c.l.b16 %v452
    %v2696 = vunpack.c.h.b16 %v452
    %v2697 = vunpack.c.l.b16 %v453
    %v2698 = vunpack.c.h.b16 %v453
    %v2699 = vunpack.c.l.b16 %v454
    %v2700 = vunpack.c.h.b16 %v454
    %v2701 = vunpack.c.l.b16 %v455
    %v2702 = vunpack.c.h.b16 %v455
    %v2703 = vunpack.c.l.b16 %v456
    %v2704 = vunpack.c.h.b16 %v456
    %v2705 = vunpack.c.l.b16 %v457
    %v2706 = vunpack.c.h.b16 %v457
    %v2707 = vunpack.c.l.b16 %v458
    %v2708 = vunpack.c.h.b16 %v458
    %v2709 = vunpack.c.l.b16 %v459
    %v2710 = vunpack.c.h.b16 %v459
    %v2711 = vunpack.c.l.b16 %v460
    %v2712 = vunpack.c.h.b16 %v460
    %v2713 = vunpack.c.l.b16 %v461
    %v2714 = vunpack.c.h.b16 %v461
    %v2715 = vunpack.c.l.b16 %v462
    %v2716 = vunpack.c.h.b16 %v462
    %v2717 = vunpack.c.l.b16 %v463
    %v2718 = vunpack.c.h.b16 %v463
    %v2719 = vunpack.c.l.b16 %v464
    %v2720 = vunpack.c.h.b16 %v464
    %v2721 = vunpack.c.l.b16 %v465
    %v2722 = vunpack.c.h.b16 %v465
    %v2723 = vunpack.c.l.b16 %v466
    %v2724 = vunpack.c.h.b16 %v466
    %v2725 = vunpack.c.l.b16 %v467
    %v2726 = vunpack.c.h.b16 %v467
    %v2727 = vunpack.c.l.b16 %v468
    %v2728 = vunpack.c.h.b16 %v468
    %v2729 = vunpack.c.l.b16 %v469
    %v2730 = vunpack.c.h.b16 %v469
    %v2731 = vunpack.c.l.b16 %v470
    %v2732 = vunpack.c.h.b16 %v470
    %v2733 = vunpack.c.l.b16 %v471
    %v2734 = vunpack.c.h.b16 %v471
    %v2735 = vunpack.c.l.b16 %v472
    %v2736 = vunpack.c.h.b16 %v472
    %v2737 = vunpack.c.l.b16 %v473
    %v2738 = vunpack.c.h.b16 %v473
    %v2739 = vunpack.c.l.b16 %v474
    %v2740 = vunpack.c.h.b16 %v474
    %v2741 = vunpack.c.l.b16 %v475
    %v2742 = vunpack.c.h.b16 %v475
    %v2743 = vunpack.c.l.b16 %v476
    %v2744 = vunpack.c.h.b16 %v476
    %v2745 = vunpack.c.l.b16 %v477
    %v2746 = vunpack.c.h.b16 %v477
    %v2747 = vunpack.c.l.b16 %v478
    %v2748 = vunpack.c.h.b16 %v478
    %v2749 = vunpack.c.l.b16 %v479
    %v2750 = vunpack.c.h.b16 %v479
    %v2751 = vunpack.c.l.b16 %v480
    %v2752 = vunpack.c.h.b16 %v480
    %v2753 = vunpack.c.l.b16 %v481
    %v2754 = vunpack.c.h.b16 %v481
    %v2755 = vunpack.c.l.b16 %v482
    %v2756 = vunpack.c.h.b16 %v482
    %v2757 = vunpack.c.l.b16 %v483
    %v2758 = vunpack.c.h.b16 %v483
    %v2759 = vunpack.c.l.b16 %v484
    %v2760 = vunpack.c.h.b16 %v484
    %v2761 = vunpack.c.l.b16 %v485
    %v2762 = vunpack.c.h.b16 %v485
    %v2763 = vunpack.c.l.b16 %v486
    %v2764 = vunpack.c.h.b16 %v486
    %v2765 = vunpack.c.l.b16 %v487
    %v2766 = vunpack.c.h.b16 %v487
    %v2767 = vunpack.c.l.b16 %v488
    %v2768 = vunpack.c.h.b16 %v488
    %v2769 = vunpack.c.l.b16 %v489
    %v2770 = vunpack.c.h.b16 %v489
    %v2771 = vunpack.c.l.b16 %v490
    %v2772 = vunpack.c.h.b16 %v490
    %v2773 = vunpack.c.l.b16 %v491
    %v2774 = vunpack.c.h.b16 %v491
    %v2775 = vunpack.c.l.b16 %v492
    %v2776 = vunpack.c.h.b16 %v492
    %v2777 = vunpack.c.l.b16 %v493
    %v2778 = vunpack.c.h.b16 %v493
    %v2779 = vunpack.c.l.b16 %v494
    %v2780 = vunpack.c.h.b16 %v494
    %v2781 = vunpack.c.l.b16 %v495
    %v2782 = vunpack.c.h.b16 %v495
    %v2783 = vunpack.c.l.b16 %v496
    %v2784 = vunpack.c.h.b16 %v496
    %v2785 = vunpack.c.l.b16 %v497
    %v2786 = vunpack.c.h.b16 %v497
    %v2787 = vunpack.c.l.b16 %v498
    %v2788 = vunpack.c.h.b16 %v498
    %v2789 = vunpack.c.l.b16 %v499
    %v2790 = vunpack.c.h.b16 %v499
    %v2791 = vunpack.c.l.b16 %v500
    %v2792 = vunpack.c.h.b16 %v500
    %v2793 = vunpack.c.l.b16 %v501
    %v2794 = vunpack.c.h.b16 %v501
    %v2795 = vunpack.c.l.b16 %v502
    %v2796 = vunpack.c.h.b16 %v502
    %v2797 = vunpack.c.l.b16 %v503
    %v2798 = vunpack.c.h.b16 %v503
    %v2799 = vunpack.c.l.b16 %v504
    %v2800 = vunpack.c.h.b16 %v504
    %v2801 = vunpack.c.l.b16 %v505
    %v2802 = vunpack.c.h.b16 %v505
    %v2803 = vunpack.c.l.b16 %v506
    %v2804 = vunpack.c.h.b16 %v506
    %v2805 = vunpack.c.l.b16 %v507
    %v2806 = vunpack.c.h.b16 %v507
    %v2807 = vunpack.c.l.b16 %v508
    %v2808 = vunpack.c.h.b16 %v508
    %v2809 = vunpack.c.l.b16 %v509
    %v2810 = vunpack.c.h.b16 %v509
    %v2811 = vunpack.c.l.b16 %v510
    %v2812 = vunpack.c.h.b16 %v510
    %v2813 = vunpack.c.l.b16 %v511
    %v2814 = vunpack.c.h.b16 %v511
    %v2815 = vunpack.c.l.b16 %v512
    %v2816 = vunpack.c.h.b16 %v512
    %v2817 = vunpack.c.l.b16 %v513
    %v2818 = vunpack.c.h.b16 %v513
    %v2819 = vunpack.c.l.b16 %v514
    %v2820 = vunpack.c.h.b16 %v514
    %v2821 = vunpack.c.l.b16 %v515
    %v2822 = vunpack.c.h.b16 %v515
    %v2823 = vunpack.c.l.b16 %v516
    %v2824 = vunpack.c.h.b16 %v516
    %v2825 = vunpack.c.l.b16 %v517
    %v2826 = vunpack.c.h.b16 %v517
    %v2827 = vunpack.c.l.b16 %v518
    %v2828 = vunpack.c.h.b16 %v518
    %v2829 = vunpack.c.l.b16 %v519
    %v2830 = vunpack.c.h.b16 %v519
    %v2831 = vunpack.c.l.b16 %v520
    %v2832 = vunpack.c.h.b16 %v520
    %v2833 = vunpack.c.l.b16 %v521
    %v2834 = vunpack.c.h.b16 %v521
    %v2835 = vunpack.c.l.b16 %v522
    %v2836 = vunpack.c.h.b16 %v522
    %v2837 = vunpack.c.l.b16 %v523
    %v2838 = vunpack.c.h.b16 %v523
    %v2839 = vunpack.c.l.b16 %v524
    %v2840 = vunpack.c.h.b16 %v524
    %v2841 = vunpack.c.l.b16 %v525
    %v2842 = vunpack.c.h.b16 %v525
    %v2843 = vunpack.c.l.b16 %v526
    %v2844 = vunpack.c.h.b16 %v526
    %v2845 = vunpack.c.l.b16 %v527
    %v2846 = vunpack.c.h.b16 %v527
    %v2847 = vunpack.c.l.b16 %v528
    %v2848 = vunpack.c.h.b16 %v528
    %v2849 = vunpack.c.l.b16 %v529
    %v2850 = vunpack.c.h.b16 %v529
    %v2851 = vunpack.c.l.b16 %v530
    %v2852 = vunpack.c.h.b16 %v530
    %v2853 = vunpack.c.l.b16 %v531
    %v2854 = vunpack.c.h.b16 %v531
    %v2855 = vunpack.c.l.b16 %v532
    %v2856 = vunpack.c.h.b16 %v532
    %v2857 = vunpack.c.l.b16 %v533
    %v2858 = vunpack.c.h.b16 %v533
    %v2859 = vunpack.c.l.b16 %v534
    %v2860 = vunpack.c.h.b16 %v534
    %v2861 = vunpack.c.l.b16 %v535
    %v2862 = vunpack.c.h.b16 %v535
    %v2863 = vunpack.c.l.b16 %v536
    %v2864 = vunpack.c.h.b16 %v536
    %v2865 = vunpack.c.l.b16 %v537
    %v2866 = vunpack.c.h.b16 %v537
    %v2867 = vunpack.c.l.b16 %v538
    %v2868 = vunpack.c.h.b16 %v538
    %v2869 = vunpack.c.l.b16 %v539
    %v2870 = vunpack.c.h.b16 %v539
    %v2871 = vunpack.c.l.b16 %v540
    %v2872 = vunpack.c.h.b16 %v540
    %v2873 = vunpack.c.l.b16 %v541
    %v2874 = vunpack.c.h.b16 %v541
    %v2875 = vunpack.c.l.b16 %v542
    %v2876 = vunpack.c.h.b16 %v542
    %v2877 = vunpack.c.l.b16 %v543
    %v2878 = vunpack.c.h.b16 %v543
    %v2879 = vunpack.c.l.b16 %v544
    %v2880 = vunpack.c.h.b16 %v544
    %v2881 = vunpack.c.l.b16 %v545
    %v2882 = vunpack.c.h.b16 %v545
    %v2883 = vunpack.c.l.b16 %v546
    %v2884 = vunpack.c.h.b16 %v546
    %v2885 = vunpack.c.l.b16 %v547
    %v2886 = vunpack.c.h.b16 %v547
    %v2887 = vunpack.c.l.b16 %v548
    %v2888 = vunpack.c.h.b16 %v548
    %v2889 = vunpack.c.l.b16 %v549
    %v2890 = vunpack.c.h.b16 %v549
    %v2891 = vunpack.c.l.b16 %v550
    %v2892 = vunpack.c.h.b16 %v550
    %v2893 = vunpack.c.l.b16 %v551
    %v2894 = vunpack.c.h.b16 %v551
    %v2895 = vunpack.c.l.b16 %v552
    %v2896 = vunpack.c.h.b16 %v552
    %v2897 = vunpack.c.l.b16 %v553
    %v2898 = vunpack.c.h.b16 %v553
    %v2899 = vunpack.c.l.b16 %v554
    %v2900 = vunpack.c.h.b16 %v554
    %v2901 = vunpack.c.l.b16 %v555
    %v2902 = vunpack.c.h.b16 %v555
    %v2903 = vunpack.c.l.b16 %v556
    %v2904 = vunpack.c.h.b16 %v556
    %v2905 = vunpack.c.l.b16 %v557
    %v2906 = vunpack.c.h.b16 %v557
    %v2907 = vunpack.c.l.b16 %v558
    %v2908 = vunpack.c.h.b16 %v558
    %v2909 = vunpack.c.l.b16 %v559
    %v2910 = vunpack.c.h.b16 %v559
    %v2911 = vunpack.c.l.b16 %v560
    %v2912 = vunpack.c.h.b16 %v560
    %v2913 = vunpack.c.l.b16 %v561
    %v2914 = vunpack.c.h.b16 %v561
    %v2915 = vunpack.c.l.b16 %v562
    %v2916 = vunpack.c.h.b16 %v562
    %v2917 = vunpack.c.l.b16 %v563
    %v2918 = vunpack.c.h.b16 %v563
    %v2919 = vunpack.c.l.b16 %v564
    %v2920 = vunpack.c.h.b16 %v564
    %v2921 = vunpack.c.l.b16 %v565
    %v2922 = vunpack.c.h.b16 %v565
    %v2923 = vunpack.c.l.b16 %v566
    %v2924 = vunpack.c.h.b16 %v566
    %v2925 = vunpack.c.l.b16 %v567
    %v2926 = vunpack.c.h.b16 %v567
    %v2927 = vunpack.c.l.b16 %v568
    %v2928 = vunpack.c.h.b16 %v568
    %v2929 = vunpack.c.l.b16 %v569
    %v2930 = vunpack.c.h.b16 %v569
    %v2931 = vunpack.c.l.b16 %v570
    %v2932 = vunpack.c.h.b16 %v570
    %v2933 = vunpack.c.l.b16 %v571
    %v2934 = vunpack.c.h.b16 %v571
    %v2935 = vunpack.c.l.b16 %v572
    %v2936 = vunpack.c.h.b16 %v572
    %v2937 = vunpack.c.l.b16 %v573
    %v2938 = vunpack.c.h.b16 %v573
    %v2939 = vunpack.c.l.b16 %v574
    %v2940 = vunpack.c.h.b16 %v574
    %v2941 = vunpack.c.l.b16 %v575
    %v2942 = vunpack.c.h.b16 %v575
    %v2943 = vunpack.c.l.b16 %v576
    %v2944 = vunpack.c.h.b16 %v576
    %v2945 = vunpack.c.l.b16 %v577
    %v2946 = vunpack.c.h.b16 %v577
    %v2947 = vunpack.c.l.b16 %v578
    %v2948 = vunpack.c.h.b16 %v578
    %v2949 = vunpack.c.l.b16 %v579
    %v2950 = vunpack.c.h.b16 %v579
    %v2951 = vunpack.c.l.b16 %v580
    %v2952 = vunpack.c.h.b16 %v580
    %v2953 = vunpack.c.l.b16 %v581
    %v2954 = vunpack.c.h.b16 %v581
    %v2955 = vunpack.c.l.b16 %v582
    %v2956 = vunpack.c.h.b16 %v582
    %v2957 = vunpack.c.l.b16 %v583
    %v2958 = vunpack.c.h.b16 %v583
    %v2959 = vunpack.c.l.b16 %v584
    %v2960 = vunpack.c.h.b16 %v584
    %v2961 = vunpack.c.l.b16 %v585
    %v2962 = vunpack.c.h.b16 %v585
    %v2963 = vunpack.c.l.b16 %v586
    %v2964 = vunpack.c.h.b16 %v586
    %v2965 = vunpack.c.l.b16 %v587
    %v2966 = vunpack.c.h.b16 %v587
    %v2967 = vunpack.c.l.b16 %v588
    %v2968 = vunpack.c.h.b16 %v588
    %v2969 = vunpack.c.l.b16 %v589
    %v2970 = vunpack.c.h.b16 %v589
    %v2971 = vunpack.c.l.b16 %v590
    %v2972 = vunpack.c.h.b16 %v590
    %v2973 = vunpack.c.l.b16 %v591
    %v2974 = vunpack.c.h.b16 %v591
    %v2975 = vunpack.c.l.b16 %v592
    %v2976 = vunpack.c.h.b16 %v592
    %v2977 = vunpack.c.l.b16 %v593
    %v2978 = vunpack.c.h.b16 %v593
    %v2979 = vunpack.c.l.b16 %v594
    %v2980 = vunpack.c.h.b16 %v594
    %v2981 = vunpack.c.l.b16 %v595
    %v2982 = vunpack.c.h.b16 %v595
    %v2983 = vunpack.c.l.b16 %v596
    %v2984 = vunpack.c.h.b16 %v596
    %v2985 = vunpack.c.l.b16 %v597
    %v2986 = vunpack.c.h.b16 %v597
    %v2987 = vunpack.c.l.b16 %v598
    %v2988 = vunpack.c.h.b16 %v598
    %v2989 = vunpack.c.l.b16 %v599
    %v2990 = vunpack.c.h.b16 %v599
    %v2991 = vunpack.c.l.b16 %v600
    %v2992 = vunpack.c.h.b16 %v600
    %v2993 = vunpack.c.l.b16 %v601
    %v2994 = vunpack.c.h.b16 %v601
    %v2995 = vunpack.c.l.b16 %v602
    %v2996 = vunpack.c.h.b16 %v602
    %v2997 = vunpack.c.l.b16 %v603
    %v2998 = vunpack.c.h.b16 %v603
    %v2999 = vunpack.c.l.b16 %v604
    %v3000 = vunpack.c.h.b16 %v604
    %v3001 = vunpack.c.l.b16 %v605
    %v3002 = vunpack.c.h.b16 %v605
    %v3003 = vunpack.c.l.b16 %v606
    %v3004 = vunpack.c.h.b16 %v606
    %v3005 = vunpack.c.l.b16 %v607
    %v3006 = vunpack.c.h.b16 %v607
    %v3007 = vunpack.c.l.b16 %v608
    %v3008 = vunpack.c.h.b16 %v608
    %v3009 = vunpack.c.l.b16 %v609
    %v3010 = vunpack.c.h.b16 %v609
    %v3011 = vunpack.c.l.b16 %v610
    %v3012 = vunpack.c.h.b16 %v610
    %v3013 = vunpack.c.l.b16 %v611
    %v3014 = vunpack.c.h.b16 %v611
    %v3015 = vunpack.c.l.b16 %v612
    %v3016 = vunpack.c.h.b16 %v612
    %v3017 = vunpack.c.l.b16 %v613
    %v3018 = vunpack.c.h.b16 %v613
    %v3019 = vunpack.c.l.b16 %v614
    %v3020 = vunpack.c.h.b16 %v614
    %v3021 = vunpack.c.l.b16 %v615
    %v3022 = vunpack.c.h.b16 %v615
    %v3023 = vunpack.c.l.b16 %v616
    %v3024 = vunpack.c.h.b16 %v616
    %v3025 = vunpack.c.l.b16 %v617
    %v3026 = vunpack.c.h.b16 %v617
    %v3027 = vunpack.c.l.b16 %v618
    %v3028 = vunpack.c.h.b16 %v618
    %v3029 = vunpack.c.l.b16 %v619
    %v3030 = vunpack.c.h.b16 %v619
    %v3031 = vunpack.c.l.b16 %v620
    %v3032 = vunpack.c.h.b16 %v620
    %v3033 = vunpack.c.l.b16 %v621
    %v3034 = vunpack.c.h.b16 %v621
    %v3035 = vunpack.c.l.b16 %v622
    %v3036 = vunpack.c.h.b16 %v622
    %v3037 = vunpack.c.l.b16 %v623
    %v3038 = vunpack.c.h.b16 %v623
    %v3039 = vunpack.c.l.b16 %v624
    %v3040 = vunpack.c.h.b16 %v624
    %v3041 = vunpack.c.l.b16 %v625
    %v3042 = vunpack.c.h.b16 %v625
    %v3043 = vunpack.c.l.b16 %v626
    %v3044 = vunpack.c.h.b16 %v626
    %v3045 = vunpack.c.l.b16 %v627
    %v3046 = vunpack.c.h.b16 %v627
    %v3047 = vunpack.c.l.b16 %v628
    %v3048 = vunpack.c.h.b16 %v628
    %v3049 = vunpack.c.l.b16 %v629
    %v3050 = vunpack.c.h.b16 %v629
    %v3051 = vunpack.c.l.b16 %v630
    %v3052 = vunpack.c.h.b16 %v630
    %v3053 = vunpack.c.l.b16 %v631
    %v3054 = vunpack.c.h.b16 %v631
    %v3055 = vunpack.c.l.b16 %v632
    %v3056 = vunpack.c.h.b16 %v632
    %v3057 = vunpack.c.l.b16 %v633
    %v3058 = vunpack.c.h.b16 %v633
    %v3059 = vunpack.c.l.b16 %v634
    %v3060 = vunpack.c.h.b16 %v634
    %v3061 = vunpack.c.l.b16 %v635
    %v3062 = vunpack.c.h.b16 %v635
    %v3063 = vunpack.c.l.b16 %v636
    %v3064 = vunpack.c.h.b16 %v636
    %v3065 = vunpack.c.l.b16 %v637
    %v3066 = vunpack.c.h.b16 %v637
    %v3067 = vunpack.c.l.b16 %v638
    %v3068 = vunpack.c.h.b16 %v638
    %v3069 = vunpack.c.l.b16 %v639
    %v3070 = vunpack.c.h.b16 %v639
    %v3071 = vunpack.c.l.b16 %v640
    %v3072 = vunpack.c.h.b16 %v640
    %v3073 = vunpack.c.l.b16 %v641
    %v3074 = vunpack.c.h.b16 %v641
    %v3075 = vunpack.c.l.b16 %v642
    %v3076 = vunpack.c.h.b16 %v642
    %v3077 = vunpack.c.l.b16 %v643
    %v3078 = vunpack.c.h.b16 %v643
    %v3079 = vunpack.c.l.b16 %v644
    %v3080 = vunpack.c.h.b16 %v644
    %v3081 = vunpack.c.l.b16 %v645
    %v3082 = vunpack.c.h.b16 %v645
    %v3083 = vunpack.c.l.b16 %v646
    %v3084 = vunpack.c.h.b16 %v646
    %v3085 = vunpack.c.l.b16 %v647
    %v3086 = vunpack.c.h.b16 %v647
    %v3087 = vunpack.c.l.b16 %v648
    %v3088 = vunpack.c.h.b16 %v648
    %v3089 = vunpack.c.l.b16 %v649
    %v3090 = vunpack.c.h.b16 %v649
    %v3091 = vunpack.c.l.b16 %v650
    %v3092 = vunpack.c.h.b16 %v650
    %v3093 = vunpack.c.l.b16 %v651
    %v3094 = vunpack.c.h.b16 %v651
    %v3095 = vunpack.c.l.b16 %v652
    %v3096 = vunpack.c.h.b16 %v652
    %v3097 = vunpack.c.l.b16 %v653
    %v3098 = vunpack.c.h.b16 %v653
    %v3099 = vunpack.c.l.b16 %v654
    %v3100 = vunpack.c.h.b16 %v654
    %v3101 = vunpack.c.l.b16 %v655
    %v3102 = vunpack.c.h.b16 %v655
    %v3103 = vunpack.c.l.b16 %v656
    %v3104 = vunpack.c.h.b16 %v656
    %v3105 = vunpack.c.l.b16 %v657
    %v3106 = vunpack.c.h.b16 %v657
    %v3107 = vunpack.c.l.b16 %v658
    %v3108 = vunpack.c.h.b16 %v658
    %v3109 = vunpack.c.l.b16 %v659
    %v3110 = vunpack.c.h.b16 %v659
    %v3111 = vunpack.c.l.b16 %v660
    %v3112 = vunpack.c.h.b16 %v660
    %v3113 = vunpack.c.l.b16 %v661
    %v3114 = vunpack.c.h.b16 %v661
    %v3115 = vunpack.c.l.b16 %v662
    %v3116 = vunpack.c.h.b16 %v662
    %v3117 = vunpack.c.l.b16 %v663
    %v3118 = vunpack.c.h.b16 %v663
    %v3119 = vunpack.c.l.b16 %v664
    %v3120 = vunpack.c.h.b16 %v664
    %v3121 = vunpack.c.l.b16 %v665
    %v3122 = vunpack.c.h.b16 %v665
    %v3123 = vunpack.c.l.b16 %v666
    %v3124 = vunpack.c.h.b16 %v666
    %v3125 = vunpack.c.l.b16 %v667
    %v3126 = vunpack.c.h.b16 %v667
    %v3127 = vunpack.c.l.b16 %v668
    %v3128 = vunpack.c.h.b16 %v668
    %v3129 = vunpack.c.l.b16 %v669
    %v3130 = vunpack.c.h.b16 %v669
    %v3131 = vunpack.c.l.b16 %v670
    %v3132 = vunpack.c.h.b16 %v670
    %v3133 = vunpack.c.l.b16 %v671
    %v3134 = vunpack.c.h.b16 %v671
    %v3135 = vunpack.c.l.b16 %v672
    %v3136 = vunpack.c.h.b16 %v672
    %v3137 = vunpack.c.l.b16 %v673
    %v3138 = vunpack.c.h.b16 %v673
    %v3139 = vunpack.c.l.b16 %v674
    %v3140 = vunpack.c.h.b16 %v674
    %v3141 = vunpack.c.l.b16 %v675
    %v3142 = vunpack.c.h.b16 %v675
    %v3143 = vunpack.c.l.b16 %v676
    %v3144 = vunpack.c.h.b16 %v676
    %v3145 = vunpack.c.l.b16 %v677
    %v3146 = vunpack.c.h.b16 %v677
    %v3147 = vunpack.c.l.b16 %v678
    %v3148 = vunpack.c.h.b16 %v678
    %v3149 = vunpack.c.l.b16 %v679
    %v3150 = vunpack.c.h.b16 %v679
    %v3151 = vunpack.c.l.b16 %v680
    %v3152 = vunpack.c.h.b16 %v680
    %v3153 = vunpack.c.l.b16 %v681
    %v3154 = vunpack.c.h.b16 %v681
    %v3155 = vunpack.c.l.b16 %v682
    %v3156 = vunpack.c.h.b16 %v682
    %v3157 = vunpack.c.l.b16 %v683
    %v3158 = vunpack.c.h.b16 %v683
    %v3159 = vunpack.c.l.b16 %v684
    %v3160 = vunpack.c.h.b16 %v684
    %v3161 = vunpack.c.l.b16 %v685
    %v3162 = vunpack.c.h.b16 %v685
    %v3163 = vunpack.c.l.b16 %v686
    %v3164 = vunpack.c.h.b16 %v686
    %v3165 = vunpack.c.l.b16 %v687
    %v3166 = vunpack.c.h.b16 %v687
    %v3167 = vunpack.c.l.b16 %v688
    %v3168 = vunpack.c.h.b16 %v688
    %v3169 = vunpack.c.l.b16 %v689
    %v3170 = vunpack.c.h.b16 %v689
    %v3171 = vunpack.c.l.b16 %v690
    %v3172 = vunpack.c.h.b16 %v690
    %v3173 = vunpack.c.l.b16 %v691
    %v3174 = vunpack.c.h.b16 %v691
    %v3175 = vunpack.c.l.b16 %v692
    %v3176 = vunpack.c.h.b16 %v692
    %v3177 = vunpack.c.l.b16 %v693
    %v3178 = vunpack.c.h.b16 %v693
    %v3179 = vunpack.c.l.b16 %v694
    %v3180 = vunpack.c.h.b16 %v694
    %v3181 = vunpack.c.l.b16 %v695
    %v3182 = vunpack.c.h.b16 %v695
    %v3183 = vunpack.c.l.b16 %v696
    %v3184 = vunpack.c.h.b16 %v696
    %v3185 = vunpack.c.l.b16 %v697
    %v3186 = vunpack.c.h.b16 %v697
    %v3187 = vunpack.c.l.b16 %v698
    %v3188 = vunpack.c.h.b16 %v698
    %v3189 = vunpack.c.l.b16 %v699
    %v3190 = vunpack.c.h.b16 %v699
    %v3191 = vunpack.c.l.b16 %v700
    %v3192 = vunpack.c.h.b16 %v700
    %v3193 = vunpack.c.l.b16 %v701
    %v3194 = vunpack.c.h.b16 %v701
    %v3195 = vunpack.c.l.b16 %v702
    %v3196 = vunpack.c.h.b16 %v702
    %v3197 = vunpack.c.l.b16 %v703
    %v3198 = vunpack.c.h.b16 %v703
    %v3199 = vunpack.c.l.b16 %v704
    %v3200 = vunpack.c.h.b16 %v704
    %v3201 = vunpack.c.l.b16 %v705
    %v3202 = vunpack.c.h.b16 %v705
    %v3203 = vunpack.c.l.b16 %v706
    %v3204 = vunpack.c.h.b16 %v706
    %v3205 = vunpack.c.l.b16 %v707
    %v3206 = vunpack.c.h.b16 %v707
    %v3207 = vunpack.c.l.b16 %v708
    %v3208 = vunpack.c.h.b16 %v708
    %v3209 = vunpack.c.l.b16 %v709
    %v3210 = vunpack.c.h.b16 %v709
    %v3211 = vunpack.c.l.b16 %v710
    %v3212 = vunpack.c.h.b16 %v710
    %v3213 = vunpack.c.l.b16 %v711
    %v3214 = vunpack.c.h.b16 %v711
    %v3215 = vunpack.c.l.b16 %v712
    %v3216 = vunpack.c.h.b16 %v712
    %v3217 = vunpack.c.l.b16 %v713
    %v3218 = vunpack.c.h.b16 %v713
    %v3219 = vunpack.c.l.b16 %v714
    %v3220 = vunpack.c.h.b16 %v714
    %v3221 = vunpack.c.l.b16 %v715
    %v3222 = vunpack.c.h.b16 %v715
    %v3223 = vunpack.c.l.b16 %v716
    %v3224 = vunpack.c.h.b16 %v716
    %v3225 = vunpack.c.l.b16 %v717
    %v3226 = vunpack.c.h.b16 %v717
    %v3227 = vunpack.c.l.b16 %v718
    %v3228 = vunpack.c.h.b16 %v718
    %v3229 = vunpack.c.l.b16 %v719
    %v3230 = vunpack.c.h.b16 %v719
    %v3231 = vunpack.c.l.b16 %v720
    %v3232 = vunpack.c.h.b16 %v720
    %v3233 = vunpack.c.l.b16 %v721
    %v3234 = vunpack.c.h.b16 %v721
    %v3235 = vunpack.c.l.b16 %v722
    %v3236 = vunpack.c.h.b16 %v722
    %v3237 = vunpack.c.l.b16 %v723
    %v3238 = vunpack.c.h.b16 %v723
    %v3239 = vunpack.c.l.b16 %v724
    %v3240 = vunpack.c.h.b16 %v724
    %v3241 = vunpack.c.l.b16 %v725
    %v3242 = vunpack.c.h.b16 %v725
    %v3243 = vunpack.c.l.b16 %v726
    %v3244 = vunpack.c.h.b16 %v726
    %v3245 = vunpack.c.l.b16 %v727
    %v3246 = vunpack.c.h.b16 %v727
    %v3247 = vunpack.c.l.b16 %v728
    %v3248 = vunpack.c.h.b16 %v728
    %v3249 = vunpack.c.l.b16 %v729
    %v3250 = vunpack.c.h.b16 %v729
    %v3251 = vunpack.c.l.b16 %v730
    %v3252 = vunpack.c.h.b16 %v730
    %v3253 = vunpack.c.l.b16 %v731
    %v3254 = vunpack.c.h.b16 %v731
    %v3255 = vunpack.c.l.b16 %v732
    %v3256 = vunpack.c.h.b16 %v732
    %v3257 = vunpack.c.l.b16 %v733
    %v3258 = vunpack.c.h.b16 %v733
    %v3259 = vunpack.c.l.b16 %v734
    %v3260 = vunpack.c.h.b16 %v734
    %v3261 = vunpack.c.l.b16 %v735
    %v3262 = vunpack.c.h.b16 %v735
    %v3263 = vunpack.c.l.b16 %v736
    %v3264 = vunpack.c.h.b16 %v736
    %v3265 = vunpack.c.l.b16 %v737
    %v3266 = vunpack.c.h.b16 %v737
    %v3267 = vunpack.c.l.b16 %v738
    %v3268 = vunpack.c.h.b16 %v738
    %v3269 = vunpack.c.l.b16 %v739
    %v3270 = vunpack.c.h.b16 %v739
    %v3271 = vunpack.c.l.b16 %v740
    %v3272 = vunpack.c.h.b16 %v740
    %v3273 = vunpack.c.l.b16 %v741
    %v3274 = vunpack.c.h.b16 %v741
    %v3275 = vunpack.c.l.b16 %v742
    %v3276 = vunpack.c.h.b16 %v742
    %v3277 = vunpack.c.l.b16 %v743
    %v3278 = vunpack.c.h.b16 %v743
    %v3279 = vunpack.c.l.b16 %v744
    %v3280 = vunpack.c.h.b16 %v744
    %v3281 = vunpack.c.l.b16 %v745
    %v3282 = vunpack.c.h.b16 %v745
    %v3283 = vunpack.c.l.b16 %v746
    %v3284 = vunpack.c.h.b16 %v746
    %v3285 = vunpack.c.l.b16 %v747
    %v3286 = vunpack.c.h.b16 %v747
    %v3287 = vunpack.c.l.b16 %v748
    %v3288 = vunpack.c.h.b16 %v748
    %v3289 = vunpack.c.l.b16 %v749
    %v3290 = vunpack.c.h.b16 %v749
    %v3291 = vunpack.c.l.b16 %v750
    %v3292 = vunpack.c.h.b16 %v750
    %v3293 = vunpack.c.l.b16 %v751
    %v3294 = vunpack.c.h.b16 %v751
    %v3295 = vunpack.c.l.b16 %v752
    %v3296 = vunpack.c.h.b16 %v752
    %v3297 = vunpack.c.l.b16 %v753
    %v3298 = vunpack.c.h.b16 %v753
    %v3299 = vunpack.c.l.b16 %v754
    %v3300 = vunpack.c.h.b16 %v754
    %v3301 = vunpack.c.l.b16 %v755
    %v3302 = vunpack.c.h.b16 %v755
    %v3303 = vunpack.c.l.b16 %v756
    %v3304 = vunpack.c.h.b16 %v756
    %v3305 = vunpack.c.l.b16 %v757
    %v3306 = vunpack.c.h.b16 %v757
    %v3307 = vunpack.c.l.b16 %v758
    %v3308 = vunpack.c.h.b16 %v758
    %v3309 = vunpack.c.l.b16 %v759
    %v3310 = vunpack.c.h.b16 %v759
    %v3311 = vunpack.c.l.b16 %v760
    %v3312 = vunpack.c.h.b16 %v760
    %v3313 = vunpack.c.l.b16 %v761
    %v3314 = vunpack.c.h.b16 %v761
    %v3315 = vunpack.c.l.b16 %v762
    %v3316 = vunpack.c.h.b16 %v762
    %v3317 = vunpack.c.l.b16 %v763
    %v3318 = vunpack.c.h.b16 %v763
    %v3319 = vunpack.c.l.b16 %v764
    %v3320 = vunpack.c.h.b16 %v764
    %v3321 = vunpack.c.l.b16 %v765
    %v3322 = vunpack.c.h.b16 %v765
    %v3323 = vunpack.c.l.b16 %v766
    %v3324 = vunpack.c.h.b16 %v766
    %v3325 = vunpack.c.l.b16 %v767
    %v3326 = vunpack.c.h.b16 %v767
    %v3327 = vunpack.c.l.b16 %v768
    %v3328 = vunpack.c.h.b16 %v768
    %v3329 = vunpack.c.l.b16 %v769
    %v3330 = vunpack.c.h.b16 %v769
    %v3331 = vunpack.c.l.b16 %v770
    %v3332 = vunpack.c.h.b16 %v770
    %v3333 = vunpack.c.l.b16 %v771
    %v3334 = vunpack.c.h.b16 %v771
    %v3335 = vunpack.c.l.b16 %v772
    %v3336 = vunpack.c.h.b16 %v772
    %v3337 = vunpack.c.l.b16 %v773
    %v3338 = vunpack.c.h.b16 %v773
    %v3339 = vunpack.c.l.b16 %v774
    %v3340 = vunpack.c.h.b16 %v774
    %v3341 = vunpack.c.l.b16 %v775
    %v3342 = vunpack.c.h.b16 %v775
    %v3343 = vunpack.c.l.b16 %v776
    %v3344 = vunpack.c.h.b16 %v776
    %v3345 = vunpack.c.l.b16 %v777
    %v3346 = vunpack.c.h.b16 %v777
    %v3347 = vunpack.c.l.b16 %v778
    %v3348 = vunpack.c.h.b16 %v778
    %v3349 = vunpack.c.l.b16 %v779
    %v3350 = vunpack.c.h.b16 %v779
    %v3351 = vunpack.c.l.b16 %v780
    %v3352 = vunpack.c.h.b16 %v780
    %v3353 = vunpack.c.l.b16 %v781
    %v3354 = vunpack.c.h.b16 %v781
    %v3355 = vunpack.c.l.b16 %v782
    %v3356 = vunpack.c.h.b16 %v782
    %v3357 = vunpack.c.l.b16 %v783
    %v3358 = vunpack.c.h.b16 %v783
    %v3359 = vunpack.c.l.b16 %v784
    %v3360 = vunpack.c.h.b16 %v784
    %v3361 = vunpack.c.l.b16 %v785
    %v3362 = vunpack.c.h.b16 %v785
    %v3363 = vunpack.c.l.b16 %v786
    %v3364 = vunpack.c.h.b16 %v786
    %v3365 = vunpack.c.l.b16 %v787
    %v3366 = vunpack.c.h.b16 %v787
    %v3367 = vunpack.c.l.b16 %v788
    %v3368 = vunpack.c.h.b16 %v788
    %v3369 = vunpack.c.l.b16 %v789
    %v3370 = vunpack.c.h.b16 %v789
    %v3371 = vunpack.c.l.b16 %v790
    %v3372 = vunpack.c.h.b16 %v790
    %v3373 = vunpack.c.l.b16 %v791
    %v3374 = vunpack.c.h.b16 %v791
    %v3375 = vunpack.c.l.b16 %v792
    %v3376 = vunpack.c.h.b16 %v792
    %v3377 = vunpack.c.l.b16 %v793
    %v3378 = vunpack.c.h.b16 %v793
    %v3379 = vunpack.c.l.b16 %v794
    %v3380 = vunpack.c.h.b16 %v794
    %v3381 = vunpack.c.l.b16 %v795
    %v3382 = vunpack.c.h.b16 %v795
    %v3383 = vunpack.c.l.b16 %v796
    %v3384 = vunpack.c.h.b16 %v796
    %v3385 = vunpack.c.l.b16 %v797
    %v3386 = vunpack.c.h.b16 %v797
    %v3387 = vunpack.c.l.b16 %v798
    %v3388 = vunpack.c.h.b16 %v798
    %v3389 = vunpack.c.l.b16 %v799
    %v3390 = vunpack.c.h.b16 %v799
    %v3391 = vunpack.c.l.b16 %v800
    %v3392 = vunpack.c.h.b16 %v800
    %v3393 = vunpack.c.l.b16 %v801
    %v3394 = vunpack.c.h.b16 %v801
    %v3395 = vunpack.c.l.b16 %v802
    %v3396 = vunpack.c.h.b16 %v802
    %v3397 = vunpack.c.l.b16 %v803
    %v3398 = vunpack.c.h.b16 %v803
    %v3399 = vunpack.c.l.b16 %v804
    %v3400 = vunpack.c.h.b16 %v804
    %v3401 = vunpack.c.l.b16 %v805
    %v3402 = vunpack.c.h.b16 %v805
    %v3403 = vunpack.c.l.b16 %v806
    %v3404 = vunpack.c.h.b16 %v806
    %v3405 = vunpack.c.l.b16 %v807
    %v3406 = vunpack.c.h.b16 %v807
    %v3407 = vunpack.c.l.b16 %v808
    %v3408 = vunpack.c.h.b16 %v808
    %v3409 = vunpack.c.l.b16 %v809
    %v3410 = vunpack.c.h.b16 %v809
    %v3411 = vunpack.c.l.b16 %v810
    %v3412 = vunpack.c.h.b16 %v810
    %v3413 = vunpack.c.l.b16 %v811
    %v3414 = vunpack.c.h.b16 %v811
    %v3415 = vunpack.c.l.b16 %v812
    %v3416 = vunpack.c.h.b16 %v812
    %v3417 = vunpack.c.l.b16 %v813
    %v3418 = vunpack.c.h.b16 %v813
    %v3419 = vunpack.c.l.b16 %v814
    %v3420 = vunpack.c.h.b16 %v814
    %v3421 = vunpack.c.l.b16 %v815
    %v3422 = vunpack.c.h.b16 %v815
    %v3423 = vunpack.c.l.b16 %v816
    %v3424 = vunpack.c.h.b16 %v816
    %v3425 = vunpack.c.l.b16 %v817
    %v3426 = vunpack.c.h.b16 %v817
    %v3427 = vunpack.c.l.b16 %v818
    %v3428 = vunpack.c.h.b16 %v818
    %v3429 = vunpack.c.l.b16 %v819
    %v3430 = vunpack.c.h.b16 %v819
    %v3431 = vunpack.c.l.b16 %v820
    %v3432 = vunpack.c.h.b16 %v820
    %v3433 = vunpack.c.l.b16 %v821
    %v3434 = vunpack.c.h.b16 %v821
    %v3435 = vunpack.c.l.b16 %v822
    %v3436 = vunpack.c.h.b16 %v822
    %v3437 = vunpack.c.l.b16 %v823
    %v3438 = vunpack.c.h.b16 %v823
    %v3439 = vunpack.c.l.b16 %v824
    %v3440 = vunpack.c.h.b16 %v824
    %v3441 = vunpack.c.l.b16 %v825
    %v3442 = vunpack.c.h.b16 %v825
    %v3443 = vunpack.c.l.b16 %v826
    %v3444 = vunpack.c.h.b16 %v826
    %v3445 = vunpack.c.l.b16 %v827
    %v3446 = vunpack.c.h.b16 %v827
    %v3447 = vunpack.c.l.b16 %v828
    %v3448 = vunpack.c.h.b16 %v828
    %v3449 = vunpack.c.l.b16 %v829
    %v3450 = vunpack.c.h.b16 %v829
    %v3451 = vunpack.c.l.b16 %v830
    %v3452 = vunpack.c.h.b16 %v830
    %v3453 = vunpack.c.l.b16 %v831
    %v3454 = vunpack.c.h.b16 %v831
    %v3455 = vunpack.c.l.b16 %v832
    %v3456 = vunpack.c.h.b16 %v832
    %v3457 = vunpack.c.l.b16 %v833
    %v3458 = vunpack.c.h.b16 %v833
    %v3459 = vunpack.c.l.b16 %v834
    %v3460 = vunpack.c.h.b16 %v834
    %v3461 = vunpack.c.l.b16 %v835
    %v3462 = vunpack.c.h.b16 %v835
    %v3463 = vunpack.c.l.b16 %v836
    %v3464 = vunpack.c.h.b16 %v836
    %v3465 = vunpack.c.l.b16 %v837
    %v3466 = vunpack.c.h.b16 %v837
    %v3467 = vunpack.c.l.b16 %v838
    %v3468 = vunpack.c.h.b16 %v838
    %v3469 = vunpack.c.l.b16 %v839
    %v3470 = vunpack.c.h.b16 %v839
    %v3471 = vunpack.c.l.b16 %v840
    %v3472 = vunpack.c.h.b16 %v840
    %v3473 = vunpack.c.l.b16 %v841
    %v3474 = vunpack.c.h.b16 %v841
    %v3475 = vunpack.c.l.b16 %v842
    %v3476 = vunpack.c.h.b16 %v842
    %v3477 = vunpack.c.l.b16 %v843
    %v3478 = vunpack.c.h.b16 %v843
    %v3479 = vunpack.c.l.b16 %v844
    %v3480 = vunpack.c.h.b16 %v844
    %v3481 = vunpack.c.l.b16 %v845
    %v3482 = vunpack.c.h.b16 %v845
    %v3483 = vunpack.c.l.b16 %v846
    %v3484 = vunpack.c.h.b16 %v846
    %v3485 = vunpack.c.l.b16 %v847
    %v3486 = vunpack.c.h.b16 %v847
    %v3487 = vunpack.c.l.b16 %v848
    %v3488 = vunpack.c.h.b16 %v848
    %v3489 = vunpack.c.l.b16 %v849
    %v3490 = vunpack.c.h.b16 %v849
    %v3491 = vunpack.c.l.b16 %v850
    %v3492 = vunpack.c.h.b16 %v850
    %v3493 = vunpack.c.l.b16 %v851
    %v3494 = vunpack.c.h.b16 %v851
    %v3495 = vunpack.c.l.b16 %v852
    %v3496 = vunpack.c.h.b16 %v852
    %v3497 = vunpack.c.l.b16 %v853
    %v3498 = vunpack.c.h.b16 %v853
    %v3499 = vunpack.c.l.b16 %v854
    %v3500 = vunpack.c.h.b16 %v854
    %v3501 = vunpack.c.l.b16 %v855
    %v3502 = vunpack.c.h.b16 %v855
    %v3503 = vunpack.c.l.b16 %v856
    %v3504 = vunpack.c.h.b16 %v856
    %v3505 = vunpack.c.l.b16 %v857
    %v3506 = vunpack.c.h.b16 %v857
    %v3507 = vunpack.c.l.b16 %v858
    %v3508 = vunpack.c.h.b16 %v858
    %v3509 = vunpack.c.l.b16 %v859
    %v3510 = vunpack.c.h.b16 %v859
    %v3511 = vunpack.c.l.b16 %v860
    %v3512 = vunpack.c.h.b16 %v860
    %v3513 = vunpack.c.l.b16 %v861
    %v3514 = vunpack.c.h.b16 %v861
    %v3515 = vunpack.c.l.b16 %v862
    %v3516 = vunpack.c.h.b16 %v862
    %v3517 = vunpack.c.l.b16 %v863
    %v3518 = vunpack.c.h.b16 %v863
    %v3519 = vunpack.c.l.b16 %v864
    %v3520 = vunpack.c.h.b16 %v864
    %v3521 = vunpack.c.l.b16 %v865
    %v3522 = vunpack.c.h.b16 %v865
    %v3523 = vunpack.c.l.b16 %v866
    %v3524 = vunpack.c.h.b16 %v866
    %v3525 = vunpack.c.l.b16 %v867
    %v3526 = vunpack.c.h.b16 %v867
    %v3527 = vunpack.c.l.b16 %v868
    %v3528 = vunpack.c.h.b16 %v868
    %v3529 = vunpack.c.l.b16 %v869
    %v3530 = vunpack.c.h.b16 %v869
    %v3531 = vunpack.c.l.b16 %v870
    %v3532 = vunpack.c.h.b16 %v870
    %v3533 = vunpack.c.l.b16 %v871
    %v3534 = vunpack.c.h.b16 %v871
    %v3535 = vunpack.c.l.b16 %v872
    %v3536 = vunpack.c.h.b16 %v872
    %v3537 = vunpack.c.l.b16 %v873
    %v3538 = vunpack.c.h.b16 %v873
    %v3539 = vunpack.c.l.b16 %v874
    %v3540 = vunpack.c.h.b16 %v874
    %v3541 = vunpack.c.l.b16 %v875
    %v3542 = vunpack.c.h.b16 %v875
    %v3543 = vunpack.c.l.b16 %v876
    %v3544 = vunpack.c.h.b16 %v876
    %v3545 = vunpack.c.l.b16 %v877
    %v3546 = vunpack.c.h.b16 %v877
    %v3547 = vunpack.c.l.b16 %v878
    %v3548 = vunpack.c.h.b16 %v878
    %v3549 = vunpack.c.l.b16 %v879
    %v3550 = vunpack.c.h.b16 %v879
    %v3551 = vunpack.c.l.b16 %v880
    %v3552 = vunpack.c.h.b16 %v880
    %v3553 = vunpack.c.l.b16 %v881
    %v3554 = vunpack.c.h.b16 %v881
    %v3555 = vunpack.c.l.b16 %v882
    %v3556 = vunpack.c.h.b16 %v882
    %v3557 = vunpack.c.l.b16 %v883
    %v3558 = vunpack.c.h.b16 %v883
    %v3559 = vunpack.c.l.b16 %v884
    %v3560 = vunpack.c.h.b16 %v884
    %v3561 = vunpack.c.l.b16 %v885
    %v3562 = vunpack.c.h.b16 %v885
    %v3563 = vunpack.c.l.b16 %v886
    %v3564 = vunpack.c.h.b16 %v886
    %v3565 = vunpack.c.l.b16 %v887
    %v3566 = vunpack.c.h.b16 %v887
    %v3567 = vunpack.c.l.b16 %v888
    %v3568 = vunpack.c.h.b16 %v888
    %v3569 = vunpack.c.l.b16 %v889
    %v3570 = vunpack.c.h.b16 %v889
    %v3571 = vunpack.c.l.b16 %v890
    %v3572 = vunpack.c.h.b16 %v890
    %v3573 = vunpack.c.l.b16 %v891
    %v3574 = vunpack.c.h.b16 %v891
    %v3575 = vunpack.c.l.b16 %v892
    %v3576 = vunpack.c.h.b16 %v892
    %v3577 = vunpack.c.l.b16 %v893
    %v3578 = vunpack.c.h.b16 %v893
    %v3579 = vunpack.c.l.b16 %v894
    %v3580 = vunpack.c.h.b16 %v894
    %v3581 = vunpack.c.l.b16 %v895
    %v3582 = vunpack.c.h.b16 %v895
    %v3583 = vunpack.c.l.b16 %v896
    %v3584 = vunpack.c.h.b16 %v896
    %v3585 = vunpack.c.l.b16 %v897
    %v3586 = vunpack.c.h.b16 %v897
    %v3587 = vunpack.c.l.b16 %v898
    %v3588 = vunpack.c.h.b16 %v898
    %v3589 = vunpack.c.l.b16 %v899
    %v3590 = vunpack.c.h.b16 %v899
    %v3591 = vunpack.c.l.b16 %v900
    %v3592 = vunpack.c.h.b16 %v900
    %v3593 = vunpack.c.l.b16 %v901
    %v3594 = vunpack.c.h.b16 %v901
    %v3595 = vunpack.c.l.b16 %v902
    %v3596 = vunpack.c.h.b16 %v902
    %v3597 = vunpack.c.l.b16 %v903
    %v3598 = vunpack.c.h.b16 %v903
    %v3599 = vunpack.c.l.b16 %v904
    %v3600 = vunpack.c.h.b16 %v904
    %v3601 = vunpack.c.l.b16 %v905
    %v3602 = vunpack.c.h.b16 %v905
    %v3603 = vunpack.c.l.b16 %v906
    %v3604 = vunpack.c.h.b16 %v906
    %v3605 = vunpack.c.l.b16 %v907
    %v3606 = vunpack.c.h.b16 %v907
    %v3607 = vunpack.c.l.b16 %v908
    %v3608 = vunpack.c.h.b16 %v908
    %v3609 = vunpack.c.l.b16 %v909
    %v3610 = vunpack.c.h.b16 %v909
    %v3611 = vunpack.c.l.b16 %v910
    %v3612 = vunpack.c.h.b16 %v910
    %v3613 = vunpack.c.l.b16 %v911
    %v3614 = vunpack.c.h.b16 %v911
    %v3615 = vunpack.c.l.b16 %v912
    %v3616 = vunpack.c.h.b16 %v912
    %v3617 = vunpack.c.l.b16 %v913
    %v3618 = vunpack.c.h.b16 %v913
    %v3619 = vunpack.c.l.b16 %v914
    %v3620 = vunpack.c.h.b16 %v914
    %v3621 = vunpack.c.l.b16 %v915
    %v3622 = vunpack.c.h.b16 %v915
    %v3623 = vunpack.c.l.b16 %v916
    %v3624 = vunpack.c.h.b16 %v916
    %v3625 = vunpack.c.l.b16 %v917
    %v3626 = vunpack.c.h.b16 %v917
    %v3627 = vunpack.c.l.b16 %v918
    %v3628 = vunpack.c.h.b16 %v918
    %v3629 = vunpack.c.l.b16 %v919
    %v3630 = vunpack.c.h.b16 %v919
    %v3631 = vunpack.c.l.b16 %v920
    %v3632 = vunpack.c.h.b16 %v920
    %v3633 = vunpack.c.l.b16 %v921
    %v3634 = vunpack.c.h.b16 %v921
    %v3635 = vunpack.c.l.b16 %v922
    %v3636 = vunpack.c.h.b16 %v922
    %v3637 = vunpack.c.l.b16 %v923
    %v3638 = vunpack.c.h.b16 %v923
    %v3639 = vunpack.c.l.b16 %v924
    %v3640 = vunpack.c.h.b16 %v924
    %v3641 = vunpack.c.l.b16 %v925
    %v3642 = vunpack.c.h.b16 %v925
    %v3643 = vunpack.c.l.b16 %v926
    %v3644 = vunpack.c.h.b16 %v926
    %v3645 = vunpack.c.l.b16 %v927
    %v3646 = vunpack.c.h.b16 %v927
    %v3647 = vunpack.c.l.b16 %v928
    %v3648 = vunpack.c.h.b16 %v928
    %v3649 = vunpack.c.l.b16 %v929
    %v3650 = vunpack.c.h.b16 %v929
    %v3651 = vunpack.c.l.b16 %v930
    %v3652 = vunpack.c.h.b16 %v930
    %v3653 = vunpack.c.l.b16 %v931
    %v3654 = vunpack.c.h.b16 %v931
    %v3655 = vunpack.c.l.b16 %v932
    %v3656 = vunpack.c.h.b16 %v932
    %v3657 = vunpack.c.l.b16 %v933
    %v3658 = vunpack.c.h.b16 %v933
    %v3659 = vunpack.c.l.b16 %v934
    %v3660 = vunpack.c.h.b16 %v934
    %v3661 = vunpack.c.l.b16 %v935
    %v3662 = vunpack.c.h.b16 %v935
    %v3663 = vunpack.c.l.b16 %v936
    %v3664 = vunpack.c.h.b16 %v936
    %v3665 = vunpack.c.l.b16 %v937
    %v3666 = vunpack.c.h.b16 %v937
    %v3667 = vunpack.c.l.b16 %v938
    %v3668 = vunpack.c.h.b16 %v938
    %v3669 = vunpack.c.l.b16 %v939
    %v3670 = vunpack.c.h.b16 %v939
    %v3671 = vunpack.c.l.b16 %v940
    %v3672 = vunpack.c.h.b16 %v940
    %v3673 = vunpack.c.l.b16 %v941
    %v3674 = vunpack.c.h.b16 %v941
    %v3675 = vunpack.c.l.b16 %v942
    %v3676 = vunpack.c.h.b16 %v942
    %v3677 = vunpack.c.l.b16 %v943
    %v3678 = vunpack.c.h.b16 %v943
    %v3679 = vunpack.c.l.b16 %v944
    %v3680 = vunpack.c.h.b16 %v944
    %v3681 = vunpack.c.l.b16 %v945
    %v3682 = vunpack.c.h.b16 %v945
    %v3683 = vunpack.c.l.b16 %v946
    %v3684 = vunpack.c.h.b16 %v946
    %v3685 = vunpack.c.l.b16 %v947
    %v3686 = vunpack.c.h.b16 %v947
    %v3687 = vunpack.c.l.b16 %v948
    %v3688 = vunpack.c.h.b16 %v948
    %v3689 = vunpack.c.l.b16 %v949
    %v3690 = vunpack.c.h.b16 %v949
    %v3691 = vunpack.c.l.b16 %v950
    %v3692 = vunpack.c.h.b16 %v950
    %v3693 = vunpack.c.l.b16 %v951
    %v3694 = vunpack.c.h.b16 %v951
    %v3695 = vunpack.c.l.b16 %v952
    %v3696 = vunpack.c.h.b16 %v952
    %v3697 = vunpack.c.l.b16 %v953
    %v3698 = vunpack.c.h.b16 %v953
    %v3699 = vunpack.c.l.b16 %v954
    %v3700 = vunpack.c.h.b16 %v954
    %v3701 = vunpack.c.l.b16 %v955
    %v3702 = vunpack.c.h.b16 %v955
    %v3703 = vunpack.c.l.b16 %v956
    %v3704 = vunpack.c.h.b16 %v956
    %v3705 = vunpack.c.l.b16 %v957
    %v3706 = vunpack.c.h.b16 %v957
    %v3707 = vunpack.c.l.b16 %v958
    %v3708 = vunpack.c.h.b16 %v958
    %v3709 = vunpack.c.l.b16 %v959
    %v3710 = vunpack.c.h.b16 %v959
    %v3711 = vunpack.c.l.b16 %v960
    %v3712 = vunpack.c.h.b16 %v960
    %v3713 = vunpack.c.l.b16 %v961
    %v3714 = vunpack.c.h.b16 %v961
    %v3715 = vunpack.c.l.b16 %v962
    %v3716 = vunpack.c.h.b16 %v962
    %v3717 = vunpack.c.l.b16 %v963
    %v3718 = vunpack.c.h.b16 %v963
    %v3719 = vunpack.c.l.b16 %v964
    %v3720 = vunpack.c.h.b16 %v964
    %v3721 = vunpack.c.l.b16 %v965
    %v3722 = vunpack.c.h.b16 %v965
    %v3723 = vunpack.c.l.b16 %v966
    %v3724 = vunpack.c.h.b16 %v966
    %v3725 = vunpack.c.l.b16 %v967
    %v3726 = vunpack.c.h.b16 %v967
    %v3727 = vunpack.c.l.b16 %v968
    %v3728 = vunpack.c.h.b16 %v968
    %v3729 = vunpack.c.l.b16 %v969
    %v3730 = vunpack.c.h.b16 %v969
    %v3731 = vunpack.c.l.b16 %v970
    %v3732 = vunpack.c.h.b16 %v970
    %v3733 = vunpack.c.l.b16 %v971
    %v3734 = vunpack.c.h.b16 %v971
    %v3735 = vunpack.c.l.b16 %v972
    %v3736 = vunpack.c.h.b16 %v972
    %v3737 = vunpack.c.l.b16 %v973
    %v3738 = vunpack.c.h.b16 %v973
    %v3739 = vunpack.c.l.b16 %v974
    %v3740 = vunpack.c.h.b16 %v974
    %v3741 = vunpack.c.l.b16 %v975
    %v3742 = vunpack.c.h.b16 %v975
    %v3743 = vunpack.c.l.b16 %v976
    %v3744 = vunpack.c.h.b16 %v976
    %v3745 = vunpack.c.l.b16 %v977
    %v3746 = vunpack.c.h.b16 %v977
    %v3747 = vunpack.c.l.b16 %v978
    %v3748 = vunpack.c.h.b16 %v978
    %v3749 = vunpack.c.l.b16 %v979
    %v3750 = vunpack.c.h.b16 %v979
    %v3751 = vunpack.c.l.b16 %v980
    %v3752 = vunpack.c.h.b16 %v980
    %v3753 = vunpack.c.l.b16 %v981
    %v3754 = vunpack.c.h.b16 %v981
    %v3755 = vunpack.c.l.b16 %v982
    %v3756 = vunpack.c.h.b16 %v982
    %v3757 = vunpack.c.l.b16 %v983
    %v3758 = vunpack.c.h.b16 %v983
    %v3759 = vunpack.c.l.b16 %v984
    %v3760 = vunpack.c.h.b16 %v984
    %v3761 = vunpack.c.l.b16 %v985
    %v3762 = vunpack.c.h.b16 %v985
    %v3763 = vunpack.c.l.b16 %v986
    %v3764 = vunpack.c.h.b16 %v986
    %v3765 = vunpack.c.l.b16 %v987
    %v3766 = vunpack.c.h.b16 %v987
    %v3767 = vunpack.c.l.b16 %v988
    %v3768 = vunpack.c.h.b16 %v988
    %v3769 = vunpack.c.l.b16 %v989
    %v3770 = vunpack.c.h.b16 %v989
    %v3771 = vunpack.c.l.b16 %v990
    %v3772 = vunpack.c.h.b16 %v990
    %v3773 = vunpack.c.l.b16 %v991
    %v3774 = vunpack.c.h.b16 %v991
    %v3775 = vunpack.c.l.b16 %v992
    %v3776 = vunpack.c.h.b16 %v992
    %v3777 = vunpack.c.l.b16 %v993
    %v3778 = vunpack.c.h.b16 %v993
    %v3779 = vunpack.c.l.b16 %v994
    %v3780 = vunpack.c.h.b16 %v994
    %v3781 = vunpack.c.l.b16 %v995
    %v3782 = vunpack.c.h.b16 %v995
    %v3783 = vunpack.c.l.b16 %v996
    %v3784 = vunpack.c.h.b16 %v996
    %v3785 = vunpack.c.l.b16 %v997
    %v3786 = vunpack.c.h.b16 %v997
    %v3787 = vunpack.c.l.b16 %v998
    %v3788 = vunpack.c.h.b16 %v998
    %v3789 = vunpack.c.l.b16 %v999
    %v3790 = vunpack.c.h.b16 %v999
    %v3791 = vunpack.c.l.b16 %v1000
    %v3792 = vunpack.c.h.b16 %v1000
    %v3793 = vunpack.c.l.b16 %v1001
    %v3794 = vunpack.c.h.b16 %v1001
    %v3795 = vunpack.c.l.b16 %v1002
    %v3796 = vunpack.c.h.b16 %v1002
    %v3797 = vunpack.c.l.b16 %v1003
    %v3798 = vunpack.c.h.b16 %v1003
    %v3799 = vunpack.c.l.b16 %v1004
    %v3800 = vunpack.c.h.b16 %v1004
    %v3801 = vunpack.c.l.b16 %v1005
    %v3802 = vunpack.c.h.b16 %v1005
    %v3803 = vunpack.c.l.b16 %v1006
    %v3804 = vunpack.c.h.b16 %v1006
    %v3805 = vunpack.c.l.b16 %v1007
    %v3806 = vunpack.c.h.b16 %v1007
    %v3807 = vunpack.c.l.b16 %v1008
    %v3808 = vunpack.c.h.b16 %v1008
    %v3809 = vunpack.c.l.b16 %v1009
    %v3810 = vunpack.c.h.b16 %v1009
    %v3811 = vunpack.c.l.b16 %v1010
    %v3812 = vunpack.c.h.b16 %v1010
    %v3813 = vunpack.c.l.b16 %v1011
    %v3814 = vunpack.c.h.b16 %v1011
    %v3815 = vunpack.c.l.b16 %v1012
    %v3816 = vunpack.c.h.b16 %v1012
    %v3817 = vunpack.c.l.b16 %v1013
    %v3818 = vunpack.c.h.b16 %v1013
    %v3819 = vunpack.c.l.b16 %v1014
    %v3820 = vunpack.c.h.b16 %v1014
    %v3821 = vunpack.c.l.b16 %v1015
    %v3822 = vunpack.c.h.b16 %v1015
    %v3823 = vunpack.c.l.b16 %v1016
    %v3824 = vunpack.c.h.b16 %v1016
    %v3825 = vunpack.c.l.b16 %v1017
    %v3826 = vunpack.c.h.b16 %v1017
    %v3827 = vunpack.c.l.b16 %v1018
    %v3828 = vunpack.c.h.b16 %v1018
    %v3829 = vunpack.c.l.b16 %v1019
    %v3830 = vunpack.c.h.b16 %v1019
    %v3831 = vunpack.c.l.b16 %v1020
    %v3832 = vunpack.c.h.b16 %v1020
    %v3833 = vunpack.c.l.b16 %v1021
    %v3834 = vunpack.c.h.b16 %v1021
    %v3835 = vunpack.c.l.b16 %v1022
    %v3836 = vunpack.c.h.b16 %v1022
    %v3837 = vunpack.c.l.b16 %v1023
    %v3838 = vunpack.c.h.b16 %v1023
    %v3839 = vunpack.c.l.b16 %v1024
    %v3840 = vunpack.c.h.b16 %v1024
    %v3841 = vunpack.c.l.b16 %v1025
    %v3842 = vunpack.c.h.b16 %v1025
    %v3843 = vunpack.c.l.b16 %v1026
    %v3844 = vunpack.c.h.b16 %v1026
    %v3845 = vunpack.c.l.b16 %v1027
    %v3846 = vunpack.c.h.b16 %v1027
    %v3847 = vunpack.c.l.b16 %v1028
    %v3848 = vunpack.c.h.b16 %v1028
    %v3849 = vunpack.c.l.b16 %v1029
    %v3850 = vunpack.c.h.b16 %v1029
    %v3851 = vunpack.c.l.b16 %v1030
    %v3852 = vunpack.c.h.b16 %v1030
    %v3853 = vunpack.c.l.b16 %v1031
    %v3854 = vunpack.c.h.b16 %v1031
    %v3855 = vunpack.c.l.b16 %v1032
    %v3856 = vunpack.c.h.b16 %v1032
    %v3857 = vunpack.c.l.b16 %v1033
    %v3858 = vunpack.c.h.b16 %v1033
    %v3859 = vunpack.c.l.b16 %v1034
    %v3860 = vunpack.c.h.b16 %v1034
    %v3861 = vunpack.c.l.b16 %v1035
    %v3862 = vunpack.c.h.b16 %v1035
    %v3863 = vunpack.c.l.b16 %v1036
    %v3864 = vunpack.c.h.b16 %v1036
    %v3865 = vunpack.c.l.b16 %v1037
    %v3866 = vunpack.c.h.b16 %v1037
    %v3867 = vunpack.c.l.b16 %v1038
    %v3868 = vunpack.c.h.b16 %v1038
    %v3869 = vunpack.c.l.b16 %v1039
    %v3870 = vunpack.c.h.b16 %v1039
    %v3871 = vunpack.c.l.b16 %v1040
    %v3872 = vunpack.c.h.b16 %v1040
    %v3873 = vunpack.c.l.b16 %v1041
    %v3874 = vunpack.c.h.b16 %v1041
    %v3875 = vunpack.c.l.b16 %v1042
    %v3876 = vunpack.c.h.b16 %v1042
    %v3877 = vunpack.c.l.b16 %v1043
    %v3878 = vunpack.c.h.b16 %v1043
    %v3879 = vunpack.c.l.b16 %v1044
    %v3880 = vunpack.c.h.b16 %v1044
    %v3881 = vunpack.c.l.b16 %v1045
    %v3882 = vunpack.c.h.b16 %v1045
    %v3883 = vunpack.c.l.b16 %v1046
    %v3884 = vunpack.c.h.b16 %v1046
    %v3885 = vunpack.c.l.b16 %v1047
    %v3886 = vunpack.c.h.b16 %v1047
    %v3887 = vunpack.c.l.b16 %v1048
    %v3888 = vunpack.c.h.b16 %v1048
    %v3889 = vunpack.c.l.b16 %v1049
    %v3890 = vunpack.c.h.b16 %v1049
    %v3891 = vunpack.c.l.b16 %v1050
    %v3892 = vunpack.c.h.b16 %v1050
    %v3893 = vunpack.c.l.b16 %v1051
    %v3894 = vunpack.c.h.b16 %v1051
    %v3895 = vunpack.c.l.b16 %v1052
    %v3896 = vunpack.c.h.b16 %v1052
    %v3897 = vunpack.c.l.b16 %v1053
    %v3898 = vunpack.c.h.b16 %v1053
    %v3899 = vunpack.c.l.b16 %v1054
    %v3900 = vunpack.c.h.b16 %v1054
    %v3901 = vunpack.c.l.b16 %v1055
    %v3902 = vunpack.c.h.b16 %v1055
    %v3903 = vunpack.c.l.b16 %v1056
    %v3904 = vunpack.c.h.b16 %v1056
    %v3905 = vunpack.c.l.b16 %v1057
    %v3906 = vunpack.c.h.b16 %v1057
    %v3907 = vunpack.c.l.b16 %v1058
    %v3908 = vunpack.c.h.b16 %v1058
    %v3909 = vunpack.c.l.b16 %v1059
    %v3910 = vunpack.c.h.b16 %v1059
    %v3911 = vunpack.c.l.b16 %v1060
    %v3912 = vunpack.c.h.b16 %v1060
    %v3913 = vunpack.c.l.b16 %v1061
    %v3914 = vunpack.c.h.b16 %v1061
    %v3915 = vunpack.c.l.b16 %v1062
    %v3916 = vunpack.c.h.b16 %v1062
    %v3917 = vunpack.c.l.b16 %v1063
    %v3918 = vunpack.c.h.b16 %v1063
    %v3919 = vunpack.c.l.b16 %v1064
    %v3920 = vunpack.c.h.b16 %v1064
    %v3921 = vunpack.c.l.b16 %v1065
    %v3922 = vunpack.c.h.b16 %v1065
    %v3923 = vunpack.c.l.b16 %v1066
    %v3924 = vunpack.c.h.b16 %v1066
    %v3925 = vunpack.c.l.b16 %v1067
    %v3926 = vunpack.c.h.b16 %v1067
    %v3927 = vunpack.c.l.b16 %v1068
    %v3928 = vunpack.c.h.b16 %v1068
    %v3929 = vunpack.c.l.b16 %v1069
    %v3930 = vunpack.c.h.b16 %v1069
    %v3931 = vunpack.c.l.b16 %v1070
    %v3932 = vunpack.c.h.b16 %v1070
    %v3933 = vunpack.c.l.b16 %v1071
    %v3934 = vunpack.c.h.b16 %v1071
    %v3935 = vunpack.c.l.b16 %v1072
    %v3936 = vunpack.c.h.b16 %v1072
    %v3937 = vunpack.c.l.b16 %v1073
    %v3938 = vunpack.c.h.b16 %v1073
    %v3939 = vunpack.c.l.b16 %v1074
    %v3940 = vunpack.c.h.b16 %v1074
    %v3941 = vunpack.c.l.b16 %v1075
    %v3942 = vunpack.c.h.b16 %v1075
    %v3943 = vunpack.c.l.b16 %v1076
    %v3944 = vunpack.c.h.b16 %v1076
    %v3945 = vunpack.c.l.b16 %v1077
    %v3946 = vunpack.c.h.b16 %v1077
    %v3947 = vunpack.c.l.b16 %v1078
    %v3948 = vunpack.c.h.b16 %v1078
    %v3949 = vunpack.c.l.b16 %v1079
    %v3950 = vunpack.c.h.b16 %v1079
    %v3951 = vunpack.c.l.b16 %v1080
    %v3952 = vunpack.c.h.b16 %v1080
    %v3953 = vunpack.c.l.b16 %v1081
    %v3954 = vunpack.c.h.b16 %v1081
    %v3955 = vunpack.c.l.b16 %v1082
    %v3956 = vunpack.c.h.b16 %v1082
    %v3957 = vunpack.c.l.b16 %v1083
    %v3958 = vunpack.c.h.b16 %v1083
    %v3959 = vunpack.c.l.b16 %v1084
    %v3960 = vunpack.c.h.b16 %v1084
    %v3961 = vunpack.c.l.b16 %v1085
    %v3962 = vunpack.c.h.b16 %v1085
    %v3963 = vunpack.c.l.b16 %v1086
    %v3964 = vunpack.c.h.b16 %v1086
    %v3965 = vunpack.c.l.b16 %v1087
    %v3966 = vunpack.c.h.b16 %v1087
    %v3967 = vunpack.c.l.b16 %v1088
    %v3968 = vunpack.c.h.b16 %v1088
    %v3969 = vunpack.c.l.b16 %v1089
    %v3970 = vunpack.c.h.b16 %v1089
    %v3971 = vunpack.c.l.b16 %v1090
    %v3972 = vunpack.c.h.b16 %v1090
    %v3973 = vunpack.c.l.b16 %v1091
    %v3974 = vunpack.c.h.b16 %v1091
    %v3975 = vunpack.c.l.b16 %v1092
    %v3976 = vunpack.c.h.b16 %v1092
    %v3977 = vunpack.c.l.b16 %v1093
    %v3978 = vunpack.c.h.b16 %v1093
    %v3979 = vunpack.c.l.b16 %v1094
    %v3980 = vunpack.c.h.b16 %v1094
    %v3981 = vunpack.c.l.b16 %v1095
    %v3982 = vunpack.c.h.b16 %v1095
    %v3983 = vunpack.c.l.b16 %v1096
    %v3984 = vunpack.c.h.b16 %v1096
    %v3985 = vunpack.c.l.b16 %v1097
    %v3986 = vunpack.c.h.b16 %v1097
    %v3987 = vunpack.c.l.b16 %v1098
    %v3988 = vunpack.c.h.b16 %v1098
    %v3989 = vunpack.c.l.b16 %v1099
    %v3990 = vunpack.c.h.b16 %v1099
    %v3991 = vunpack.c.l.b16 %v1100
    %v3992 = vunpack.c.h.b16 %v1100
    %v3993 = vunpack.c.l.b16 %v1101
    %v3994 = vunpack.c.h.b16 %v1101
    %v3995 = vunpack.c.l.b16 %v1102
    %v3996 = vunpack.c.h.b16 %v1102
    %v3997 = vunpack.c.l.b16 %v1103
    %v3998 = vunpack.c.h.b16 %v1103
    %v3999 = vunpack.c.l.b16 %v1104
    %v4000 = vunpack.c.h.b16 %v1104
    %v4001 = vunpack.c.l.b16 %v1105
    %v4002 = vunpack.c.h.b16 %v1105
    %v4003 = vunpack.c.l.b16 %v1106
    %v4004 = vunpack.c.h.b16 %v1106
    %v4005 = vunpack.c.l.b16 %v1107
    %v4006 = vunpack.c.h.b16 %v1107
    %v4007 = vunpack.c.l.b16 %v1108
    %v4008 = vunpack.c.h.b16 %v1108
    %v4009 = vunpack.c.l.b16 %v1109
    %v4010 = vunpack.c.h.b16 %v1109
    %v4011 = vunpack.c.l.b16 %v1110
    %v4012 = vunpack.c.h.b16 %v1110
    %v4013 = vpack.c.b16 %v2097, %v2093
    %v4014 = vpack.c.b16 %v2098, %v2094
    %v4015 = vpack.c.b16 %v2099, %v2095
    %v4016 = vpack.c.b16 %v2100, %v2096
    %v4017 = vpack.c.b16 %v2105, %v2101
    %v4018 = vpack.c.b16 %v2106, %v2102
    %v4019 = vpack.c.b16 %v2107, %v2103
    %v4020 = vpack.c.b16 %v2108, %v2104
    %v4021 = vpack.c.b16 %v2113, %v2109
    %v4022 = vpack.c.b16 %v2114, %v2110
    %v4023 = vpack.c.b16 %v2115, %v2111
    %v4024 = vpack.c.b16 %v2116, %v2112
    %v4025 = vpack.c.b16 %v2121, %v2117
    %v4026 = vpack.c.b16 %v2122, %v2118
    %v4027 = vpack.c.b16 %v2123, %v2119
    %v4028 = vpack.c.b16 %v2124, %v2120
    %v4029 = vpack.c.b16 %v2129, %v2125
    %v4030 = vpack.c.b16 %v2130, %v2126
    %v4031 = vpack.c.b16 %v2131, %v2127
    %v4032 = vpack.c.b16 %v2132, %v2128
    %v4033 = vpack.c.b16 %v2137, %v2133
    %v4034 = vpack.c.b16 %v2138, %v2134
    %v4035 = vpack.c.b16 %v2139, %v2135
    %v4036 = vpack.c.b16 %v2140, %v2136
    %v4037 = vpack.c.b16 %v2145, %v2141
    %v4038 = vpack.c.b16 %v2146, %v2142
    %v4039 = vpack.c.b16 %v2147, %v2143
    %v4040 = vpack.c.b16 %v2148, %v2144
    %v4041 = vpack.c.b16 %v2153, %v2149
    %v4042 = vpack.c.b16 %v2154, %v2150
    %v4043 = vpack.c.b16 %v2155, %v2151
    %v4044 = vpack.c.b16 %v2156, %v2152
    %v4045 = vpack.c.b16 %v2161, %v2157
    %v4046 = vpack.c.b16 %v2162, %v2158
    %v4047 = vpack.c.b16 %v2163, %v2159
    %v4048 = vpack.c.b16 %v2164, %v2160
    %v4049 = vpack.c.b16 %v2169, %v2165
    %v4050 = vpack.c.b16 %v2170, %v2166
    %v4051 = vpack.c.b16 %v2171, %v2167
    %v4052 = vpack.c.b16 %v2172, %v2168
    %v4053 = vpack.c.b16 %v2177, %v2173
    %v4054 = vpack.c.b16 %v2178, %v2174
    %v4055 = vpack.c.b16 %v2179, %v2175
    %v4056 = vpack.c.b16 %v2180, %v2176
    %v4057 = vpack.c.b16 %v2185, %v2181
    %v4058 = vpack.c.b16 %v2186, %v2182
    %v4059 = vpack.c.b16 %v2187, %v2183
    %v4060 = vpack.c.b16 %v2188, %v2184
    %v4061 = vpack.c.b16 %v2193, %v2189
    %v4062 = vpack.c.b16 %v2194, %v2190
    %v4063 = vpack.c.b16 %v2195, %v2191
    %v4064 = vpack.c.b16 %v2196, %v2192
    %v4065 = vpack.c.b16 %v2201, %v2197
    %v4066 = vpack.c.b16 %v2202, %v2198
    %v4067 = vpack.c.b16 %v2203, %v2199
    %v4068 = vpack.c.b16 %v2204, %v2200
    %v4069 = vpack.c.b16 %v2209, %v2205
    %v4070 = vpack.c.b16 %v2210, %v2206
    %v4071 = vpack.c.b16 %v2211, %v2207
    %v4072 = vpack.c.b16 %v2212, %v2208
    %v4073 = vpack.c.b16 %v2217, %v2213
    %v4074 = vpack.c.b16 %v2218, %v2214
    %v4075 = vpack.c.b16 %v2219, %v2215
    %v4076 = vpack.c.b16 %v2220, %v2216
    %v4077 = vpack.c.b16 %v2225, %v2221
    %v4078 = vpack.c.b16 %v2226, %v2222
    %v4079 = vpack.c.b16 %v2227, %v2223
    %v4080 = vpack.c.b16 %v2228, %v2224
    %v4081 = vpack.c.b16 %v2233, %v2229
    %v4082 = vpack.c.b16 %v2234, %v2230
    %v4083 = vpack.c.b16 %v2235, %v2231
    %v4084 = vpack.c.b16 %v2236, %v2232
    %v4085 = vpack.c.b16 %v2241, %v2237
    %v4086 = vpack.c.b16 %v2242, %v2238
    %v4087 = vpack.c.b16 %v2243, %v2239
    %v4088 = vpack.c.b16 %v2244, %v2240
    %v4089 = vpack.c.b16 %v2249, %v2245
    %v4090 = vpack.c.b16 %v2250, %v2246
    %v4091 = vpack.c.b16 %v2251, %v2247
    %v4092 = vpack.c.b16 %v2252, %v2248
    %v4093 = vpack.c.b16 %v2257, %v2253
    %v4094 = vpack.c.b16 %v2258, %v2254
    %v4095 = vpack.c.b16 %v2259, %v2255
    %v4096 = vpack.c.b16 %v2260, %v2256
    %v4097 = vpack.c.b16 %v2265, %v2261
    %v4098 = vpack.c.b16 %v2266, %v2262
    %v4099 = vpack.c.b16 %v2267, %v2263
    %v4100 = vpack.c.b16 %v2268, %v2264
    %v4101 = vpack.c.b16 %v2273, %v2269
    %v4102 = vpack.c.b16 %v2274, %v2270
    %v4103 = vpack.c.b16 %v2275, %v2271
    %v4104 = vpack.c.b16 %v2276, %v2272
    %v4105 = vpack.c.b16 %v2281, %v2277
    %v4106 = vpack.c.b16 %v2282, %v2278
    %v4107 = vpack.c.b16 %v2283, %v2279
    %v4108 = vpack.c.b16 %v2284, %v2280
    %v4109 = vpack.c.b16 %v2289, %v2285
    %v4110 = vpack.c.b16 %v2290, %v2286
    %v4111 = vpack.c.b16 %v2291, %v2287
    %v4112 = vpack.c.b16 %v2292, %v2288
    %v4113 = vpack.c.b16 %v2297, %v2293
    %v4114 = vpack.c.b16 %v2298, %v2294
    %v4115 = vpack.c.b16 %v2299, %v2295
    %v4116 = vpack.c.b16 %v2300, %v2296
    %v4117 = vpack.c.b16 %v2305, %v2301
    %v4118 = vpack.c.b16 %v2306, %v2302
    %v4119 = vpack.c.b16 %v2307, %v2303
    %v4120 = vpack.c.b16 %v2308, %v2304
    %v4121 = vpack.c.b16 %v2313, %v2309
    %v4122 = vpack.c.b16 %v2314, %v2310
    %v4123 = vpack.c.b16 %v2315, %v2311
    %v4124 = vpack.c.b16 %v2316, %v2312
    %v4125 = vpack.c.b16 %v2321, %v2317
    %v4126 = vpack.c.b16 %v2322, %v2318
    %v4127 = vpack.c.b16 %v2323, %v2319
    %v4128 = vpack.c.b16 %v2324, %v2320
    %v4129 = vpack.c.b16 %v2329, %v2325
    %v4130 = vpack.c.b16 %v2330, %v2326
    %v4131 = vpack.c.b16 %v2331, %v2327
    %v4132 = vpack.c.b16 %v2332, %v2328
    %v4133 = vpack.c.b16 %v2337, %v2333
    %v4134 = vpack.c.b16 %v2338, %v2334
    %v4135 = vpack.c.b16 %v2339, %v2335
    %v4136 = vpack.c.b16 %v2340, %v2336
    %v4137 = vpack.c.b16 %v2345, %v2341
    %v4138 = vpack.c.b16 %v2346, %v2342
    %v4139 = vpack.c.b16 %v2347, %v2343
    %v4140 = vpack.c.b16 %v2348, %v2344
    %v4141 = vpack.c.b16 %v2353, %v2349
    %v4142 = vpack.c.b16 %v2354, %v2350
    %v4143 = vpack.c.b16 %v2355, %v2351
    %v4144 = vpack.c.b16 %v2356, %v2352
    %v4145 = vpack.c.b16 %v2361, %v2357
    %v4146 = vpack.c.b16 %v2362, %v2358
    %v4147 = vpack.c.b16 %v2363, %v2359
    %v4148 = vpack.c.b16 %v2364, %v2360
    %v4149 = vpack.c.b16 %v2369, %v2365
    %v4150 = vpack.c.b16 %v2370, %v2366
    %v4151 = vpack.c.b16 %v2371, %v2367
    %v4152 = vpack.c.b16 %v2372, %v2368
    %v4153 = vpack.c.b16 %v2377, %v2373
    %v4154 = vpack.c.b16 %v2378, %v2374
    %v4155 = vpack.c.b16 %v2379, %v2375
    %v4156 = vpack.c.b16 %v2380, %v2376
    %v4157 = vpack.c.b16 %v2385, %v2381
    %v4158 = vpack.c.b16 %v2386, %v2382
    %v4159 = vpack.c.b16 %v2387, %v2383
    %v4160 = vpack.c.b16 %v2388, %v2384
    %v4161 = vpack.c.b16 %v2393, %v2389
    %v4162 = vpack.c.b16 %v2394, %v2390
    %v4163 = vpack.c.b16 %v2395, %v2391
    %v4164 = vpack.c.b16 %v2396, %v2392
    %v4165 = vpack.c.b16 %v2401, %v2397
    %v4166 = vpack.c.b16 %v2402, %v2398
    %v4167 = vpack.c.b16 %v2403, %v2399
    %v4168 = vpack.c.b16 %v2404, %v2400
    %v4169 = vpack.c.b16 %v2409, %v2405
    %v4170 = vpack.c.b16 %v2410, %v2406
    %v4171 = vpack.c.b16 %v2411, %v2407
    %v4172 = vpack.c.b16 %v2412, %v2408
    %v4173 = vpack.c.b16 %v2417, %v2413
    %v4174 = vpack.c.b16 %v2418, %v2414
    %v4175 = vpack.c.b16 %v2419, %v2415
    %v4176 = vpack.c.b16 %v2420, %v2416
    %v4177 = vpack.c.b16 %v2425, %v2421
    %v4178 = vpack.c.b16 %v2426, %v2422
    %v4179 = vpack.c.b16 %v2427, %v2423
    %v4180 = vpack.c.b16 %v2428, %v2424
    %v4181 = vpack.c.b16 %v2433, %v2429
    %v4182 = vpack.c.b16 %v2434, %v2430
    %v4183 = vpack.c.b16 %v2435, %v2431
    %v4184 = vpack.c.b16 %v2436, %v2432
    %v4185 = vpack.c.b16 %v2441, %v2437
    %v4186 = vpack.c.b16 %v2442, %v2438
    %v4187 = vpack.c.b16 %v2443, %v2439
    %v4188 = vpack.c.b16 %v2444, %v2440
    %v4189 = vpack.c.b16 %v2449, %v2445
    %v4190 = vpack.c.b16 %v2450, %v2446
    %v4191 = vpack.c.b16 %v2451, %v2447
    %v4192 = vpack.c.b16 %v2452, %v2448
    %v4193 = vpack.c.b16 %v2457, %v2453
    %v4194 = vpack.c.b16 %v2458, %v2454
    %v4195 = vpack.c.b16 %v2459, %v2455
    %v4196 = vpack.c.b16 %v2460, %v2456
    %v4197 = vpack.c.b16 %v2465, %v2461
    %v4198 = vpack.c.b16 %v2466, %v2462
    %v4199 = vpack.c.b16 %v2467, %v2463
    %v4200 = vpack.c.b16 %v2468, %v2464
    %v4201 = vpack.c.b16 %v2473, %v2469
    %v4202 = vpack.c.b16 %v2474, %v2470
    %v4203 = vpack.c.b16 %v2475, %v2471
    %v4204 = vpack.c.b16 %v2476, %v2472
    %v4205 = vpack.c.b16 %v2481, %v2477
    %v4206 = vpack.c.b16 %v2482, %v2478
    %v4207 = vpack.c.b16 %v2483, %v2479
    %v4208 = vpack.c.b16 %v2484, %v2480
    %v4209 = vpack.c.b16 %v2489, %v2485
    %v4210 = vpack.c.b16 %v2490, %v2486
    %v4211 = vpack.c.b16 %v2491, %v2487
    %v4212 = vpack.c.b16 %v2492, %v2488
    %v4213 = vpack.c.b16 %v2497, %v2493
    %v4214 = vpack.c.b16 %v2498, %v2494
    %v4215 = vpack.c.b16 %v2499, %v2495
    %v4216 = vpack.c.b16 %v2500, %v2496
    %v4217 = vpack.c.b16 %v2505, %v2501
    %v4218 = vpack.c.b16 %v2506, %v2502
    %v4219 = vpack.c.b16 %v2507, %v2503
    %v4220 = vpack.c.b16 %v2508, %v2504
    %v4221 = vpack.c.b16 %v2513, %v2509
    %v4222 = vpack.c.b16 %v2514, %v2510
    %v4223 = vpack.c.b16 %v2515, %v2511
    %v4224 = vpack.c.b16 %v2516, %v2512
    %v4225 = vpack.c.b16 %v2521, %v2517
    %v4226 = vpack.c.b16 %v2522, %v2518
    %v4227 = vpack.c.b16 %v2523, %v2519
    %v4228 = vpack.c.b16 %v2524, %v2520
    %v4229 = vpack.c.b16 %v2529, %v2525
    %v4230 = vpack.c.b16 %v2530, %v2526
    %v4231 = vpack.c.b16 %v2531, %v2527
    %v4232 = vpack.c.b16 %v2532, %v2528
    %v4233 = vpack.c.b16 %v2537, %v2533
    %v4234 = vpack.c.b16 %v2538, %v2534
    %v4235 = vpack.c.b16 %v2539, %v2535
    %v4236 = vpack.c.b16 %v2540, %v2536
    %v4237 = vpack.c.b16 %v2545, %v2541
    %v4238 = vpack.c.b16 %v2546, %v2542
    %v4239 = vpack.c.b16 %v2547, %v2543
    %v4240 = vpack.c.b16 %v2548, %v2544
    %v4241 = vpack.c.b16 %v2553, %v2549
    %v4242 = vpack.c.b16 %v2554, %v2550
    %v4243 = vpack.c.b16 %v2555, %v2551
    %v4244 = vpack.c.b16 %v2556, %v2552
    %v4245 = vpack.c.b16 %v2561, %v2557
    %v4246 = vpack.c.b16 %v2562, %v2558
    %v4247 = vpack.c.b16 %v2563, %v2559
    %v4248 = vpack.c.b16 %v2564, %v2560
    %v4249 = vpack.c.b16 %v2569, %v2565
    %v4250 = vpack.c.b16 %v2570, %v2566
    %v4251 = vpack.c.b16 %v2571, %v2567
    %v4252 = vpack.c.b16 %v2572, %v2568
    %v4253 = vpack.c.b16 %v2577, %v2573
    %v4254 = vpack.c.b16 %v2578, %v2574
    %v4255 = vpack.c.b16 %v2579, %v2575
    %v4256 = vpack.c.b16 %v2580, %v2576
    %v4257 = vpack.c.b16 %v2585, %v2581
    %v4258 = vpack.c.b16 %v2586, %v2582
    %v4259 = vpack.c.b16 %v2587, %v2583
    %v4260 = vpack.c.b16 %v2588, %v2584
    %v4261 = vpack.c.b16 %v2593, %v2589
    %v4262 = vpack.c.b16 %v2594, %v2590
    %v4263 = vpack.c.b16 %v2595, %v2591
    %v4264 = vpack.c.b16 %v2596, %v2592
    %v4265 = vpack.c.b16 %v2601, %v2597
    %v4266 = vpack.c.b16 %v2602, %v2598
    %v4267 = vpack.c.b16 %v2603, %v2599
    %v4268 = vpack.c.b16 %v2604, %v2600
    %v4269 = vpack.c.b16 %v2609, %v2605
    %v4270 = vpack.c.b16 %v2610, %v2606
    %v4271 = vpack.c.b16 %v2611, %v2607
    %v4272 = vpack.c.b16 %v2612, %v2608
    %v4273 = vpack.c.b16 %v2617, %v2613
    %v4274 = vpack.c.b16 %v2618, %v2614
    %v4275 = vpack.c.b16 %v2619, %v2615
    %v4276 = vpack.c.b16 %v2620, %v2616
    %v4277 = vpack.c.b16 %v2625, %v2621
    %v4278 = vpack.c.b16 %v2626, %v2622
    %v4279 = vpack.c.b16 %v2627, %v2623
    %v4280 = vpack.c.b16 %v2628, %v2624
    %v4281 = vpack.c.b16 %v2633, %v2629
    %v4282 = vpack.c.b16 %v2634, %v2630
    %v4283 = vpack.c.b16 %v2635, %v2631
    %v4284 = vpack.c.b16 %v2636, %v2632
    %v4285 = vpack.c.b16 %v2641, %v2637
    %v4286 = vpack.c.b16 %v2642, %v2638
    %v4287 = vpack.c.b16 %v2643, %v2639
    %v4288 = vpack.c.b16 %v2644, %v2640
    %v4289 = vpack.c.b16 %v2649, %v2645
    %v4290 = vpack.c.b16 %v2650, %v2646
    %v4291 = vpack.c.b16 %v2651, %v2647
    %v4292 = vpack.c.b16 %v2652, %v2648
    %v4293 = vpack.c.b16 %v2657, %v2653
    %v4294 = vpack.c.b16 %v2658, %v2654
    %v4295 = vpack.c.b16 %v2659, %v2655
    %v4296 = vpack.c.b16 %v2660, %v2656
    %v4297 = vpack.c.b16 %v2665, %v2661
    %v4298 = vpack.c.b16 %v2666, %v2662
    %v4299 = vpack.c.b16 %v2667, %v2663
    %v4300 = vpack.c.b16 %v2668, %v2664
    %v4301 = vpack.c.b16 %v2673, %v2669
    %v4302 = vpack.c.b16 %v2674, %v2670
    %v4303 = vpack.c.b16 %v2675, %v2671
    %v4304 = vpack.c.b16 %v2676, %v2672
    %v4305 = vpack.c.b16 %v2681, %v2677
    %v4306 = vpack.c.b16 %v2682, %v2678
    %v4307 = vpack.c.b16 %v2683, %v2679
    %v4308 = vpack.c.b16 %v2684, %v2680
    %v4309 = vpack.c.b16 %v2689, %v2685
    %v4310 = vpack.c.b16 %v2690, %v2686
    %v4311 = vpack.c.b16 %v2691, %v2687
    %v4312 = vpack.c.b16 %v2692, %v2688
    %v4313 = vpack.c.b16 %v2697, %v2693
    %v4314 = vpack.c.b16 %v2698, %v2694
    %v4315 = vpack.c.b16 %v2699, %v2695
    %v4316 = vpack.c.b16 %v2700, %v2696
    %v4317 = vpack.c.b16 %v2705, %v2701
    %v4318 = vpack.c.b16 %v2706, %v2702
    %v4319 = vpack.c.b16 %v2707, %v2703
    %v4320 = vpack.c.b16 %v2708, %v2704
    %v4321 = vpack.c.b16 %v2713, %v2709
    %v4322 = vpack.c.b16 %v2714, %v2710
    %v4323 = vpack.c.b16 %v2715, %v2711
    %v4324 = vpack.c.b16 %v2716, %v2712
    %v4325 = vpack.c.b16 %v2721, %v2717
    %v4326 = vpack.c.b16 %v2722, %v2718
    %v4327 = vpack.c.b16 %v2723, %v2719
    %v4328 = vpack.c.b16 %v2724, %v2720
    %v4329 = vpack.c.b16 %v2729, %v2725
    %v4330 = vpack.c.b16 %v2730, %v2726
    %v4331 = vpack.c.b16 %v2731, %v2727
    %v4332 = vpack.c.b16 %v2732, %v2728
    %v4333 = vpack.c.b16 %v2737, %v2733
    %v4334 = vpack.c.b16 %v2738, %v2734
    %v4335 = vpack.c.b16 %v2739, %v2735
    %v4336 = vpack.c.b16 %v2740, %v2736
    %v4337 = vpack.c.b16 %v2745, %v2741
    %v4338 = vpack.c.b16 %v2746, %v2742
    %v4339 = vpack.c.b16 %v2747, %v2743
    %v4340 = vpack.c.b16 %v2748, %v2744
    %v4341 = vpack.c.b16 %v2753, %v2749
    %v4342 = vpack.c.b16 %v2754, %v2750
    %v4343 = vpack.c.b16 %v2755, %v2751
    %v4344 = vpack.c.b16 %v2756, %v2752
    %v4345 = vpack.c.b16 %v2761, %v2757
    %v4346 = vpack.c.b16 %v2762, %v2758
    %v4347 = vpack.c.b16 %v2763, %v2759
    %v4348 = vpack.c.b16 %v2764, %v2760
    %v4349 = vpack.c.b16 %v2769, %v2765
    %v4350 = vpack.c.b16 %v2770, %v2766
    %v4351 = vpack.c.b16 %v2771, %v2767
    %v4352 = vpack.c.b16 %v2772, %v2768
    %v4353 = vpack.c.b16 %v2777, %v2773
    %v4354 = vpack.c.b16 %v2778, %v2774
    %v4355 = vpack.c.b16 %v2779, %v2775
    %v4356 = vpack.c.b16 %v2780, %v2776
    %v4357 = vpack.c.b16 %v2785, %v2781
    %v4358 = vpack.c.b16 %v2786, %v2782
    %v4359 = vpack.c.b16 %v2787, %v2783
    %v4360 = vpack.c.b16 %v2788, %v2784
    %v4361 = vpack.c.b16 %v2793, %v2789
    %v4362 = vpack.c.b16 %v2794, %v2790
    %v4363 = vpack.c.b16 %v2795, %v2791
    %v4364 = vpack.c.b16 %v2796, %v2792
    %v4365 = vpack.c.b16 %v2801, %v2797
    %v4366 = vpack.c.b16 %v2802, %v2798
    %v4367 = vpack.c.b16 %v2803, %v2799
    %v4368 = vpack.c.b16 %v2804, %v2800
    %v4369 = vpack.c.b16 %v2809, %v2805
    %v4370 = vpack.c.b16 %v2810, %v2806
    %v4371 = vpack.c.b16 %v2811, %v2807
    %v4372 = vpack.c.b16 %v2812, %v2808
    %v4373 = vpack.c.b16 %v2817, %v2813
    %v4374 = vpack.c.b16 %v2818, %v2814
    %v4375 = vpack.c.b16 %v2819, %v2815
    %v4376 = vpack.c.b16 %v2820, %v2816
    %v4377 = vpack.c.b16 %v2825, %v2821
    %v4378 = vpack.c.b16 %v2826, %v2822
    %v4379 = vpack.c.b16 %v2827, %v2823
    %v4380 = vpack.c.b16 %v2828, %v2824
    %v4381 = vpack.c.b16 %v2833, %v2829
    %v4382 = vpack.c.b16 %v2834, %v2830
    %v4383 = vpack.c.b16 %v2835, %v2831
    %v4384 = vpack.c.b16 %v2836, %v2832
    %v4385 = vpack.c.b16 %v2841, %v2837
    %v4386 = vpack.c.b16 %v2842, %v2838
    %v4387 = vpack.c.b16 %v2843, %v2839
    %v4388 = vpack.c.b16 %v2844, %v2840
    %v4389 = vpack.c.b16 %v2849, %v2845
    %v4390 = vpack.c.b16 %v2850, %v2846
    %v4391 = vpack.c.b16 %v2851, %v2847
    %v4392 = vpack.c.b16 %v2852, %v2848
    %v4393 = vpack.c.b16 %v2857, %v2853
    %v4394 = vpack.c.b16 %v2858, %v2854
    %v4395 = vpack.c.b16 %v2859, %v2855
    %v4396 = vpack.c.b16 %v2860, %v2856
    %v4397 = vpack.c.b16 %v2865, %v2861
    %v4398 = vpack.c.b16 %v2866, %v2862
    %v4399 = vpack.c.b16 %v2867, %v2863
    %v4400 = vpack.c.b16 %v2868, %v2864
    %v4401 = vpack.c.b16 %v2873, %v2869
    %v4402 = vpack.c.b16 %v2874, %v2870
    %v4403 = vpack.c.b16 %v2875, %v2871
    %v4404 = vpack.c.b16 %v2876, %v2872
    %v4405 = vpack.c.b16 %v2881, %v2877
    %v4406 = vpack.c.b16 %v2882, %v2878
    %v4407 = vpack.c.b16 %v2883, %v2879
    %v4408 = vpack.c.b16 %v2884, %v2880
    %v4409 = vpack.c.b16 %v2889, %v2885
    %v4410 = vpack.c.b16 %v2890, %v2886
    %v4411 = vpack.c.b16 %v2891, %v2887
    %v4412 = vpack.c.b16 %v2892, %v2888
    %v4413 = vpack.c.b16 %v2897, %v2893
    %v4414 = vpack.c.b16 %v2898, %v2894
    %v4415 = vpack.c.b16 %v2899, %v2895
    %v4416 = vpack.c.b16 %v2900, %v2896
    %v4417 = vpack.c.b16 %v2905, %v2901
    %v4418 = vpack.c.b16 %v2906, %v2902
    %v4419 = vpack.c.b16 %v2907, %v2903
    %v4420 = vpack.c.b16 %v2908, %v2904
    %v4421 = vpack.c.b16 %v2913, %v2909
    %v4422 = vpack.c.b16 %v2914, %v2910
    %v4423 = vpack.c.b16 %v2915, %v2911
    %v4424 = vpack.c.b16 %v2916, %v2912
    %v4425 = vpack.c.b16 %v2921, %v2917
    %v4426 = vpack.c.b16 %v2922, %v2918
    %v4427 = vpack.c.b16 %v2923, %v2919
    %v4428 = vpack.c.b16 %v2924, %v2920
    %v4429 = vpack.c.b16 %v2929, %v2925
    %v4430 = vpack.c.b16 %v2930, %v2926
    %v4431 = vpack.c.b16 %v2931, %v2927
    %v4432 = vpack.c.b16 %v2932, %v2928
    %v4433 = vpack.c.b16 %v2937, %v2933
    %v4434 = vpack.c.b16 %v2938, %v2934
    %v4435 = vpack.c.b16 %v2939, %v2935
    %v4436 = vpack.c.b16 %v2940, %v2936
    %v4437 = vpack.c.b16 %v2945, %v2941
    %v4438 = vpack.c.b16 %v2946, %v2942
    %v4439 = vpack.c.b16 %v2947, %v2943
    %v4440 = vpack.c.b16 %v2948, %v2944
    %v4441 = vpack.c.b16 %v2953, %v2949
    %v4442 = vpack.c.b16 %v2954, %v2950
    %v4443 = vpack.c.b16 %v2955, %v2951
    %v4444 = vpack.c.b16 %v2956, %v2952
    %v4445 = vpack.c.b16 %v2961, %v2957
    %v4446 = vpack.c.b16 %v2962, %v2958
    %v4447 = vpack.c.b16 %v2963, %v2959
    %v4448 = vpack.c.b16 %v2964, %v2960
    %v4449 = vpack.c.b16 %v2969, %v2965
    %v4450 = vpack.c.b16 %v2970, %v2966
    %v4451 = vpack.c.b16 %v2971, %v2967
    %v4452 = vpack.c.b16 %v2972, %v2968
    %v4453 = vpack.c.b16 %v2977, %v2973
    %v4454 = vpack.c.b16 %v2978, %v2974
    %v4455 = vpack.c.b16 %v2979, %v2975
    %v4456 = vpack.c.b16 %v2980, %v2976
    %v4457 = vpack.c.b16 %v2985, %v2981
    %v4458 = vpack.c.b16 %v2986, %v2982
    %v4459 = vpack.c.b16 %v2987, %v2983
    %v4460 = vpack.c.b16 %v2988, %v2984
    %v4461 = vpack.c.b16 %v2993, %v2989
    %v4462 = vpack.c.b16 %v2994, %v2990
    %v4463 = vpack.c.b16 %v2995, %v2991
    %v4464 = vpack.c.b16 %v2996, %v2992
    %v4465 = vpack.c.b16 %v3001, %v2997
    %v4466 = vpack.c.b16 %v3002, %v2998
    %v4467 = vpack.c.b16 %v3003, %v2999
    %v4468 = vpack.c.b16 %v3004, %v3000
    %v4469 = vpack.c.b16 %v3009, %v3005
    %v4470 = vpack.c.b16 %v3010, %v3006
    %v4471 = vpack.c.b16 %v3011, %v3007
    %v4472 = vpack.c.b16 %v3012, %v3008
    %v4473 = vpack.c.b16 %v3017, %v3013
    %v4474 = vpack.c.b16 %v3018, %v3014
    %v4475 = vpack.c.b16 %v3019, %v3015
    %v4476 = vpack.c.b16 %v3020, %v3016
    %v4477 = vpack.c.b16 %v3025, %v3021
    %v4478 = vpack.c.b16 %v3026, %v3022
    %v4479 = vpack.c.b16 %v3027, %v3023
    %v4480 = vpack.c.b16 %v3028, %v3024
    %v4481 = vpack.c.b16 %v3033, %v3029
    %v4482 = vpack.c.b16 %v3034, %v3030
    %v4483 = vpack.c.b16 %v3035, %v3031
    %v4484 = vpack.c.b16 %v3036, %v3032
    %v4485 = vpack.c.b16 %v3041, %v3037
    %v4486 = vpack.c.b16 %v3042, %v3038
    %v4487 = vpack.c.b16 %v3043, %v3039
    %v4488 = vpack.c.b16 %v3044, %v3040
    %v4489 = vpack.c.b16 %v3049, %v3045
    %v4490 = vpack.c.b16 %v3050, %v3046
    %v4491 = vpack.c.b16 %v3051, %v3047
    %v4492 = vpack.c.b16 %v3052, %v3048
    %v4493 = vpack.c.b16 %v3057, %v3053
    %v4494 = vpack.c.b16 %v3058, %v3054
    %v4495 = vpack.c.b16 %v3059, %v3055
    %v4496 = vpack.c.b16 %v3060, %v3056
    %v4497 = vpack.c.b16 %v3065, %v3061
    %v4498 = vpack.c.b16 %v3066, %v3062
    %v4499 = vpack.c.b16 %v3067, %v3063
    %v4500 = vpack.c.b16 %v3068, %v3064
    %v4501 = vpack.c.b16 %v3073, %v3069
    %v4502 = vpack.c.b16 %v3074, %v3070
    %v4503 = vpack.c.b16 %v3075, %v3071
    %v4504 = vpack.c.b16 %v3076, %v3072
    %v4505 = vpack.c.b16 %v3081, %v3077
    %v4506 = vpack.c.b16 %v3082, %v3078
    %v4507 = vpack.c.b16 %v3083, %v3079
    %v4508 = vpack.c.b16 %v3084, %v3080
    %v4509 = vpack.c.b16 %v3089, %v3085
    %v4510 = vpack.c.b16 %v3090, %v3086
    %v4511 = vpack.c.b16 %v3091, %v3087
    %v4512 = vpack.c.b16 %v3092, %v3088
    %v4513 = vpack.c.b16 %v3097, %v3093
    %v4514 = vpack.c.b16 %v3098, %v3094
    %v4515 = vpack.c.b16 %v3099, %v3095
    %v4516 = vpack.c.b16 %v3100, %v3096
    %v4517 = vpack.c.b16 %v3105, %v3101
    %v4518 = vpack.c.b16 %v3106, %v3102
    %v4519 = vpack.c.b16 %v3107, %v3103
    %v4520 = vpack.c.b16 %v3108, %v3104
    %v4521 = vpack.c.b16 %v3113, %v3109
    %v4522 = vpack.c.b16 %v3114, %v3110
    %v4523 = vpack.c.b16 %v3115, %v3111
    %v4524 = vpack.c.b16 %v3116, %v3112
    %v4525 = vpack.c.b16 %v3121, %v3117
    %v4526 = vpack.c.b16 %v3122, %v3118
    %v4527 = vpack.c.b16 %v3123, %v3119
    %v4528 = vpack.c.b16 %v3124, %v3120
    %v4529 = vpack.c.b16 %v3129, %v3125
    %v4530 = vpack.c.b16 %v3130, %v3126
    %v4531 = vpack.c.b16 %v3131, %v3127
    %v4532 = vpack.c.b16 %v3132, %v3128
    %v4533 = vpack.c.b16 %v3137, %v3133
    %v4534 = vpack.c.b16 %v3138, %v3134
    %v4535 = vpack.c.b16 %v3139, %v3135
    %v4536 = vpack.c.b16 %v3140, %v3136
    %v4537 = vpack.c.b16 %v3145, %v3141
    %v4538 = vpack.c.b16 %v3146, %v3142
    %v4539 = vpack.c.b16 %v3147, %v3143
    %v4540 = vpack.c.b16 %v3148, %v3144
    %v4541 = vpack.c.b16 %v3153, %v3149
    %v4542 = vpack.c.b16 %v3154, %v3150
    %v4543 = vpack.c.b16 %v3155, %v3151
    %v4544 = vpack.c.b16 %v3156, %v3152
    %v4545 = vpack.c.b16 %v3161, %v3157
    %v4546 = vpack.c.b16 %v3162, %v3158
    %v4547 = vpack.c.b16 %v3163, %v3159
    %v4548 = vpack.c.b16 %v3164, %v3160
    %v4549 = vpack.c.b16 %v3169, %v3165
    %v4550 = vpack.c.b16 %v3170, %v3166
    %v4551 = vpack.c.b16 %v3171, %v3167
    %v4552 = vpack.c.b16 %v3172, %v3168
    %v4553 = vpack.c.b16 %v3177, %v3173
    %v4554 = vpack.c.b16 %v3178, %v3174
    %v4555 = vpack.c.b16 %v3179, %v3175
    %v4556 = vpack.c.b16 %v3180, %v3176
    %v4557 = vpack.c.b16 %v3185, %v3181
    %v4558 = vpack.c.b16 %v3186, %v3182
    %v4559 = vpack.c.b16 %v3187, %v3183
    %v4560 = vpack.c.b16 %v3188, %v3184
    %v4561 = vpack.c.b16 %v3193, %v3189
    %v4562 = vpack.c.b16 %v3194, %v3190
    %v4563 = vpack.c.b16 %v3195, %v3191
    %v4564 = vpack.c.b16 %v3196, %v3192
    %v4565 = vpack.c.b16 %v3201, %v3197
    %v4566 = vpack.c.b16 %v3202, %v3198
    %v4567 = vpack.c.b16 %v3203, %v3199
    %v4568 = vpack.c.b16 %v3204, %v3200
    %v4569 = vpack.c.b16 %v3209, %v3205
    %v4570 = vpack.c.b16 %v3210, %v3206
    %v4571 = vpack.c.b16 %v3211, %v3207
    %v4572 = vpack.c.b16 %v3212, %v3208
    %v4573 = vpack.c.b16 %v3217, %v3213
    %v4574 = vpack.c.b16 %v3218, %v3214
    %v4575 = vpack.c.b16 %v3219, %v3215
    %v4576 = vpack.c.b16 %v3220, %v3216
    %v4577 = vpack.c.b16 %v3225, %v3221
    %v4578 = vpack.c.b16 %v3226, %v3222
    %v4579 = vpack.c.b16 %v3227, %v3223
    %v4580 = vpack.c.b16 %v3228, %v3224
    %v4581 = vpack.c.b16 %v3233, %v3229
    %v4582 = vpack.c.b16 %v3234, %v3230
    %v4583 = vpack.c.b16 %v3235, %v3231
    %v4584 = vpack.c.b16 %v3236, %v3232
    %v4585 = vpack.c.b16 %v3241, %v3237
    %v4586 = vpack.c.b16 %v3242, %v3238
    %v4587 = vpack.c.b16 %v3243, %v3239
    %v4588 = vpack.c.b16 %v3244, %v3240
    %v4589 = vpack.c.b16 %v3249, %v3245
    %v4590 = vpack.c.b16 %v3250, %v3246
    %v4591 = vpack.c.b16 %v3251, %v3247
    %v4592 = vpack.c.b16 %v3252, %v3248
    %v4593 = vpack.c.b16 %v3257, %v3253
    %v4594 = vpack.c.b16 %v3258, %v3254
    %v4595 = vpack.c.b16 %v3259, %v3255
    %v4596 = vpack.c.b16 %v3260, %v3256
    %v4597 = vpack.c.b16 %v3265, %v3261
    %v4598 = vpack.c.b16 %v3266, %v3262
    %v4599 = vpack.c.b16 %v3267, %v3263
    %v4600 = vpack.c.b16 %v3268, %v3264
    %v4601 = vpack.c.b16 %v3273, %v3269
    %v4602 = vpack.c.b16 %v3274, %v3270
    %v4603 = vpack.c.b16 %v3275, %v3271
    %v4604 = vpack.c.b16 %v3276, %v3272
    %v4605 = vpack.c.b16 %v3281, %v3277
    %v4606 = vpack.c.b16 %v3282, %v3278
    %v4607 = vpack.c.b16 %v3283, %v3279
    %v4608 = vpack.c.b16 %v3284, %v3280
    %v4609 = vpack.c.b16 %v3289, %v3285
    %v4610 = vpack.c.b16 %v3290, %v3286
    %v4611 = vpack.c.b16 %v3291, %v3287
    %v4612 = vpack.c.b16 %v3292, %v3288
    %v4613 = vpack.c.b16 %v3297, %v3293
    %v4614 = vpack.c.b16 %v3298, %v3294
    %v4615 = vpack.c.b16 %v3299, %v3295
    %v4616 = vpack.c.b16 %v3300, %v3296
    %v4617 = vpack.c.b16 %v3305, %v3301
    %v4618 = vpack.c.b16 %v3306, %v3302
    %v4619 = vpack.c.b16 %v3307, %v3303
    %v4620 = vpack.c.b16 %v3308, %v3304
    %v4621 = vpack.c.b16 %v3313, %v3309
    %v4622 = vpack.c.b16 %v3314, %v3310
    %v4623 = vpack.c.b16 %v3315, %v3311
    %v4624 = vpack.c.b16 %v3316, %v3312
    %v4625 = vpack.c.b16 %v3321, %v3317
    %v4626 = vpack.c.b16 %v3322, %v3318
    %v4627 = vpack.c.b16 %v3323, %v3319
    %v4628 = vpack.c.b16 %v3324, %v3320
    %v4629 = vpack.c.b16 %v3329, %v3325
    %v4630 = vpack.c.b16 %v3330, %v3326
    %v4631 = vpack.c.b16 %v3331, %v3327
    %v4632 = vpack.c.b16 %v3332, %v3328
    %v4633 = vpack.c.b16 %v3337, %v3333
    %v4634 = vpack.c.b16 %v3338, %v3334
    %v4635 = vpack.c.b16 %v3339, %v3335
    %v4636 = vpack.c.b16 %v3340, %v3336
    %v4637 = vpack.c.b16 %v3345, %v3341
    %v4638 = vpack.c.b16 %v3346, %v3342
    %v4639 = vpack.c.b16 %v3347, %v3343
    %v4640 = vpack.c.b16 %v3348, %v3344
    %v4641 = vpack.c.b16 %v3353, %v3349
    %v4642 = vpack.c.b16 %v3354, %v3350
    %v4643 = vpack.c.b16 %v3355, %v3351
    %v4644 = vpack.c.b16 %v3356, %v3352
    %v4645 = vpack.c.b16 %v3361, %v3357
    %v4646 = vpack.c.b16 %v3362, %v3358
    %v4647 = vpack.c.b16 %v3363, %v3359
    %v4648 = vpack.c.b16 %v3364, %v3360
    %v4649 = vpack.c.b16 %v3369, %v3365
    %v4650 = vpack.c.b16 %v3370, %v3366
    %v4651 = vpack.c.b16 %v3371, %v3367
    %v4652 = vpack.c.b16 %v3372, %v3368
    %v4653 = vpack.c.b16 %v3377, %v3373
    %v4654 = vpack.c.b16 %v3378, %v3374
    %v4655 = vpack.c.b16 %v3379, %v3375
    %v4656 = vpack.c.b16 %v3380, %v3376
    %v4657 = vpack.c.b16 %v3385, %v3381
    %v4658 = vpack.c.b16 %v3386, %v3382
    %v4659 = vpack.c.b16 %v3387, %v3383
    %v4660 = vpack.c.b16 %v3388, %v3384
    %v4661 = vpack.c.b16 %v3393, %v3389
    %v4662 = vpack.c.b16 %v3394, %v3390
    %v4663 = vpack.c.b16 %v3395, %v3391
    %v4664 = vpack.c.b16 %v3396, %v3392
    %v4665 = vpack.c.b16 %v3401, %v3397
    %v4666 = vpack.c.b16 %v3402, %v3398
    %v4667 = vpack.c.b16 %v3403, %v3399
    %v4668 = vpack.c.b16 %v3404, %v3400
    %v4669 = vpack.c.b16 %v3409, %v3405
    %v4670 = vpack.c.b16 %v3410, %v3406
    %v4671 = vpack.c.b16 %v3411, %v3407
    %v4672 = vpack.c.b16 %v3412, %v3408
    %v4673 = vpack.c.b16 %v3417, %v3413
    %v4674 = vpack.c.b16 %v3418, %v3414
    %v4675 = vpack.c.b16 %v3419, %v3415
    %v4676 = vpack.c.b16 %v3420, %v3416
    %v4677 = vpack.c.b16 %v3425, %v3421
    %v4678 = vpack.c.b16 %v3426, %v3422
    %v4679 = vpack.c.b16 %v3427, %v3423
    %v4680 = vpack.c.b16 %v3428, %v3424
    %v4681 = vpack.c.b16 %v3433, %v3429
    %v4682 = vpack.c.b16 %v3434, %v3430
    %v4683 = vpack.c.b16 %v3435, %v3431
    %v4684 = vpack.c.b16 %v3436, %v3432
    %v4685 = vpack.c.b16 %v3441, %v3437
    %v4686 = vpack.c.b16 %v3442, %v3438
    %v4687 = vpack.c.b16 %v3443, %v3439
    %v4688 = vpack.c.b16 %v3444, %v3440
    %v4689 = vpack.c.b16 %v3449, %v3445
    %v4690 = vpack.c.b16 %v3450, %v3446
    %v4691 = vpack.c.b16 %v3451, %v3447
    %v4692 = vpack.c.b16 %v3452, %v3448
    %v4693 = vpack.c.b16 %v3457, %v3453
    %v4694 = vpack.c.b16 %v3458, %v3454
    %v4695 = vpack.c.b16 %v3459, %v3455
    %v4696 = vpack.c.b16 %v3460, %v3456
    %v4697 = vpack.c.b16 %v3465, %v3461
    %v4698 = vpack.c.b16 %v3466, %v3462
    %v4699 = vpack.c.b16 %v3467, %v3463
    %v4700 = vpack.c.b16 %v3468, %v3464
    %v4701 = vpack.c.b16 %v3473, %v3469
    %v4702 = vpack.c.b16 %v3474, %v3470
    %v4703 = vpack.c.b16 %v3475, %v3471
    %v4704 = vpack.c.b16 %v3476, %v3472
    %v4705 = vpack.c.b16 %v3481, %v3477
    %v4706 = vpack.c.b16 %v3482, %v3478
    %v4707 = vpack.c.b16 %v3483, %v3479
    %v4708 = vpack.c.b16 %v3484, %v3480
    %v4709 = vpack.c.b16 %v3489, %v3485
    %v4710 = vpack.c.b16 %v3490, %v3486
    %v4711 = vpack.c.b16 %v3491, %v3487
    %v4712 = vpack.c.b16 %v3492, %v3488
    %v4713 = vpack.c.b16 %v3497, %v3493
    %v4714 = vpack.c.b16 %v3498, %v3494
    %v4715 = vpack.c.b16 %v3499, %v3495
    %v4716 = vpack.c.b16 %v3500, %v3496
    %v4717 = vpack.c.b16 %v3505, %v3501
    %v4718 = vpack.c.b16 %v3506, %v3502
    %v4719 = vpack.c.b16 %v3507, %v3503
    %v4720 = vpack.c.b16 %v3508, %v3504
    %v4721 = vpack.c.b16 %v3513, %v3509
    %v4722 = vpack.c.b16 %v3514, %v3510
    %v4723 = vpack.c.b16 %v3515, %v3511
    %v4724 = vpack.c.b16 %v3516, %v3512
    %v4725 = vpack.c.b16 %v3521, %v3517
    %v4726 = vpack.c.b16 %v3522, %v3518
    %v4727 = vpack.c.b16 %v3523, %v3519
    %v4728 = vpack.c.b16 %v3524, %v3520
    %v4729 = vpack.c.b16 %v3529, %v3525
    %v4730 = vpack.c.b16 %v3530, %v3526
    %v4731 = vpack.c.b16 %v3531, %v3527
    %v4732 = vpack.c.b16 %v3532, %v3528
    %v4733 = vpack.c.b16 %v3537, %v3533
    %v4734 = vpack.c.b16 %v3538, %v3534
    %v4735 = vpack.c.b16 %v3539, %v3535
    %v4736 = vpack.c.b16 %v3540, %v3536
    %v4737 = vpack.c.b16 %v3545, %v3541
    %v4738 = vpack.c.b16 %v3546, %v3542
    %v4739 = vpack.c.b16 %v3547, %v3543
    %v4740 = vpack.c.b16 %v3548, %v3544
    %v4741 = vpack.c.b16 %v3553, %v3549
    %v4742 = vpack.c.b16 %v3554, %v3550
    %v4743 = vpack.c.b16 %v3555, %v3551
    %v4744 = vpack.c.b16 %v3556, %v3552
    %v4745 = vpack.c.b16 %v3561, %v3557
    %v4746 = vpack.c.b16 %v3562, %v3558
    %v4747 = vpack.c.b16 %v3563, %v3559
    %v4748 = vpack.c.b16 %v3564, %v3560
    %v4749 = vpack.c.b16 %v3569, %v3565
    %v4750 = vpack.c.b16 %v3570, %v3566
    %v4751 = vpack.c.b16 %v3571, %v3567
    %v4752 = vpack.c.b16 %v3572, %v3568
    %v4753 = vpack.c.b16 %v3577, %v3573
    %v4754 = vpack.c.b16 %v3578, %v3574
    %v4755 = vpack.c.b16 %v3579, %v3575
    %v4756 = vpack.c.b16 %v3580, %v3576
    %v4757 = vpack.c.b16 %v3585, %v3581
    %v4758 = vpack.c.b16 %v3586, %v3582
    %v4759 = vpack.c.b16 %v3587, %v3583
    %v4760 = vpack.c.b16 %v3588, %v3584
    %v4761 = vpack.c.b16 %v3593, %v3589
    %v4762 = vpack.c.b16 %v3594, %v3590
    %v4763 = vpack.c.b16 %v3595, %v3591
    %v4764 = vpack.c.b16 %v3596, %v3592
    %v4765 = vpack.c.b16 %v3601, %v3597
    %v4766 = vpack.c.b16 %v3602, %v3598
    %v4767 = vpack.c.b16 %v3603, %v3599
    %v4768 = vpack.c.b16 %v3604, %v3600
    %v4769 = vpack.c.b16 %v3609, %v3605
    %v4770 = vpack.c.b16 %v3610, %v3606
    %v4771 = vpack.c.b16 %v3611, %v3607
    %v4772 = vpack.c.b16 %v3612, %v3608
    %v4773 = vpack.c.b16 %v3617, %v3613
    %v4774 = vpack.c.b16 %v3618, %v3614
    %v4775 = vpack.c.b16 %v3619, %v3615
    %v4776 = vpack.c.b16 %v3620, %v3616
    %v4777 = vpack.c.b16 %v3625, %v3621
    %v4778 = vpack.c.b16 %v3626, %v3622
    %v4779 = vpack.c.b16 %v3627, %v3623
    %v4780 = vpack.c.b16 %v3628, %v3624
    %v4781 = vpack.c.b16 %v3633, %v3629
    %v4782 = vpack.c.b16 %v3634, %v3630
    %v4783 = vpack.c.b16 %v3635, %v3631
    %v4784 = vpack.c.b16 %v3636, %v3632
    %v4785 = vpack.c.b16 %v3641, %v3637
    %v4786 = vpack.c.b16 %v3642, %v3638
    %v4787 = vpack.c.b16 %v3643, %v3639
    %v4788 = vpack.c.b16 %v3644, %v3640
    %v4789 = vpack.c.b16 %v3649, %v3645
    %v4790 = vpack.c.b16 %v3650, %v3646
    %v4791 = vpack.c.b16 %v3651, %v3647
    %v4792 = vpack.c.b16 %v3652, %v3648
    %v4793 = vpack.c.b16 %v3657, %v3653
    %v4794 = vpack.c.b16 %v3658, %v3654
    %v4795 = vpack.c.b16 %v3659, %v3655
    %v4796 = vpack.c.b16 %v3660, %v3656
    %v4797 = vpack.c.b16 %v3665, %v3661
    %v4798 = vpack.c.b16 %v3666, %v3662
    %v4799 = vpack.c.b16 %v3667, %v3663
    %v4800 = vpack.c.b16 %v3668, %v3664
    %v4801 = vpack.c.b16 %v3673, %v3669
    %v4802 = vpack.c.b16 %v3674, %v3670
    %v4803 = vpack.c.b16 %v3675, %v3671
    %v4804 = vpack.c.b16 %v3676, %v3672
    %v4805 = vpack.c.b16 %v3681, %v3677
    %v4806 = vpack.c.b16 %v3682, %v3678
    %v4807 = vpack.c.b16 %v3683, %v3679
    %v4808 = vpack.c.b16 %v3684, %v3680
    %v4809 = vpack.c.b16 %v3689, %v3685
    %v4810 = vpack.c.b16 %v3690, %v3686
    %v4811 = vpack.c.b16 %v3691, %v3687
    %v4812 = vpack.c.b16 %v3692, %v3688
    %v4813 = vpack.c.b16 %v3697, %v3693
    %v4814 = vpack.c.b16 %v3698, %v3694
    %v4815 = vpack.c.b16 %v3699, %v3695
    %v4816 = vpack.c.b16 %v3700, %v3696
    %v4817 = vpack.c.b16 %v3705, %v3701
    %v4818 = vpack.c.b16 %v3706, %v3702
    %v4819 = vpack.c.b16 %v3707, %v3703
    %v4820 = vpack.c.b16 %v3708, %v3704
    %v4821 = vpack.c.b16 %v3713, %v3709
    %v4822 = vpack.c.b16 %v3714, %v3710
    %v4823 = vpack.c.b16 %v3715, %v3711
    %v4824 = vpack.c.b16 %v3716, %v3712
    %v4825 = vpack.c.b16 %v3721, %v3717
    %v4826 = vpack.c.b16 %v3722, %v3718
    %v4827 = vpack.c.b16 %v3723, %v3719
    %v4828 = vpack.c.b16 %v3724, %v3720
    %v4829 = vpack.c.b16 %v3729, %v3725
    %v4830 = vpack.c.b16 %v3730, %v3726
    %v4831 = vpack.c.b16 %v3731, %v3727
    %v4832 = vpack.c.b16 %v3732, %v3728
    %v4833 = vpack.c.b16 %v3737, %v3733
    %v4834 = vpack.c.b16 %v3738, %v3734
    %v4835 = vpack.c.b16 %v3739, %v3735
    %v4836 = vpack.c.b16 %v3740, %v3736
    %v4837 = vpack.c.b16 %v3745, %v3741
    %v4838 = vpack.c.b16 %v3746, %v3742
    %v4839 = vpack.c.b16 %v3747, %v3743
    %v4840 = vpack.c.b16 %v3748, %v3744
    %v4841 = vpack.c.b16 %v3753, %v3749
    %v4842 = vpack.c.b16 %v3754, %v3750
    %v4843 = vpack.c.b16 %v3755, %v3751
    %v4844 = vpack.c.b16 %v3756, %v3752
    %v4845 = vpack.c.b16 %v3761, %v3757
    %v4846 = vpack.c.b16 %v3762, %v3758
    %v4847 = vpack.c.b16 %v3763, %v3759
    %v4848 = vpack.c.b16 %v3764, %v3760
    %v4849 = vpack.c.b16 %v3769, %v3765
    %v4850 = vpack.c.b16 %v3770, %v3766
    %v4851 = vpack.c.b16 %v3771, %v3767
    %v4852 = vpack.c.b16 %v3772, %v3768
    %v4853 = vpack.c.b16 %v3777, %v3773
    %v4854 = vpack.c.b16 %v3778, %v3774
    %v4855 = vpack.c.b16 %v3779, %v3775
    %v4856 = vpack.c.b16 %v3780, %v3776
    %v4857 = vpack.c.b16 %v3785, %v3781
    %v4858 = vpack.c.b16 %v3786, %v3782
    %v4859 = vpack.c.b16 %v3787, %v3783
    %v4860 = vpack.c.b16 %v3788, %v3784
    %v4861 = vpack.c.b16 %v3793, %v3789
    %v4862 = vpack.c.b16 %v3794, %v3790
    %v4863 = vpack.c.b16 %v3795, %v3791
    %v4864 = vpack.c.b16 %v3796, %v3792
    %v4865 = vpack.c.b16 %v3801, %v3797
    %v4866 = vpack.c.b16 %v3802, %v3798
    %v4867 = vpack.c.b16 %v3803, %v3799
    %v4868 = vpack.c.b16 %v3804, %v3800
    %v4869 = vpack.c.b16 %v3809, %v3805
    %v4870 = vpack.c.b16 %v3810, %v3806
    %v4871 = vpack.c.b16 %v3811, %v3807
    %v4872 = vpack.c.b16 %v3812, %v3808
    %v4873 = vpack.c.b16 %v3817, %v3813
    %v4874 = vpack.c.b16 %v3818, %v3814
    %v4875 = vpack.c.b16 %v3819, %v3815
    %v4876 = vpack.c.b16 %v3820, %v3816
    %v4877 = vpack.c.b16 %v3825, %v3821
    %v4878 = vpack.c.b16 %v3826, %v3822
    %v4879 = vpack.c.b16 %v3827, %v3823
    %v4880 = vpack.c.b16 %v3828, %v3824
    %v4881 = vpack.c.b16 %v3833, %v3829
    %v4882 = vpack.c.b16 %v3834, %v3830
    %v4883 = vpack.c.b16 %v3835, %v3831
    %v4884 = vpack.c.b16 %v3836, %v3832
    %v4885 = vpack.c.b16 %v3841, %v3837
    %v4886 = vpack.c.b16 %v3842, %v3838
    %v4887 = vpack.c.b16 %v3843, %v3839
    %v4888 = vpack.c.b16 %v3844, %v3840
    %v4889 = vpack.c.b16 %v3849, %v3845
    %v4890 = vpack.c.b16 %v3850, %v3846
    %v4891 = vpack.c.b16 %v3851, %v3847
    %v4892 = vpack.c.b16 %v3852, %v3848
    %v4893 = vpack.c.b16 %v3857, %v3853
    %v4894 = vpack.c.b16 %v3858, %v3854
    %v4895 = vpack.c.b16 %v3859, %v3855
    %v4896 = vpack.c.b16 %v3860, %v3856
    %v4897 = vpack.c.b16 %v3865, %v3861
    %v4898 = vpack.c.b16 %v3866, %v3862
    %v4899 = vpack.c.b16 %v3867, %v3863
    %v4900 = vpack.c.b16 %v3868, %v3864
    %v4901 = vpack.c.b16 %v3873, %v3869
    %v4902 = vpack.c.b16 %v3874, %v3870
    %v4903 = vpack.c.b16 %v3875, %v3871
    %v4904 = vpack.c.b16 %v3876, %v3872
    %v4905 = vpack.c.b16 %v3881, %v3877
    %v4906 = vpack.c.b16 %v3882, %v3878
    %v4907 = vpack.c.b16 %v3883, %v3879
    %v4908 = vpack.c.b16 %v3884, %v3880
    %v4909 = vpack.c.b16 %v3889, %v3885
    %v4910 = vpack.c.b16 %v3890, %v3886
    %v4911 = vpack.c.b16 %v3891, %v3887
    %v4912 = vpack.c.b16 %v3892, %v3888
    %v4913 = vpack.c.b16 %v3897, %v3893
    %v4914 = vpack.c.b16 %v3898, %v3894
    %v4915 = vpack.c.b16 %v3899, %v3895
    %v4916 = vpack.c.b16 %v3900, %v3896
    %v4917 = vpack.c.b16 %v3905, %v3901
    %v4918 = vpack.c.b16 %v3906, %v3902
    %v4919 = vpack.c.b16 %v3907, %v3903
    %v4920 = vpack.c.b16 %v3908, %v3904
    %v4921 = vpack.c.b16 %v3913, %v3909
    %v4922 = vpack.c.b16 %v3914, %v3910
    %v4923 = vpack.c.b16 %v3915, %v3911
    %v4924 = vpack.c.b16 %v3916, %v3912
    %v4925 = vpack.c.b16 %v3921, %v3917
    %v4926 = vpack.c.b16 %v3922, %v3918
    %v4927 = vpack.c.b16 %v3923, %v3919
    %v4928 = vpack.c.b16 %v3924, %v3920
    %v4929 = vpack.c.b16 %v3929, %v3925
    %v4930 = vpack.c.b16 %v3930, %v3926
    %v4931 = vpack.c.b16 %v3931, %v3927
    %v4932 = vpack.c.b16 %v3932, %v3928
    %v4933 = vpack.c.b16 %v3937, %v3933
    %v4934 = vpack.c.b16 %v3938, %v3934
    %v4935 = vpack.c.b16 %v3939, %v3935
    %v4936 = vpack.c.b16 %v3940, %v3936
    %v4937 = vpack.c.b16 %v3945, %v3941
    %v4938 = vpack.c.b16 %v3946, %v3942
    %v4939 = vpack.c.b16 %v3947, %v3943
    %v4940 = vpack.c.b16 %v3948, %v3944
    %v4941 = vpack.c.b16 %v3953, %v3949
    %v4942 = vpack.c.b16 %v3954, %v3950
    %v4943 = vpack.c.b16 %v3955, %v3951
    %v4944 = vpack.c.b16 %v3956, %v3952
    %v4945 = vpack.c.b16 %v3961, %v3957
    %v4946 = vpack.c.b16 %v3962, %v3958
    %v4947 = vpack.c.b16 %v3963, %v3959
    %v4948 = vpack.c.b16 %v3964, %v3960
    %v4949 = vpack.c.b16 %v3969, %v3965
    %v4950 = vpack.c.b16 %v3970, %v3966
    %v4951 = vpack.c.b16 %v3971, %v3967
    %v4952 = vpack.c.b16 %v3972, %v3968
    %v4953 = vpack.c.b16 %v3977, %v3973
    %v4954 = vpack.c.b16 %v3978, %v3974
    %v4955 = vpack.c.b16 %v3979, %v3975
    %v4956 = vpack.c.b16 %v3980, %v3976
    %v4957 = vpack.c.b16 %v3985, %v3981
    %v4958 = vpack.c.b16 %v3986, %v3982
    %v4959 = vpack.c.b16 %v3987, %v3983
    %v4960 = vpack.c.b16 %v3988, %v3984
    %v4961 = vpack.c.b16 %v3993, %v3989
    %v4962 = vpack.c.b16 %v3994, %v3990
    %v4963 = vpack.c.b16 %v3995, %v3991
    %v4964 = vpack.c.b16 %v3996, %v3992
    %v4965 = vpack.c.b16 %v4001, %v3997
    %v4966 = vpack.c.b16 %v4002, %v3998
    %v4967 = vpack.c.b16 %v4003, %v3999
    %v4968 = vpack.c.b16 %v4004, %v4000
    %v4969 = vpack.c.b16 %v4009, %v4005
    %v4970 = vpack.c.b16 %v4010, %v4006
    %v4971 = vpack.c.b16 %v4011, %v4007
    %v4972 = vpack.c.b16 %v4012, %v4008
    %5933 = vmatprep.subr.bf16.mxu0 %v4042
    %5934 = vmatpush1.bf16.msra.mxu0 %v4041
    %5935 = vmatprep.subr.bf16.mxu0 %v4038
    %5936 = vmatpush1.bf16.msra.mxu0 %v4037
    %5937 = vmatprep.subr.bf16.mxu0 %v4034
    %5938 = vmatpush1.bf16.msra.mxu0 %v4033
    %5939 = vmatprep.subr.bf16.mxu0 %v4030
    %5940 = vmatpush1.bf16.msra.mxu0 %v4029
    %5941 = vmatprep.subr.bf16.mxu0 %v4026
    %5942 = vmatpush1.bf16.msra.mxu0 %v4025
    %5943 = vmatprep.subr.bf16.mxu0 %v4022
    %5944 = vmatpush1.bf16.msra.mxu0 %v4021
    %5945 = vmatprep.subr.bf16.mxu0 %v4018
    %5946 = vmatpush1.bf16.msra.mxu0 %v4017
    %5947 = vmatprep.subr.bf16.mxu0 %v4014
    %5948 = vmatpush1.bf16.msra.mxu0 %v4013
    %5949 = vmatprep.subr.bf16.mxu0 %v4074
    %5950 = vmatpush2.bf16.msra.mxu0 %v4073
    %5951 = vmatprep.subr.bf16.mxu0 %v4070
    %5952 = vmatpush2.bf16.msra.mxu0 %v4069
    %5953 = vmatprep.subr.bf16.mxu0 %v4066
    %5954 = vmatpush2.bf16.msra.mxu0 %v4065
    %5955 = vmatprep.subr.bf16.mxu0 %v4062
    %5956 = vmatpush2.bf16.msra.mxu0 %v4061
    %5957 = vmatprep.subr.bf16.mxu0 %v4058
    %5958 = vmatpush2.bf16.msra.mxu0 %v4057
    %5959 = vmatprep.subr.bf16.mxu0 %v4054
    %5960 = vmatpush2.bf16.msra.mxu0 %v4053
    %5961 = vmatprep.subr.bf16.mxu0 %v4050
    %5962 = vmatpush2.bf16.msra.mxu0 %v4049
    %5963 = vmatprep.subr.bf16.mxu0 %v4046
    %5964 = vmatpush2.bf16.msra.mxu0 %v4045
    %5965 = vmatprep.mubr.bf16.mxu0 %v122
    %5966 = vmatmul.mubr.bf16.gmra.mxu0 %v121
    %v5967 = vpop.f32.mrf.mxu0
    %v5968 = vadd.f32 %v1116, %v5967
    %v5969 = vpop.f32.mrf.mxu0
    %v5970 = vadd.f32 %v1120, %v5969
    %v5971 = vpop.f32.mrf.mxu0
    %v5972 = vpop.f32.mrf.mxu0
    %5973 = vdwg.mxu0
    %5974 = vmatprep.subr.bf16.mxu0 %v4106
    %5975 = vmatpush1.bf16.msra.mxu0 %v4105
    %5976 = vmatprep.subr.bf16.mxu0 %v4102
    %5977 = vmatpush1.bf16.msra.mxu0 %v4101
    %5978 = vmatprep.subr.bf16.mxu0 %v4098
    %5979 = vmatpush1.bf16.msra.mxu0 %v4097
    %5980 = vmatprep.subr.bf16.mxu0 %v4094
    %5981 = vmatpush1.bf16.msra.mxu0 %v4093
    %5982 = vmatprep.subr.bf16.mxu0 %v4090
    %5983 = vmatpush1.bf16.msra.mxu0 %v4089
    %5984 = vmatprep.subr.bf16.mxu0 %v4086
    %5985 = vmatpush1.bf16.msra.mxu0 %v4085
    %5986 = vmatprep.subr.bf16.mxu0 %v4082
    %5987 = vmatpush1.bf16.msra.mxu0 %v4081
    %5988 = vmatprep.subr.bf16.mxu0 %v4078
    %5989 = vmatpush1.bf16.msra.mxu0 %v4077
    %5990 = vmatprep.subr.bf16.mxu0 %v4138
    %5991 = vmatpush2.bf16.msra.mxu0 %v4137
    %5992 = vmatprep.subr.bf16.mxu0 %v4134
    %5993 = vmatpush2.bf16.msra.mxu0 %v4133
    %5994 = vmatprep.subr.bf16.mxu0 %v4130
    %5995 = vmatpush2.bf16.msra.mxu0 %v4129
    %5996 = vmatprep.subr.bf16.mxu0 %v4126
    %5997 = vmatpush2.bf16.msra.mxu0 %v4125
    %5998 = vmatprep.subr.bf16.mxu0 %v4122
    %5999 = vmatpush2.bf16.msra.mxu0 %v4121
    %6000 = vmatprep.subr.bf16.mxu0 %v4118
    %6001 = vmatpush2.bf16.msra.mxu0 %v4117
    %6002 = vmatprep.subr.bf16.mxu0 %v4114
    %6003 = vmatpush2.bf16.msra.mxu0 %v4113
    %6004 = vmatprep.subr.bf16.mxu0 %v4110
    %6005 = vmatpush2.bf16.msra.mxu0 %v4109
    %6006 = vmatprep.mubr.bf16.mxu0 %v124
    %6007 = vmatmul.mubr.bf16.gmra.mxu0 %v123
    %v6008 = vpop.f32.mrf.mxu0
    %v6009 = vadd.f32 %v5968, %v6008
    %v6010 = vpop.f32.mrf.mxu0
    %v6011 = vadd.f32 %v5970, %v6010
    %v6012 = vpop.f32.mrf.mxu0
    %v6013 = vpop.f32.mrf.mxu0
    %6014 = vdwg.mxu0
    %6015 = vmatprep.subr.bf16.mxu0 %v4170
    %6016 = vmatpush1.bf16.msra.mxu0 %v4169
    %6017 = vmatprep.subr.bf16.mxu0 %v4166
    %6018 = vmatpush1.bf16.msra.mxu0 %v4165
    %6019 = vmatprep.subr.bf16.mxu0 %v4162
    %6020 = vmatpush1.bf16.msra.mxu0 %v4161
    %6021 = vmatprep.subr.bf16.mxu0 %v4158
    %6022 = vmatpush1.bf16.msra.mxu0 %v4157
    %6023 = vmatprep.subr.bf16.mxu0 %v4154
    %6024 = vmatpush1.bf16.msra.mxu0 %v4153
    %6025 = vmatprep.subr.bf16.mxu0 %v4150
    %6026 = vmatpush1.bf16.msra.mxu0 %v4149
    %6027 = vmatprep.subr.bf16.mxu0 %v4146
    %6028 = vmatpush1.bf16.msra.mxu0 %v4145
    %6029 = vmatprep.subr.bf16.mxu0 %v4142
    %6030 = vmatpush1.bf16.msra.mxu0 %v4141
    %6031 = vmatprep.subr.bf16.mxu0 %v4202
    %6032 = vmatpush2.bf16.msra.mxu0 %v4201
    %6033 = vmatprep.subr.bf16.mxu0 %v4198
    %6034 = vmatpush2.bf16.msra.mxu0 %v4197
    %6035 = vmatprep.subr.bf16.mxu0 %v4194
    %6036 = vmatpush2.bf16.msra.mxu0 %v4193
    %6037 = vmatprep.subr.bf16.mxu0 %v4190
    %6038 = vmatpush2.bf16.msra.mxu0 %v4189
    %6039 = vmatprep.subr.bf16.mxu0 %v4186
    %6040 = vmatpush2.bf16.msra.mxu0 %v4185
    %6041 = vmatprep.subr.bf16.mxu0 %v4182
    %6042 = vmatpush2.bf16.msra.mxu0 %v4181
    %6043 = vmatprep.subr.bf16.mxu0 %v4178
    %6044 = vmatpush2.bf16.msra.mxu0 %v4177
    %6045 = vmatprep.subr.bf16.mxu0 %v4174
    %6046 = vmatpush2.bf16.msra.mxu0 %v4173
    %6047 = vmatprep.mubr.bf16.mxu0 %v126
    %6048 = vmatmul.mubr.bf16.gmra.mxu0 %v125
    %v6049 = vpop.f32.mrf.mxu0
    %v6050 = vadd.f32 %v6009, %v6049
    %v6051 = vpop.f32.mrf.mxu0
    %v6052 = vadd.f32 %v6011, %v6051
    %v6053 = vpop.f32.mrf.mxu0
    %v6054 = vpop.f32.mrf.mxu0
    %6055 = vdwg.mxu0
    %6056 = vmatprep.subr.bf16.mxu0 %v4234
    %6057 = vmatpush1.bf16.msra.mxu0 %v4233
    %6058 = vmatprep.subr.bf16.mxu0 %v4230
    %6059 = vmatpush1.bf16.msra.mxu0 %v4229
    %6060 = vmatprep.subr.bf16.mxu0 %v4226
    %6061 = vmatpush1.bf16.msra.mxu0 %v4225
    %6062 = vmatprep.subr.bf16.mxu0 %v4222
    %6063 = vmatpush1.bf16.msra.mxu0 %v4221
    %6064 = vmatprep.subr.bf16.mxu0 %v4218
    %6065 = vmatpush1.bf16.msra.mxu0 %v4217
    %6066 = vmatprep.subr.bf16.mxu0 %v4214
    %6067 = vmatpush1.bf16.msra.mxu0 %v4213
    %6068 = vmatprep.subr.bf16.mxu0 %v4210
    %6069 = vmatpush1.bf16.msra.mxu0 %v4209
    %6070 = vmatprep.subr.bf16.mxu0 %v4206
    %6071 = vmatpush1.bf16.msra.mxu0 %v4205
    %6072 = vmatprep.subr.bf16.mxu0 %v4266
    %6073 = vmatpush2.bf16.msra.mxu0 %v4265
    %6074 = vmatprep.subr.bf16.mxu0 %v4262
    %6075 = vmatpush2.bf16.msra.mxu0 %v4261
    %6076 = vmatprep.subr.bf16.mxu0 %v4258
    %6077 = vmatpush2.bf16.msra.mxu0 %v4257
    %6078 = vmatprep.subr.bf16.mxu0 %v4254
    %6079 = vmatpush2.bf16.msra.mxu0 %v4253
    %6080 = vmatprep.subr.bf16.mxu0 %v4250
    %6081 = vmatpush2.bf16.msra.mxu0 %v4249
    %6082 = vmatprep.subr.bf16.mxu0 %v4246
    %6083 = vmatpush2.bf16.msra.mxu0 %v4245
    %6084 = vmatprep.subr.bf16.mxu0 %v4242
    %6085 = vmatpush2.bf16.msra.mxu0 %v4241
    %6086 = vmatprep.subr.bf16.mxu0 %v4238
    %6087 = vmatpush2.bf16.msra.mxu0 %v4237
    %6088 = vmatprep.mubr.bf16.mxu0 %v128
    %6089 = vmatmul.mubr.bf16.gmra.mxu0 %v127
    %v6090 = vpop.f32.mrf.mxu0
    %v6091 = vadd.f32 %v6050, %v6090
    %v6092 = vpop.f32.mrf.mxu0
    %v6093 = vadd.f32 %v6052, %v6092
    %v6094 = vpop.f32.mrf.mxu0
    %v6095 = vpop.f32.mrf.mxu0
    %6096 = vdwg.mxu0
    %6097 = vmatprep.subr.bf16.mxu0 %v4298
    %6098 = vmatpush1.bf16.msra.mxu0 %v4297
    %6099 = vmatprep.subr.bf16.mxu0 %v4294
    %6100 = vmatpush1.bf16.msra.mxu0 %v4293
    %6101 = vmatprep.subr.bf16.mxu0 %v4290
    %6102 = vmatpush1.bf16.msra.mxu0 %v4289
    %6103 = vmatprep.subr.bf16.mxu0 %v4286
    %6104 = vmatpush1.bf16.msra.mxu0 %v4285
    %6105 = vmatprep.subr.bf16.mxu0 %v4282
    %6106 = vmatpush1.bf16.msra.mxu0 %v4281
    %6107 = vmatprep.subr.bf16.mxu0 %v4278
    %6108 = vmatpush1.bf16.msra.mxu0 %v4277
    %6109 = vmatprep.subr.bf16.mxu0 %v4274
    %6110 = vmatpush1.bf16.msra.mxu0 %v4273
    %6111 = vmatprep.subr.bf16.mxu0 %v4270
    %6112 = vmatpush1.bf16.msra.mxu0 %v4269
    %6113 = vmatprep.subr.bf16.mxu0 %v4330
    %6114 = vmatpush2.bf16.msra.mxu0 %v4329
    %6115 = vmatprep.subr.bf16.mxu0 %v4326
    %6116 = vmatpush2.bf16.msra.mxu0 %v4325
    %6117 = vmatprep.subr.bf16.mxu0 %v4322
    %6118 = vmatpush2.bf16.msra.mxu0 %v4321
    %6119 = vmatprep.subr.bf16.mxu0 %v4318
    %6120 = vmatpush2.bf16.msra.mxu0 %v4317
    %6121 = vmatprep.subr.bf16.mxu0 %v4314
    %6122 = vmatpush2.bf16.msra.mxu0 %v4313
    %6123 = vmatprep.subr.bf16.mxu0 %v4310
    %6124 = vmatpush2.bf16.msra.mxu0 %v4309
    %6125 = vmatprep.subr.bf16.mxu0 %v4306
    %6126 = vmatpush2.bf16.msra.mxu0 %v4305
    %6127 = vmatprep.subr.bf16.mxu0 %v4302
    %6128 = vmatpush2.bf16.msra.mxu0 %v4301
    %6129 = vmatprep.mubr.bf16.mxu0 %v130
    %6130 = vmatmul.mubr.bf16.gmra.mxu0 %v129
    %v6131 = vpop.f32.mrf.mxu0
    %v6132 = vadd.f32 %v6091, %v6131
    %v6133 = vpop.f32.mrf.mxu0
    %v6134 = vadd.f32 %v6093, %v6133
    %v6135 = vpop.f32.mrf.mxu0
    %v6136 = vpop.f32.mrf.mxu0
    %6137 = vdwg.mxu0
    %6138 = vmatprep.subr.bf16.mxu0 %v4362
    %6139 = vmatpush1.bf16.msra.mxu0 %v4361
    %6140 = vmatprep.subr.bf16.mxu0 %v4358
    %6141 = vmatpush1.bf16.msra.mxu0 %v4357
    %6142 = vmatprep.subr.bf16.mxu0 %v4354
    %6143 = vmatpush1.bf16.msra.mxu0 %v4353
    %6144 = vmatprep.subr.bf16.mxu0 %v4350
    %6145 = vmatpush1.bf16.msra.mxu0 %v4349
    %6146 = vmatprep.subr.bf16.mxu0 %v4346
    %6147 = vmatpush1.bf16.msra.mxu0 %v4345
    %6148 = vmatprep.subr.bf16.mxu0 %v4342
    %6149 = vmatpush1.bf16.msra.mxu0 %v4341
    %6150 = vmatprep.subr.bf16.mxu0 %v4338
    %6151 = vmatpush1.bf16.msra.mxu0 %v4337
    %6152 = vmatprep.subr.bf16.mxu0 %v4334
    %6153 = vmatpush1.bf16.msra.mxu0 %v4333
    %6154 = vmatprep.subr.bf16.mxu0 %v4394
    %6155 = vmatpush2.bf16.msra.mxu0 %v4393
    %6156 = vmatprep.subr.bf16.mxu0 %v4390
    %6157 = vmatpush2.bf16.msra.mxu0 %v4389
    %6158 = vmatprep.subr.bf16.mxu0 %v4386
    %6159 = vmatpush2.bf16.msra.mxu0 %v4385
    %6160 = vmatprep.subr.bf16.mxu0 %v4382
    %6161 = vmatpush2.bf16.msra.mxu0 %v4381
    %6162 = vmatprep.subr.bf16.mxu0 %v4378
    %6163 = vmatpush2.bf16.msra.mxu0 %v4377
    %6164 = vmatprep.subr.bf16.mxu0 %v4374
    %6165 = vmatpush2.bf16.msra.mxu0 %v4373
    %6166 = vmatprep.subr.bf16.mxu0 %v4370
    %6167 = vmatpush2.bf16.msra.mxu0 %v4369
    %6168 = vmatprep.subr.bf16.mxu0 %v4366
    %6169 = vmatpush2.bf16.msra.mxu0 %v4365
    %6170 = vmatprep.mubr.bf16.mxu0 %v132
    %6171 = vmatmul.mubr.bf16.gmra.mxu0 %v131
    %v6172 = vpop.f32.mrf.mxu0
    %v6173 = vadd.f32 %v6132, %v6172
    %v6174 = vpop.f32.mrf.mxu0
    %v6175 = vadd.f32 %v6134, %v6174
    %v6176 = vpop.f32.mrf.mxu0
    %v6177 = vpop.f32.mrf.mxu0
    %6178 = vdwg.mxu0
    %6179 = vmatprep.subr.bf16.mxu0 %v4426
    %6180 = vmatpush1.bf16.msra.mxu0 %v4425
    %6181 = vmatprep.subr.bf16.mxu0 %v4422
    %6182 = vmatpush1.bf16.msra.mxu0 %v4421
    %6183 = vmatprep.subr.bf16.mxu0 %v4418
    %6184 = vmatpush1.bf16.msra.mxu0 %v4417
    %6185 = vmatprep.subr.bf16.mxu0 %v4414
    %6186 = vmatpush1.bf16.msra.mxu0 %v4413
    %6187 = vmatprep.subr.bf16.mxu0 %v4410
    %6188 = vmatpush1.bf16.msra.mxu0 %v4409
    %6189 = vmatprep.subr.bf16.mxu0 %v4406
    %6190 = vmatpush1.bf16.msra.mxu0 %v4405
    %6191 = vmatprep.subr.bf16.mxu0 %v4402
    %6192 = vmatpush1.bf16.msra.mxu0 %v4401
    %6193 = vmatprep.subr.bf16.mxu0 %v4398
    %6194 = vmatpush1.bf16.msra.mxu0 %v4397
    %6195 = vmatprep.subr.bf16.mxu0 %v4458
    %6196 = vmatpush2.bf16.msra.mxu0 %v4457
    %6197 = vmatprep.subr.bf16.mxu0 %v4454
    %6198 = vmatpush2.bf16.msra.mxu0 %v4453
    %6199 = vmatprep.subr.bf16.mxu0 %v4450
    %6200 = vmatpush2.bf16.msra.mxu0 %v4449
    %6201 = vmatprep.subr.bf16.mxu0 %v4446
    %6202 = vmatpush2.bf16.msra.mxu0 %v4445
    %6203 = vmatprep.subr.bf16.mxu0 %v4442
    %6204 = vmatpush2.bf16.msra.mxu0 %v4441
    %6205 = vmatprep.subr.bf16.mxu0 %v4438
    %6206 = vmatpush2.bf16.msra.mxu0 %v4437
    %6207 = vmatprep.subr.bf16.mxu0 %v4434
    %6208 = vmatpush2.bf16.msra.mxu0 %v4433
    %6209 = vmatprep.subr.bf16.mxu0 %v4430
    %6210 = vmatpush2.bf16.msra.mxu0 %v4429
    %6211 = vmatprep.mubr.bf16.mxu0 %v134
    %6212 = vmatmul.mubr.bf16.gmra.mxu0 %v133
    %v6213 = vpop.f32.mrf.mxu0
    %v6214 = vadd.f32 %v6173, %v6213
    %v6215 = vpop.f32.mrf.mxu0
    %v6216 = vadd.f32 %v6175, %v6215
    %v6217 = vpop.f32.mrf.mxu0
    %v6218 = vpop.f32.mrf.mxu0
    %6219 = vdwg.mxu0
    %6220 = vmatprep.subr.bf16.mxu0 %v4490
    %6221 = vmatpush1.bf16.msra.mxu0 %v4489
    %6222 = vmatprep.subr.bf16.mxu0 %v4486
    %6223 = vmatpush1.bf16.msra.mxu0 %v4485
    %6224 = vmatprep.subr.bf16.mxu0 %v4482
    %6225 = vmatpush1.bf16.msra.mxu0 %v4481
    %6226 = vmatprep.subr.bf16.mxu0 %v4478
    %6227 = vmatpush1.bf16.msra.mxu0 %v4477
    %6228 = vmatprep.subr.bf16.mxu0 %v4474
    %6229 = vmatpush1.bf16.msra.mxu0 %v4473
    %6230 = vmatprep.subr.bf16.mxu0 %v4470
    %6231 = vmatpush1.bf16.msra.mxu0 %v4469
    %6232 = vmatprep.subr.bf16.mxu0 %v4466
    %6233 = vmatpush1.bf16.msra.mxu0 %v4465
    %6234 = vmatprep.subr.bf16.mxu0 %v4462
    %6235 = vmatpush1.bf16.msra.mxu0 %v4461
    %6236 = vmatprep.subr.bf16.mxu0 %v4522
    %6237 = vmatpush2.bf16.msra.mxu0 %v4521
    %6238 = vmatprep.subr.bf16.mxu0 %v4518
    %6239 = vmatpush2.bf16.msra.mxu0 %v4517
    %6240 = vmatprep.subr.bf16.mxu0 %v4514
    %6241 = vmatpush2.bf16.msra.mxu0 %v4513
    %6242 = vmatprep.subr.bf16.mxu0 %v4510
    %6243 = vmatpush2.bf16.msra.mxu0 %v4509
    %6244 = vmatprep.subr.bf16.mxu0 %v4506
    %6245 = vmatpush2.bf16.msra.mxu0 %v4505
    %6246 = vmatprep.subr.bf16.mxu0 %v4502
    %6247 = vmatpush2.bf16.msra.mxu0 %v4501
    %6248 = vmatprep.subr.bf16.mxu0 %v4498
    %6249 = vmatpush2.bf16.msra.mxu0 %v4497
    %6250 = vmatprep.subr.bf16.mxu0 %v4494
    %6251 = vmatpush2.bf16.msra.mxu0 %v4493
    %6252 = vmatprep.mubr.bf16.mxu0 %v136
    %6253 = vmatmul.mubr.bf16.gmra.mxu0 %v135
    %v6254 = vpop.f32.mrf.mxu0
    %v6255 = vadd.f32 %v6214, %v6254
    %v6256 = vpop.f32.mrf.mxu0
    %v6257 = vadd.f32 %v6216, %v6256
    %v6258 = vpop.f32.mrf.mxu0
    %v6259 = vpop.f32.mrf.mxu0
    %6260 = vdwg.mxu0
    %6261 = vmatprep.subr.bf16.mxu0 %v4554
    %6262 = vmatpush1.bf16.msra.mxu0 %v4553
    %6263 = vmatprep.subr.bf16.mxu0 %v4550
    %6264 = vmatpush1.bf16.msra.mxu0 %v4549
    %6265 = vmatprep.subr.bf16.mxu0 %v4546
    %6266 = vmatpush1.bf16.msra.mxu0 %v4545
    %6267 = vmatprep.subr.bf16.mxu0 %v4542
    %6268 = vmatpush1.bf16.msra.mxu0 %v4541
    %6269 = vmatprep.subr.bf16.mxu0 %v4538
    %6270 = vmatpush1.bf16.msra.mxu0 %v4537
    %6271 = vmatprep.subr.bf16.mxu0 %v4534
    %6272 = vmatpush1.bf16.msra.mxu0 %v4533
    %6273 = vmatprep.subr.bf16.mxu0 %v4530
    %6274 = vmatpush1.bf16.msra.mxu0 %v4529
    %6275 = vmatprep.subr.bf16.mxu0 %v4526
    %6276 = vmatpush1.bf16.msra.mxu0 %v4525
    %6277 = vmatprep.subr.bf16.mxu0 %v4586
    %6278 = vmatpush2.bf16.msra.mxu0 %v4585
    %6279 = vmatprep.subr.bf16.mxu0 %v4582
    %6280 = vmatpush2.bf16.msra.mxu0 %v4581
    %6281 = vmatprep.subr.bf16.mxu0 %v4578
    %6282 = vmatpush2.bf16.msra.mxu0 %v4577
    %6283 = vmatprep.subr.bf16.mxu0 %v4574
    %6284 = vmatpush2.bf16.msra.mxu0 %v4573
    %6285 = vmatprep.subr.bf16.mxu0 %v4570
    %6286 = vmatpush2.bf16.msra.mxu0 %v4569
    %6287 = vmatprep.subr.bf16.mxu0 %v4566
    %6288 = vmatpush2.bf16.msra.mxu0 %v4565
    %6289 = vmatprep.subr.bf16.mxu0 %v4562
    %6290 = vmatpush2.bf16.msra.mxu0 %v4561
    %6291 = vmatprep.subr.bf16.mxu0 %v4558
    %6292 = vmatpush2.bf16.msra.mxu0 %v4557
    %6293 = vmatprep.mubr.bf16.mxu0 %v138
    %6294 = vmatmul.mubr.bf16.gmra.mxu0 %v137
    %v6295 = vpop.f32.mrf.mxu0
    %v6296 = vadd.f32 %v6255, %v6295
    %v6297 = vpop.f32.mrf.mxu0
    %v6298 = vadd.f32 %v6257, %v6297
    %v6299 = vpop.f32.mrf.mxu0
    %v6300 = vpop.f32.mrf.mxu0
    %6301 = vdwg.mxu0
    %6302 = vmatprep.subr.bf16.mxu0 %v4618
    %6303 = vmatpush1.bf16.msra.mxu0 %v4617
    %6304 = vmatprep.subr.bf16.mxu0 %v4614
    %6305 = vmatpush1.bf16.msra.mxu0 %v4613
    %6306 = vmatprep.subr.bf16.mxu0 %v4610
    %6307 = vmatpush1.bf16.msra.mxu0 %v4609
    %6308 = vmatprep.subr.bf16.mxu0 %v4606
    %6309 = vmatpush1.bf16.msra.mxu0 %v4605
    %6310 = vmatprep.subr.bf16.mxu0 %v4602
    %6311 = vmatpush1.bf16.msra.mxu0 %v4601
    %6312 = vmatprep.subr.bf16.mxu0 %v4598
    %6313 = vmatpush1.bf16.msra.mxu0 %v4597
    %6314 = vmatprep.subr.bf16.mxu0 %v4594
    %6315 = vmatpush1.bf16.msra.mxu0 %v4593
    %6316 = vmatprep.subr.bf16.mxu0 %v4590
    %6317 = vmatpush1.bf16.msra.mxu0 %v4589
    %6318 = vmatprep.subr.bf16.mxu0 %v4650
    %6319 = vmatpush2.bf16.msra.mxu0 %v4649
    %6320 = vmatprep.subr.bf16.mxu0 %v4646
    %6321 = vmatpush2.bf16.msra.mxu0 %v4645
    %6322 = vmatprep.subr.bf16.mxu0 %v4642
    %6323 = vmatpush2.bf16.msra.mxu0 %v4641
    %6324 = vmatprep.subr.bf16.mxu0 %v4638
    %6325 = vmatpush2.bf16.msra.mxu0 %v4637
    %6326 = vmatprep.subr.bf16.mxu0 %v4634
    %6327 = vmatpush2.bf16.msra.mxu0 %v4633
    %6328 = vmatprep.subr.bf16.mxu0 %v4630
    %6329 = vmatpush2.bf16.msra.mxu0 %v4629
    %6330 = vmatprep.subr.bf16.mxu0 %v4626
    %6331 = vmatpush2.bf16.msra.mxu0 %v4625
    %6332 = vmatprep.subr.bf16.mxu0 %v4622
    %6333 = vmatpush2.bf16.msra.mxu0 %v4621
    %6334 = vmatprep.mubr.bf16.mxu0 %v140
    %6335 = vmatmul.mubr.bf16.gmra.mxu0 %v139
    %v6336 = vpop.f32.mrf.mxu0
    %v6337 = vadd.f32 %v6296, %v6336
    %v6338 = vpop.f32.mrf.mxu0
    %v6339 = vadd.f32 %v6298, %v6338
    %v6340 = vpop.f32.mrf.mxu0
    %v6341 = vpop.f32.mrf.mxu0
    %6342 = vdwg.mxu0
    %6343 = vmatprep.subr.bf16.mxu0 %v4682
    %6344 = vmatpush1.bf16.msra.mxu0 %v4681
    %6345 = vmatprep.subr.bf16.mxu0 %v4678
    %6346 = vmatpush1.bf16.msra.mxu0 %v4677
    %6347 = vmatprep.subr.bf16.mxu0 %v4674
    %6348 = vmatpush1.bf16.msra.mxu0 %v4673
    %6349 = vmatprep.subr.bf16.mxu0 %v4670
    %6350 = vmatpush1.bf16.msra.mxu0 %v4669
    %6351 = vmatprep.subr.bf16.mxu0 %v4666
    %6352 = vmatpush1.bf16.msra.mxu0 %v4665
    %6353 = vmatprep.subr.bf16.mxu0 %v4662
    %6354 = vmatpush1.bf16.msra.mxu0 %v4661
    %6355 = vmatprep.subr.bf16.mxu0 %v4658
    %6356 = vmatpush1.bf16.msra.mxu0 %v4657
    %6357 = vmatprep.subr.bf16.mxu0 %v4654
    %6358 = vmatpush1.bf16.msra.mxu0 %v4653
    %6359 = vmatprep.subr.bf16.mxu0 %v4714
    %6360 = vmatpush2.bf16.msra.mxu0 %v4713
    %6361 = vmatprep.subr.bf16.mxu0 %v4710
    %6362 = vmatpush2.bf16.msra.mxu0 %v4709
    %6363 = vmatprep.subr.bf16.mxu0 %v4706
    %6364 = vmatpush2.bf16.msra.mxu0 %v4705
    %6365 = vmatprep.subr.bf16.mxu0 %v4702
    %6366 = vmatpush2.bf16.msra.mxu0 %v4701
    %6367 = vmatprep.subr.bf16.mxu0 %v4698
    %6368 = vmatpush2.bf16.msra.mxu0 %v4697
    %6369 = vmatprep.subr.bf16.mxu0 %v4694
    %6370 = vmatpush2.bf16.msra.mxu0 %v4693
    %6371 = vmatprep.subr.bf16.mxu0 %v4690
    %6372 = vmatpush2.bf16.msra.mxu0 %v4689
    %6373 = vmatprep.subr.bf16.mxu0 %v4686
    %6374 = vmatpush2.bf16.msra.mxu0 %v4685
    %6375 = vmatprep.mubr.bf16.mxu0 %v142
    %6376 = vmatmul.mubr.bf16.gmra.mxu0 %v141
    %v6377 = vpop.f32.mrf.mxu0
    %v6378 = vadd.f32 %v6337, %v6377
    %v6379 = vpop.f32.mrf.mxu0
    %v6380 = vadd.f32 %v6339, %v6379
    %v6381 = vpop.f32.mrf.mxu0
    %v6382 = vpop.f32.mrf.mxu0
    %6383 = vdwg.mxu0
    %6384 = vmatprep.subr.bf16.mxu0 %v4746
    %6385 = vmatpush1.bf16.msra.mxu0 %v4745
    %6386 = vmatprep.subr.bf16.mxu0 %v4742
    %6387 = vmatpush1.bf16.msra.mxu0 %v4741
    %6388 = vmatprep.subr.bf16.mxu0 %v4738
    %6389 = vmatpush1.bf16.msra.mxu0 %v4737
    %6390 = vmatprep.subr.bf16.mxu0 %v4734
    %6391 = vmatpush1.bf16.msra.mxu0 %v4733
    %6392 = vmatprep.subr.bf16.mxu0 %v4730
    %6393 = vmatpush1.bf16.msra.mxu0 %v4729
    %6394 = vmatprep.subr.bf16.mxu0 %v4726
    %6395 = vmatpush1.bf16.msra.mxu0 %v4725
    %6396 = vmatprep.subr.bf16.mxu0 %v4722
    %6397 = vmatpush1.bf16.msra.mxu0 %v4721
    %6398 = vmatprep.subr.bf16.mxu0 %v4718
    %6399 = vmatpush1.bf16.msra.mxu0 %v4717
    %6400 = vmatprep.subr.bf16.mxu0 %v4778
    %6401 = vmatpush2.bf16.msra.mxu0 %v4777
    %6402 = vmatprep.subr.bf16.mxu0 %v4774
    %6403 = vmatpush2.bf16.msra.mxu0 %v4773
    %6404 = vmatprep.subr.bf16.mxu0 %v4770
    %6405 = vmatpush2.bf16.msra.mxu0 %v4769
    %6406 = vmatprep.subr.bf16.mxu0 %v4766
    %6407 = vmatpush2.bf16.msra.mxu0 %v4765
    %6408 = vmatprep.subr.bf16.mxu0 %v4762
    %6409 = vmatpush2.bf16.msra.mxu0 %v4761
    %6410 = vmatprep.subr.bf16.mxu0 %v4758
    %6411 = vmatpush2.bf16.msra.mxu0 %v4757
    %6412 = vmatprep.subr.bf16.mxu0 %v4754
    %6413 = vmatpush2.bf16.msra.mxu0 %v4753
    %6414 = vmatprep.subr.bf16.mxu0 %v4750
    %6415 = vmatpush2.bf16.msra.mxu0 %v4749
    %6416 = vmatprep.mubr.bf16.mxu0 %v144
    %6417 = vmatmul.mubr.bf16.gmra.mxu0 %v143
    %v6418 = vpop.f32.mrf.mxu0
    %v6419 = vadd.f32 %v6378, %v6418
    %v6420 = vpop.f32.mrf.mxu0
    %v6421 = vadd.f32 %v6380, %v6420
    %v6422 = vpop.f32.mrf.mxu0
    %v6423 = vpop.f32.mrf.mxu0
    %6424 = vdwg.mxu0
    %6425 = vmatprep.subr.bf16.mxu0 %v4810
    %6426 = vmatpush1.bf16.msra.mxu0 %v4809
    %6427 = vmatprep.subr.bf16.mxu0 %v4806
    %6428 = vmatpush1.bf16.msra.mxu0 %v4805
    %6429 = vmatprep.subr.bf16.mxu0 %v4802
    %6430 = vmatpush1.bf16.msra.mxu0 %v4801
    %6431 = vmatprep.subr.bf16.mxu0 %v4798
    %6432 = vmatpush1.bf16.msra.mxu0 %v4797
    %6433 = vmatprep.subr.bf16.mxu0 %v4794
    %6434 = vmatpush1.bf16.msra.mxu0 %v4793
    %6435 = vmatprep.subr.bf16.mxu0 %v4790
    %6436 = vmatpush1.bf16.msra.mxu0 %v4789
    %6437 = vmatprep.subr.bf16.mxu0 %v4786
    %6438 = vmatpush1.bf16.msra.mxu0 %v4785
    %6439 = vmatprep.subr.bf16.mxu0 %v4782
    %6440 = vmatpush1.bf16.msra.mxu0 %v4781
    %6441 = vmatprep.subr.bf16.mxu0 %v4842
    %6442 = vmatpush2.bf16.msra.mxu0 %v4841
    %6443 = vmatprep.subr.bf16.mxu0 %v4838
    %6444 = vmatpush2.bf16.msra.mxu0 %v4837
    %6445 = vmatprep.subr.bf16.mxu0 %v4834
    %6446 = vmatpush2.bf16.msra.mxu0 %v4833
    %6447 = vmatprep.subr.bf16.mxu0 %v4830
    %6448 = vmatpush2.bf16.msra.mxu0 %v4829
    %6449 = vmatprep.subr.bf16.mxu0 %v4826
    %6450 = vmatpush2.bf16.msra.mxu0 %v4825
    %6451 = vmatprep.subr.bf16.mxu0 %v4822
    %6452 = vmatpush2.bf16.msra.mxu0 %v4821
    %6453 = vmatprep.subr.bf16.mxu0 %v4818
    %6454 = vmatpush2.bf16.msra.mxu0 %v4817
    %6455 = vmatprep.subr.bf16.mxu0 %v4814
    %6456 = vmatpush2.bf16.msra.mxu0 %v4813
    %6457 = vmatprep.mubr.bf16.mxu0 %v146
    %6458 = vmatmul.mubr.bf16.gmra.mxu0 %v145
    %v6459 = vpop.f32.mrf.mxu0
    %v6460 = vadd.f32 %v6419, %v6459
    %v6461 = vpop.f32.mrf.mxu0
    %v6462 = vadd.f32 %v6421, %v6461
    %v6463 = vpop.f32.mrf.mxu0
    %v6464 = vpop.f32.mrf.mxu0
    %6465 = vdwg.mxu0
    %6466 = vmatprep.subr.bf16.mxu0 %v4874
    %6467 = vmatpush1.bf16.msra.mxu0 %v4873
    %6468 = vmatprep.subr.bf16.mxu0 %v4870
    %6469 = vmatpush1.bf16.msra.mxu0 %v4869
    %6470 = vmatprep.subr.bf16.mxu0 %v4866
    %6471 = vmatpush1.bf16.msra.mxu0 %v4865
    %6472 = vmatprep.subr.bf16.mxu0 %v4862
    %6473 = vmatpush1.bf16.msra.mxu0 %v4861
    %6474 = vmatprep.subr.bf16.mxu0 %v4858
    %6475 = vmatpush1.bf16.msra.mxu0 %v4857
    %6476 = vmatprep.subr.bf16.mxu0 %v4854
    %6477 = vmatpush1.bf16.msra.mxu0 %v4853
    %6478 = vmatprep.subr.bf16.mxu0 %v4850
    %6479 = vmatpush1.bf16.msra.mxu0 %v4849
    %6480 = vmatprep.subr.bf16.mxu0 %v4846
    %6481 = vmatpush1.bf16.msra.mxu0 %v4845
    %6482 = vmatprep.subr.bf16.mxu0 %v4906
    %6483 = vmatpush2.bf16.msra.mxu0 %v4905
    %6484 = vmatprep.subr.bf16.mxu0 %v4902
    %6485 = vmatpush2.bf16.msra.mxu0 %v4901
    %6486 = vmatprep.subr.bf16.mxu0 %v4898
    %6487 = vmatpush2.bf16.msra.mxu0 %v4897
    %6488 = vmatprep.subr.bf16.mxu0 %v4894
    %6489 = vmatpush2.bf16.msra.mxu0 %v4893
    %6490 = vmatprep.subr.bf16.mxu0 %v4890
    %6491 = vmatpush2.bf16.msra.mxu0 %v4889
    %6492 = vmatprep.subr.bf16.mxu0 %v4886
    %6493 = vmatpush2.bf16.msra.mxu0 %v4885
    %6494 = vmatprep.subr.bf16.mxu0 %v4882
    %6495 = vmatpush2.bf16.msra.mxu0 %v4881
    %6496 = vmatprep.subr.bf16.mxu0 %v4878
    %6497 = vmatpush2.bf16.msra.mxu0 %v4877
    %6498 = vmatprep.mubr.bf16.mxu0 %v148
    %6499 = vmatmul.mubr.bf16.gmra.mxu0 %v147
    %v6500 = vpop.f32.mrf.mxu0
    %v6501 = vadd.f32 %v6460, %v6500
    %v6502 = vpop.f32.mrf.mxu0
    %v6503 = vadd.f32 %v6462, %v6502
    %v6504 = vpop.f32.mrf.mxu0
    %v6505 = vpop.f32.mrf.mxu0
    %6506 = vdwg.mxu0
    %6507 = vmatprep.subr.bf16.mxu0 %v4938
    %6508 = vmatpush1.bf16.msra.mxu0 %v4937
    %6509 = vmatprep.subr.bf16.mxu0 %v4934
    %6510 = vmatpush1.bf16.msra.mxu0 %v4933
    %6511 = vmatprep.subr.bf16.mxu0 %v4930
    %6512 = vmatpush1.bf16.msra.mxu0 %v4929
    %6513 = vmatprep.subr.bf16.mxu0 %v4926
    %6514 = vmatpush1.bf16.msra.mxu0 %v4925
    %6515 = vmatprep.subr.bf16.mxu0 %v4922
    %6516 = vmatpush1.bf16.msra.mxu0 %v4921
    %6517 = vmatprep.subr.bf16.mxu0 %v4918
    %6518 = vmatpush1.bf16.msra.mxu0 %v4917
    %6519 = vmatprep.subr.bf16.mxu0 %v4914
    %6520 = vmatpush1.bf16.msra.mxu0 %v4913
    %6521 = vmatprep.subr.bf16.mxu0 %v4910
    %6522 = vmatpush1.bf16.msra.mxu0 %v4909
    %6523 = vmatprep.subr.bf16.mxu0 %v4970
    %6524 = vmatpush2.bf16.msra.mxu0 %v4969
    %6525 = vmatprep.subr.bf16.mxu0 %v4966
    %6526 = vmatpush2.bf16.msra.mxu0 %v4965
    %6527 = vmatprep.subr.bf16.mxu0 %v4962
    %6528 = vmatpush2.bf16.msra.mxu0 %v4961
    %6529 = vmatprep.subr.bf16.mxu0 %v4958
    %6530 = vmatpush2.bf16.msra.mxu0 %v4957
    %6531 = vmatprep.subr.bf16.mxu0 %v4954
    %6532 = vmatpush2.bf16.msra.mxu0 %v4953
    %6533 = vmatprep.subr.bf16.mxu0 %v4950
    %6534 = vmatpush2.bf16.msra.mxu0 %v4949
    %6535 = vmatprep.subr.bf16.mxu0 %v4946
    %6536 = vmatpush2.bf16.msra.mxu0 %v4945
    %6537 = vmatprep.subr.bf16.mxu0 %v4942
    %6538 = vmatpush2.bf16.msra.mxu0 %v4941
    %6539 = vmatprep.mubr.bf16.mxu0 %v150
    %6540 = vmatmul.mubr.bf16.gmra.mxu0 %v149
    %v6541 = vpop.f32.mrf.mxu0
    %v6542 = vadd.f32 %v6501, %v6541
    %v6543 = vpop.f32.mrf.mxu0
    %v6544 = vadd.f32 %v6503, %v6543
    %v6545 = vpop.f32.mrf.mxu0
    %v6546 = vpop.f32.mrf.mxu0
    %6547 = vdwg.mxu0
    %6548 = vmatprep.subr.bf16.mxu0 %v4044
    %6549 = vmatpush1.bf16.msra.mxu0 %v4043
    %6550 = vmatprep.subr.bf16.mxu0 %v4040
    %6551 = vmatpush1.bf16.msra.mxu0 %v4039
    %6552 = vmatprep.subr.bf16.mxu0 %v4036
    %6553 = vmatpush1.bf16.msra.mxu0 %v4035
    %6554 = vmatprep.subr.bf16.mxu0 %v4032
    %6555 = vmatpush1.bf16.msra.mxu0 %v4031
    %6556 = vmatprep.subr.bf16.mxu0 %v4028
    %6557 = vmatpush1.bf16.msra.mxu0 %v4027
    %6558 = vmatprep.subr.bf16.mxu0 %v4024
    %6559 = vmatpush1.bf16.msra.mxu0 %v4023
    %6560 = vmatprep.subr.bf16.mxu0 %v4020
    %6561 = vmatpush1.bf16.msra.mxu0 %v4019
    %6562 = vmatprep.subr.bf16.mxu0 %v4016
    %6563 = vmatpush1.bf16.msra.mxu0 %v4015
    %6564 = vmatprep.subr.bf16.mxu0 %v4076
    %6565 = vmatpush2.bf16.msra.mxu0 %v4075
    %6566 = vmatprep.subr.bf16.mxu0 %v4072
    %6567 = vmatpush2.bf16.msra.mxu0 %v4071
    %6568 = vmatprep.subr.bf16.mxu0 %v4068
    %6569 = vmatpush2.bf16.msra.mxu0 %v4067
    %6570 = vmatprep.subr.bf16.mxu0 %v4064
    %6571 = vmatpush2.bf16.msra.mxu0 %v4063
    %6572 = vmatprep.subr.bf16.mxu0 %v4060
    %6573 = vmatpush2.bf16.msra.mxu0 %v4059
    %6574 = vmatprep.subr.bf16.mxu0 %v4056
    %6575 = vmatpush2.bf16.msra.mxu0 %v4055
    %6576 = vmatprep.subr.bf16.mxu0 %v4052
    %6577 = vmatpush2.bf16.msra.mxu0 %v4051
    %6578 = vmatprep.subr.bf16.mxu0 %v4048
    %6579 = vmatpush2.bf16.msra.mxu0 %v4047
    %6580 = vmatprep.mubr.bf16.mxu0 %v122
    %6581 = vmatmul.mubr.bf16.gmra.mxu0 %v121
    %v6582 = vpop.f32.mrf.mxu0
    %v6583 = vadd.f32 %v1124, %v6582
    %v6584 = vpop.f32.mrf.mxu0
    %v6585 = vadd.f32 %v1128, %v6584
    %v6586 = vpop.f32.mrf.mxu0
    %v6587 = vpop.f32.mrf.mxu0
    %6588 = vdwg.mxu0
    %6589 = vmatprep.subr.bf16.mxu0 %v4108
    %6590 = vmatpush1.bf16.msra.mxu0 %v4107
    %6591 = vmatprep.subr.bf16.mxu0 %v4104
    %6592 = vmatpush1.bf16.msra.mxu0 %v4103
    %6593 = vmatprep.subr.bf16.mxu0 %v4100
    %6594 = vmatpush1.bf16.msra.mxu0 %v4099
    %6595 = vmatprep.subr.bf16.mxu0 %v4096
    %6596 = vmatpush1.bf16.msra.mxu0 %v4095
    %6597 = vmatprep.subr.bf16.mxu0 %v4092
    %6598 = vmatpush1.bf16.msra.mxu0 %v4091
    %6599 = vmatprep.subr.bf16.mxu0 %v4088
    %6600 = vmatpush1.bf16.msra.mxu0 %v4087
    %6601 = vmatprep.subr.bf16.mxu0 %v4084
    %6602 = vmatpush1.bf16.msra.mxu0 %v4083
    %6603 = vmatprep.subr.bf16.mxu0 %v4080
    %6604 = vmatpush1.bf16.msra.mxu0 %v4079
    %6605 = vmatprep.subr.bf16.mxu0 %v4140
    %6606 = vmatpush2.bf16.msra.mxu0 %v4139
    %6607 = vmatprep.subr.bf16.mxu0 %v4136
    %6608 = vmatpush2.bf16.msra.mxu0 %v4135
    %6609 = vmatprep.subr.bf16.mxu0 %v4132
    %6610 = vmatpush2.bf16.msra.mxu0 %v4131
    %6611 = vmatprep.subr.bf16.mxu0 %v4128
    %6612 = vmatpush2.bf16.msra.mxu0 %v4127
    %6613 = vmatprep.subr.bf16.mxu0 %v4124
    %6614 = vmatpush2.bf16.msra.mxu0 %v4123
    %6615 = vmatprep.subr.bf16.mxu0 %v4120
    %6616 = vmatpush2.bf16.msra.mxu0 %v4119
    %6617 = vmatprep.subr.bf16.mxu0 %v4116
    %6618 = vmatpush2.bf16.msra.mxu0 %v4115
    %6619 = vmatprep.subr.bf16.mxu0 %v4112
    %6620 = vmatpush2.bf16.msra.mxu0 %v4111
    %6621 = vmatprep.mubr.bf16.mxu0 %v124
    %6622 = vmatmul.mubr.bf16.gmra.mxu0 %v123
    %v6623 = vpop.f32.mrf.mxu0
    %v6624 = vadd.f32 %v6583, %v6623
    %v6625 = vpop.f32.mrf.mxu0
    %v6626 = vadd.f32 %v6585, %v6625
    %v6627 = vpop.f32.mrf.mxu0
    %v6628 = vpop.f32.mrf.mxu0
    %6629 = vdwg.mxu0
    %6630 = vmatprep.subr.bf16.mxu0 %v4172
    %6631 = vmatpush1.bf16.msra.mxu0 %v4171
    %6632 = vmatprep.subr.bf16.mxu0 %v4168
    %6633 = vmatpush1.bf16.msra.mxu0 %v4167
    %6634 = vmatprep.subr.bf16.mxu0 %v4164
    %6635 = vmatpush1.bf16.msra.mxu0 %v4163
    %6636 = vmatprep.subr.bf16.mxu0 %v4160
    %6637 = vmatpush1.bf16.msra.mxu0 %v4159
    %6638 = vmatprep.subr.bf16.mxu0 %v4156
    %6639 = vmatpush1.bf16.msra.mxu0 %v4155
    %6640 = vmatprep.subr.bf16.mxu0 %v4152
    %6641 = vmatpush1.bf16.msra.mxu0 %v4151
    %6642 = vmatprep.subr.bf16.mxu0 %v4148
    %6643 = vmatpush1.bf16.msra.mxu0 %v4147
    %6644 = vmatprep.subr.bf16.mxu0 %v4144
    %6645 = vmatpush1.bf16.msra.mxu0 %v4143
    %6646 = vmatprep.subr.bf16.mxu0 %v4204
    %6647 = vmatpush2.bf16.msra.mxu0 %v4203
    %6648 = vmatprep.subr.bf16.mxu0 %v4200
    %6649 = vmatpush2.bf16.msra.mxu0 %v4199
    %6650 = vmatprep.subr.bf16.mxu0 %v4196
    %6651 = vmatpush2.bf16.msra.mxu0 %v4195
    %6652 = vmatprep.subr.bf16.mxu0 %v4192
    %6653 = vmatpush2.bf16.msra.mxu0 %v4191
    %6654 = vmatprep.subr.bf16.mxu0 %v4188
    %6655 = vmatpush2.bf16.msra.mxu0 %v4187
    %6656 = vmatprep.subr.bf16.mxu0 %v4184
    %6657 = vmatpush2.bf16.msra.mxu0 %v4183
    %6658 = vmatprep.subr.bf16.mxu0 %v4180
    %6659 = vmatpush2.bf16.msra.mxu0 %v4179
    %6660 = vmatprep.subr.bf16.mxu0 %v4176
    %6661 = vmatpush2.bf16.msra.mxu0 %v4175
    %6662 = vmatprep.mubr.bf16.mxu0 %v126
    %6663 = vmatmul.mubr.bf16.gmra.mxu0 %v125
    %v6664 = vpop.f32.mrf.mxu0
    %v6665 = vadd.f32 %v6624, %v6664
    %v6666 = vpop.f32.mrf.mxu0
    %v6667 = vadd.f32 %v6626, %v6666
    %v6668 = vpop.f32.mrf.mxu0
    %v6669 = vpop.f32.mrf.mxu0
    %6670 = vdwg.mxu0
    %6671 = vmatprep.subr.bf16.mxu0 %v4236
    %6672 = vmatpush1.bf16.msra.mxu0 %v4235
    %6673 = vmatprep.subr.bf16.mxu0 %v4232
    %6674 = vmatpush1.bf16.msra.mxu0 %v4231
    %6675 = vmatprep.subr.bf16.mxu0 %v4228
    %6676 = vmatpush1.bf16.msra.mxu0 %v4227
    %6677 = vmatprep.subr.bf16.mxu0 %v4224
    %6678 = vmatpush1.bf16.msra.mxu0 %v4223
    %6679 = vmatprep.subr.bf16.mxu0 %v4220
    %6680 = vmatpush1.bf16.msra.mxu0 %v4219
    %6681 = vmatprep.subr.bf16.mxu0 %v4216
    %6682 = vmatpush1.bf16.msra.mxu0 %v4215
    %6683 = vmatprep.subr.bf16.mxu0 %v4212
    %6684 = vmatpush1.bf16.msra.mxu0 %v4211
    %6685 = vmatprep.subr.bf16.mxu0 %v4208
    %6686 = vmatpush1.bf16.msra.mxu0 %v4207
    %6687 = vmatprep.subr.bf16.mxu0 %v4268
    %6688 = vmatpush2.bf16.msra.mxu0 %v4267
    %6689 = vmatprep.subr.bf16.mxu0 %v4264
    %6690 = vmatpush2.bf16.msra.mxu0 %v4263
    %6691 = vmatprep.subr.bf16.mxu0 %v4260
    %6692 = vmatpush2.bf16.msra.mxu0 %v4259
    %6693 = vmatprep.subr.bf16.mxu0 %v4256
    %6694 = vmatpush2.bf16.msra.mxu0 %v4255
    %6695 = vmatprep.subr.bf16.mxu0 %v4252
    %6696 = vmatpush2.bf16.msra.mxu0 %v4251
    %6697 = vmatprep.subr.bf16.mxu0 %v4248
    %6698 = vmatpush2.bf16.msra.mxu0 %v4247
    %6699 = vmatprep.subr.bf16.mxu0 %v4244
    %6700 = vmatpush2.bf16.msra.mxu0 %v4243
    %6701 = vmatprep.subr.bf16.mxu0 %v4240
    %6702 = vmatpush2.bf16.msra.mxu0 %v4239
    %6703 = vmatprep.mubr.bf16.mxu0 %v128
    %6704 = vmatmul.mubr.bf16.gmra.mxu0 %v127
    %v6705 = vpop.f32.mrf.mxu0
    %v6706 = vadd.f32 %v6665, %v6705
    %v6707 = vpop.f32.mrf.mxu0
    %v6708 = vadd.f32 %v6667, %v6707
    %v6709 = vpop.f32.mrf.mxu0
    %v6710 = vpop.f32.mrf.mxu0
    %6711 = vdwg.mxu0
    %6712 = vmatprep.subr.bf16.mxu0 %v4300
    %6713 = vmatpush1.bf16.msra.mxu0 %v4299
    %6714 = vmatprep.subr.bf16.mxu0 %v4296
    %6715 = vmatpush1.bf16.msra.mxu0 %v4295
    %6716 = vmatprep.subr.bf16.mxu0 %v4292
    %6717 = vmatpush1.bf16.msra.mxu0 %v4291
    %6718 = vmatprep.subr.bf16.mxu0 %v4288
    %6719 = vmatpush1.bf16.msra.mxu0 %v4287
    %6720 = vmatprep.subr.bf16.mxu0 %v4284
    %6721 = vmatpush1.bf16.msra.mxu0 %v4283
    %6722 = vmatprep.subr.bf16.mxu0 %v4280
    %6723 = vmatpush1.bf16.msra.mxu0 %v4279
    %6724 = vmatprep.subr.bf16.mxu0 %v4276
    %6725 = vmatpush1.bf16.msra.mxu0 %v4275
    %6726 = vmatprep.subr.bf16.mxu0 %v4272
    %6727 = vmatpush1.bf16.msra.mxu0 %v4271
    %6728 = vmatprep.subr.bf16.mxu0 %v4332
    %6729 = vmatpush2.bf16.msra.mxu0 %v4331
    %6730 = vmatprep.subr.bf16.mxu0 %v4328
    %6731 = vmatpush2.bf16.msra.mxu0 %v4327
    %6732 = vmatprep.subr.bf16.mxu0 %v4324
    %6733 = vmatpush2.bf16.msra.mxu0 %v4323
    %6734 = vmatprep.subr.bf16.mxu0 %v4320
    %6735 = vmatpush2.bf16.msra.mxu0 %v4319
    %6736 = vmatprep.subr.bf16.mxu0 %v4316
    %6737 = vmatpush2.bf16.msra.mxu0 %v4315
    %6738 = vmatprep.subr.bf16.mxu0 %v4312
    %6739 = vmatpush2.bf16.msra.mxu0 %v4311
    %6740 = vmatprep.subr.bf16.mxu0 %v4308
    %6741 = vmatpush2.bf16.msra.mxu0 %v4307
    %6742 = vmatprep.subr.bf16.mxu0 %v4304
    %6743 = vmatpush2.bf16.msra.mxu0 %v4303
    %6744 = vmatprep.mubr.bf16.mxu0 %v130
    %6745 = vmatmul.mubr.bf16.gmra.mxu0 %v129
    %v6746 = vpop.f32.mrf.mxu0
    %v6747 = vadd.f32 %v6706, %v6746
    %v6748 = vpop.f32.mrf.mxu0
    %v6749 = vadd.f32 %v6708, %v6748
    %v6750 = vpop.f32.mrf.mxu0
    %v6751 = vpop.f32.mrf.mxu0
    %6752 = vdwg.mxu0
    %6753 = vmatprep.subr.bf16.mxu0 %v4364
    %6754 = vmatpush1.bf16.msra.mxu0 %v4363
    %6755 = vmatprep.subr.bf16.mxu0 %v4360
    %6756 = vmatpush1.bf16.msra.mxu0 %v4359
    %6757 = vmatprep.subr.bf16.mxu0 %v4356
    %6758 = vmatpush1.bf16.msra.mxu0 %v4355
    %6759 = vmatprep.subr.bf16.mxu0 %v4352
    %6760 = vmatpush1.bf16.msra.mxu0 %v4351
    %6761 = vmatprep.subr.bf16.mxu0 %v4348
    %6762 = vmatpush1.bf16.msra.mxu0 %v4347
    %6763 = vmatprep.subr.bf16.mxu0 %v4344
    %6764 = vmatpush1.bf16.msra.mxu0 %v4343
    %6765 = vmatprep.subr.bf16.mxu0 %v4340
    %6766 = vmatpush1.bf16.msra.mxu0 %v4339
    %6767 = vmatprep.subr.bf16.mxu0 %v4336
    %6768 = vmatpush1.bf16.msra.mxu0 %v4335
    %6769 = vmatprep.subr.bf16.mxu0 %v4396
    %6770 = vmatpush2.bf16.msra.mxu0 %v4395
    %6771 = vmatprep.subr.bf16.mxu0 %v4392
    %6772 = vmatpush2.bf16.msra.mxu0 %v4391
    %6773 = vmatprep.subr.bf16.mxu0 %v4388
    %6774 = vmatpush2.bf16.msra.mxu0 %v4387
    %6775 = vmatprep.subr.bf16.mxu0 %v4384
    %6776 = vmatpush2.bf16.msra.mxu0 %v4383
    %6777 = vmatprep.subr.bf16.mxu0 %v4380
    %6778 = vmatpush2.bf16.msra.mxu0 %v4379
    %6779 = vmatprep.subr.bf16.mxu0 %v4376
    %6780 = vmatpush2.bf16.msra.mxu0 %v4375
    %6781 = vmatprep.subr.bf16.mxu0 %v4372
    %6782 = vmatpush2.bf16.msra.mxu0 %v4371
    %6783 = vmatprep.subr.bf16.mxu0 %v4368
    %6784 = vmatpush2.bf16.msra.mxu0 %v4367
    %6785 = vmatprep.mubr.bf16.mxu0 %v132
    %6786 = vmatmul.mubr.bf16.gmra.mxu0 %v131
    %v6787 = vpop.f32.mrf.mxu0
    %v6788 = vadd.f32 %v6747, %v6787
    %v6789 = vpop.f32.mrf.mxu0
    %v6790 = vadd.f32 %v6749, %v6789
    %v6791 = vpop.f32.mrf.mxu0
    %v6792 = vpop.f32.mrf.mxu0
    %6793 = vdwg.mxu0
    %6794 = vmatprep.subr.bf16.mxu0 %v4428
    %6795 = vmatpush1.bf16.msra.mxu0 %v4427
    %6796 = vmatprep.subr.bf16.mxu0 %v4424
    %6797 = vmatpush1.bf16.msra.mxu0 %v4423
    %6798 = vmatprep.subr.bf16.mxu0 %v4420
    %6799 = vmatpush1.bf16.msra.mxu0 %v4419
    %6800 = vmatprep.subr.bf16.mxu0 %v4416
    %6801 = vmatpush1.bf16.msra.mxu0 %v4415
    %6802 = vmatprep.subr.bf16.mxu0 %v4412
    %6803 = vmatpush1.bf16.msra.mxu0 %v4411
    %6804 = vmatprep.subr.bf16.mxu0 %v4408
    %6805 = vmatpush1.bf16.msra.mxu0 %v4407
    %6806 = vmatprep.subr.bf16.mxu0 %v4404
    %6807 = vmatpush1.bf16.msra.mxu0 %v4403
    %6808 = vmatprep.subr.bf16.mxu0 %v4400
    %6809 = vmatpush1.bf16.msra.mxu0 %v4399
    %6810 = vmatprep.subr.bf16.mxu0 %v4460
    %6811 = vmatpush2.bf16.msra.mxu0 %v4459
    %6812 = vmatprep.subr.bf16.mxu0 %v4456
    %6813 = vmatpush2.bf16.msra.mxu0 %v4455
    %6814 = vmatprep.subr.bf16.mxu0 %v4452
    %6815 = vmatpush2.bf16.msra.mxu0 %v4451
    %6816 = vmatprep.subr.bf16.mxu0 %v4448
    %6817 = vmatpush2.bf16.msra.mxu0 %v4447
    %6818 = vmatprep.subr.bf16.mxu0 %v4444
    %6819 = vmatpush2.bf16.msra.mxu0 %v4443
    %6820 = vmatprep.subr.bf16.mxu0 %v4440
    %6821 = vmatpush2.bf16.msra.mxu0 %v4439
    %6822 = vmatprep.subr.bf16.mxu0 %v4436
    %6823 = vmatpush2.bf16.msra.mxu0 %v4435
    %6824 = vmatprep.subr.bf16.mxu0 %v4432
    %6825 = vmatpush2.bf16.msra.mxu0 %v4431
    %6826 = vmatprep.mubr.bf16.mxu0 %v134
    %6827 = vmatmul.mubr.bf16.gmra.mxu0 %v133
    %v6828 = vpop.f32.mrf.mxu0
    %v6829 = vadd.f32 %v6788, %v6828
    %v6830 = vpop.f32.mrf.mxu0
    %v6831 = vadd.f32 %v6790, %v6830
    %v6832 = vpop.f32.mrf.mxu0
    %v6833 = vpop.f32.mrf.mxu0
    %6834 = vdwg.mxu0
    %6835 = vmatprep.subr.bf16.mxu0 %v4492
    %6836 = vmatpush1.bf16.msra.mxu0 %v4491
    %6837 = vmatprep.subr.bf16.mxu0 %v4488
    %6838 = vmatpush1.bf16.msra.mxu0 %v4487
    %6839 = vmatprep.subr.bf16.mxu0 %v4484
    %6840 = vmatpush1.bf16.msra.mxu0 %v4483
    %6841 = vmatprep.subr.bf16.mxu0 %v4480
    %6842 = vmatpush1.bf16.msra.mxu0 %v4479
    %6843 = vmatprep.subr.bf16.mxu0 %v4476
    %6844 = vmatpush1.bf16.msra.mxu0 %v4475
    %6845 = vmatprep.subr.bf16.mxu0 %v4472
    %6846 = vmatpush1.bf16.msra.mxu0 %v4471
    %6847 = vmatprep.subr.bf16.mxu0 %v4468
    %6848 = vmatpush1.bf16.msra.mxu0 %v4467
    %6849 = vmatprep.subr.bf16.mxu0 %v4464
    %6850 = vmatpush1.bf16.msra.mxu0 %v4463
    %6851 = vmatprep.subr.bf16.mxu0 %v4524
    %6852 = vmatpush2.bf16.msra.mxu0 %v4523
    %6853 = vmatprep.subr.bf16.mxu0 %v4520
    %6854 = vmatpush2.bf16.msra.mxu0 %v4519
    %6855 = vmatprep.subr.bf16.mxu0 %v4516
    %6856 = vmatpush2.bf16.msra.mxu0 %v4515
    %6857 = vmatprep.subr.bf16.mxu0 %v4512
    %6858 = vmatpush2.bf16.msra.mxu0 %v4511
    %6859 = vmatprep.subr.bf16.mxu0 %v4508
    %6860 = vmatpush2.bf16.msra.mxu0 %v4507
    %6861 = vmatprep.subr.bf16.mxu0 %v4504
    %6862 = vmatpush2.bf16.msra.mxu0 %v4503
    %6863 = vmatprep.subr.bf16.mxu0 %v4500
    %6864 = vmatpush2.bf16.msra.mxu0 %v4499
    %6865 = vmatprep.subr.bf16.mxu0 %v4496
    %6866 = vmatpush2.bf16.msra.mxu0 %v4495
    %6867 = vmatprep.mubr.bf16.mxu0 %v136
    %6868 = vmatmul.mubr.bf16.gmra.mxu0 %v135
    %v6869 = vpop.f32.mrf.mxu0
    %v6870 = vadd.f32 %v6829, %v6869
    %v6871 = vpop.f32.mrf.mxu0
    %v6872 = vadd.f32 %v6831, %v6871
    %v6873 = vpop.f32.mrf.mxu0
    %v6874 = vpop.f32.mrf.mxu0
    %6875 = vdwg.mxu0
    %6876 = vmatprep.subr.bf16.mxu0 %v4556
    %6877 = vmatpush1.bf16.msra.mxu0 %v4555
    %6878 = vmatprep.subr.bf16.mxu0 %v4552
    %6879 = vmatpush1.bf16.msra.mxu0 %v4551
    %6880 = vmatprep.subr.bf16.mxu0 %v4548
    %6881 = vmatpush1.bf16.msra.mxu0 %v4547
    %6882 = vmatprep.subr.bf16.mxu0 %v4544
    %6883 = vmatpush1.bf16.msra.mxu0 %v4543
    %6884 = vmatprep.subr.bf16.mxu0 %v4540
    %6885 = vmatpush1.bf16.msra.mxu0 %v4539
    %6886 = vmatprep.subr.bf16.mxu0 %v4536
    %6887 = vmatpush1.bf16.msra.mxu0 %v4535
    %6888 = vmatprep.subr.bf16.mxu0 %v4532
    %6889 = vmatpush1.bf16.msra.mxu0 %v4531
    %6890 = vmatprep.subr.bf16.mxu0 %v4528
    %6891 = vmatpush1.bf16.msra.mxu0 %v4527
    %6892 = vmatprep.subr.bf16.mxu0 %v4588
    %6893 = vmatpush2.bf16.msra.mxu0 %v4587
    %6894 = vmatprep.subr.bf16.mxu0 %v4584
    %6895 = vmatpush2.bf16.msra.mxu0 %v4583
    %6896 = vmatprep.subr.bf16.mxu0 %v4580
    %6897 = vmatpush2.bf16.msra.mxu0 %v4579
    %6898 = vmatprep.subr.bf16.mxu0 %v4576
    %6899 = vmatpush2.bf16.msra.mxu0 %v4575
    %6900 = vmatprep.subr.bf16.mxu0 %v4572
    %6901 = vmatpush2.bf16.msra.mxu0 %v4571
    %6902 = vmatprep.subr.bf16.mxu0 %v4568
    %6903 = vmatpush2.bf16.msra.mxu0 %v4567
    %6904 = vmatprep.subr.bf16.mxu0 %v4564
    %6905 = vmatpush2.bf16.msra.mxu0 %v4563
    %6906 = vmatprep.subr.bf16.mxu0 %v4560
    %6907 = vmatpush2.bf16.msra.mxu0 %v4559
    %6908 = vmatprep.mubr.bf16.mxu0 %v138
    %6909 = vmatmul.mubr.bf16.gmra.mxu0 %v137
    %v6910 = vpop.f32.mrf.mxu0
    %v6911 = vadd.f32 %v6870, %v6910
    %v6912 = vpop.f32.mrf.mxu0
    %v6913 = vadd.f32 %v6872, %v6912
    %v6914 = vpop.f32.mrf.mxu0
    %v6915 = vpop.f32.mrf.mxu0
    %6916 = vdwg.mxu0
    %6917 = vmatprep.subr.bf16.mxu0 %v4620
    %6918 = vmatpush1.bf16.msra.mxu0 %v4619
    %6919 = vmatprep.subr.bf16.mxu0 %v4616
    %6920 = vmatpush1.bf16.msra.mxu0 %v4615
    %6921 = vmatprep.subr.bf16.mxu0 %v4612
    %6922 = vmatpush1.bf16.msra.mxu0 %v4611
    %6923 = vmatprep.subr.bf16.mxu0 %v4608
    %6924 = vmatpush1.bf16.msra.mxu0 %v4607
    %6925 = vmatprep.subr.bf16.mxu0 %v4604
    %6926 = vmatpush1.bf16.msra.mxu0 %v4603
    %6927 = vmatprep.subr.bf16.mxu0 %v4600
    %6928 = vmatpush1.bf16.msra.mxu0 %v4599
    %6929 = vmatprep.subr.bf16.mxu0 %v4596
    %6930 = vmatpush1.bf16.msra.mxu0 %v4595
    %6931 = vmatprep.subr.bf16.mxu0 %v4592
    %6932 = vmatpush1.bf16.msra.mxu0 %v4591
    %6933 = vmatprep.subr.bf16.mxu0 %v4652
    %6934 = vmatpush2.bf16.msra.mxu0 %v4651
    %6935 = vmatprep.subr.bf16.mxu0 %v4648
    %6936 = vmatpush2.bf16.msra.mxu0 %v4647
    %6937 = vmatprep.subr.bf16.mxu0 %v4644
    %6938 = vmatpush2.bf16.msra.mxu0 %v4643
    %6939 = vmatprep.subr.bf16.mxu0 %v4640
    %6940 = vmatpush2.bf16.msra.mxu0 %v4639
    %6941 = vmatprep.subr.bf16.mxu0 %v4636
    %6942 = vmatpush2.bf16.msra.mxu0 %v4635
    %6943 = vmatprep.subr.bf16.mxu0 %v4632
    %6944 = vmatpush2.bf16.msra.mxu0 %v4631
    %6945 = vmatprep.subr.bf16.mxu0 %v4628
    %6946 = vmatpush2.bf16.msra.mxu0 %v4627
    %6947 = vmatprep.subr.bf16.mxu0 %v4624
    %6948 = vmatpush2.bf16.msra.mxu0 %v4623
    %6949 = vmatprep.mubr.bf16.mxu0 %v140
    %6950 = vmatmul.mubr.bf16.gmra.mxu0 %v139
    %v6951 = vpop.f32.mrf.mxu0
    %v6952 = vadd.f32 %v6911, %v6951
    %v6953 = vpop.f32.mrf.mxu0
    %v6954 = vadd.f32 %v6913, %v6953
    %v6955 = vpop.f32.mrf.mxu0
    %v6956 = vpop.f32.mrf.mxu0
    %6957 = vdwg.mxu0
    %6958 = vmatprep.subr.bf16.mxu0 %v4684
    %6959 = vmatpush1.bf16.msra.mxu0 %v4683
    %6960 = vmatprep.subr.bf16.mxu0 %v4680
    %6961 = vmatpush1.bf16.msra.mxu0 %v4679
    %6962 = vmatprep.subr.bf16.mxu0 %v4676
    %6963 = vmatpush1.bf16.msra.mxu0 %v4675
    %6964 = vmatprep.subr.bf16.mxu0 %v4672
    %6965 = vmatpush1.bf16.msra.mxu0 %v4671
    %6966 = vmatprep.subr.bf16.mxu0 %v4668
    %6967 = vmatpush1.bf16.msra.mxu0 %v4667
    %6968 = vmatprep.subr.bf16.mxu0 %v4664
    %6969 = vmatpush1.bf16.msra.mxu0 %v4663
    %6970 = vmatprep.subr.bf16.mxu0 %v4660
    %6971 = vmatpush1.bf16.msra.mxu0 %v4659
    %6972 = vmatprep.subr.bf16.mxu0 %v4656
    %6973 = vmatpush1.bf16.msra.mxu0 %v4655
    %6974 = vmatprep.subr.bf16.mxu0 %v4716
    %6975 = vmatpush2.bf16.msra.mxu0 %v4715
    %6976 = vmatprep.subr.bf16.mxu0 %v4712
    %6977 = vmatpush2.bf16.msra.mxu0 %v4711
    %6978 = vmatprep.subr.bf16.mxu0 %v4708
    %6979 = vmatpush2.bf16.msra.mxu0 %v4707
    %6980 = vmatprep.subr.bf16.mxu0 %v4704
    %6981 = vmatpush2.bf16.msra.mxu0 %v4703
    %6982 = vmatprep.subr.bf16.mxu0 %v4700
    %6983 = vmatpush2.bf16.msra.mxu0 %v4699
    %6984 = vmatprep.subr.bf16.mxu0 %v4696
    %6985 = vmatpush2.bf16.msra.mxu0 %v4695
    %6986 = vmatprep.subr.bf16.mxu0 %v4692
    %6987 = vmatpush2.bf16.msra.mxu0 %v4691
    %6988 = vmatprep.subr.bf16.mxu0 %v4688
    %6989 = vmatpush2.bf16.msra.mxu0 %v4687
    %6990 = vmatprep.mubr.bf16.mxu0 %v142
    %6991 = vmatmul.mubr.bf16.gmra.mxu0 %v141
    %v6992 = vpop.f32.mrf.mxu0
    %v6993 = vadd.f32 %v6952, %v6992
    %v6994 = vpop.f32.mrf.mxu0
    %v6995 = vadd.f32 %v6954, %v6994
    %v6996 = vpop.f32.mrf.mxu0
    %v6997 = vpop.f32.mrf.mxu0
    %6998 = vdwg.mxu0
    %6999 = vmatprep.subr.bf16.mxu0 %v4748
    %7000 = vmatpush1.bf16.msra.mxu0 %v4747
    %7001 = vmatprep.subr.bf16.mxu0 %v4744
    %7002 = vmatpush1.bf16.msra.mxu0 %v4743
    %7003 = vmatprep.subr.bf16.mxu0 %v4740
    %7004 = vmatpush1.bf16.msra.mxu0 %v4739
    %7005 = vmatprep.subr.bf16.mxu0 %v4736
    %7006 = vmatpush1.bf16.msra.mxu0 %v4735
    %7007 = vmatprep.subr.bf16.mxu0 %v4732
    %7008 = vmatpush1.bf16.msra.mxu0 %v4731
    %7009 = vmatprep.subr.bf16.mxu0 %v4728
    %7010 = vmatpush1.bf16.msra.mxu0 %v4727
    %7011 = vmatprep.subr.bf16.mxu0 %v4724
    %7012 = vmatpush1.bf16.msra.mxu0 %v4723
    %7013 = vmatprep.subr.bf16.mxu0 %v4720
    %7014 = vmatpush1.bf16.msra.mxu0 %v4719
    %7015 = vmatprep.subr.bf16.mxu0 %v4780
    %7016 = vmatpush2.bf16.msra.mxu0 %v4779
    %7017 = vmatprep.subr.bf16.mxu0 %v4776
    %7018 = vmatpush2.bf16.msra.mxu0 %v4775
    %7019 = vmatprep.subr.bf16.mxu0 %v4772
    %7020 = vmatpush2.bf16.msra.mxu0 %v4771
    %7021 = vmatprep.subr.bf16.mxu0 %v4768
    %7022 = vmatpush2.bf16.msra.mxu0 %v4767
    %7023 = vmatprep.subr.bf16.mxu0 %v4764
    %7024 = vmatpush2.bf16.msra.mxu0 %v4763
    %7025 = vmatprep.subr.bf16.mxu0 %v4760
    %7026 = vmatpush2.bf16.msra.mxu0 %v4759
    %7027 = vmatprep.subr.bf16.mxu0 %v4756
    %7028 = vmatpush2.bf16.msra.mxu0 %v4755
    %7029 = vmatprep.subr.bf16.mxu0 %v4752
    %7030 = vmatpush2.bf16.msra.mxu0 %v4751
    %7031 = vmatprep.mubr.bf16.mxu0 %v144
    %7032 = vmatmul.mubr.bf16.gmra.mxu0 %v143
    %v7033 = vpop.f32.mrf.mxu0
    %v7034 = vadd.f32 %v6993, %v7033
    %v7035 = vpop.f32.mrf.mxu0
    %v7036 = vadd.f32 %v6995, %v7035
    %v7037 = vpop.f32.mrf.mxu0
    %v7038 = vpop.f32.mrf.mxu0
    %7039 = vdwg.mxu0
    %7040 = vmatprep.subr.bf16.mxu0 %v4812
    %7041 = vmatpush1.bf16.msra.mxu0 %v4811
    %7042 = vmatprep.subr.bf16.mxu0 %v4808
    %7043 = vmatpush1.bf16.msra.mxu0 %v4807
    %7044 = vmatprep.subr.bf16.mxu0 %v4804
    %7045 = vmatpush1.bf16.msra.mxu0 %v4803
    %7046 = vmatprep.subr.bf16.mxu0 %v4800
    %7047 = vmatpush1.bf16.msra.mxu0 %v4799
    %7048 = vmatprep.subr.bf16.mxu0 %v4796
    %7049 = vmatpush1.bf16.msra.mxu0 %v4795
    %7050 = vmatprep.subr.bf16.mxu0 %v4792
    %7051 = vmatpush1.bf16.msra.mxu0 %v4791
    %7052 = vmatprep.subr.bf16.mxu0 %v4788
    %7053 = vmatpush1.bf16.msra.mxu0 %v4787
    %7054 = vmatprep.subr.bf16.mxu0 %v4784
    %7055 = vmatpush1.bf16.msra.mxu0 %v4783
    %7056 = vmatprep.subr.bf16.mxu0 %v4844
    %7057 = vmatpush2.bf16.msra.mxu0 %v4843
    %7058 = vmatprep.subr.bf16.mxu0 %v4840
    %7059 = vmatpush2.bf16.msra.mxu0 %v4839
    %7060 = vmatprep.subr.bf16.mxu0 %v4836
    %7061 = vmatpush2.bf16.msra.mxu0 %v4835
    %7062 = vmatprep.subr.bf16.mxu0 %v4832
    %7063 = vmatpush2.bf16.msra.mxu0 %v4831
    %7064 = vmatprep.subr.bf16.mxu0 %v4828
    %7065 = vmatpush2.bf16.msra.mxu0 %v4827
    %7066 = vmatprep.subr.bf16.mxu0 %v4824
    %7067 = vmatpush2.bf16.msra.mxu0 %v4823
    %7068 = vmatprep.subr.bf16.mxu0 %v4820
    %7069 = vmatpush2.bf16.msra.mxu0 %v4819
    %7070 = vmatprep.subr.bf16.mxu0 %v4816
    %7071 = vmatpush2.bf16.msra.mxu0 %v4815
    %7072 = vmatprep.mubr.bf16.mxu0 %v146
    %7073 = vmatmul.mubr.bf16.gmra.mxu0 %v145
    %v7074 = vpop.f32.mrf.mxu0
    %v7075 = vadd.f32 %v7034, %v7074
    %v7076 = vpop.f32.mrf.mxu0
    %v7077 = vadd.f32 %v7036, %v7076
    %v7078 = vpop.f32.mrf.mxu0
    %v7079 = vpop.f32.mrf.mxu0
    %7080 = vdwg.mxu0
    %7081 = vmatprep.subr.bf16.mxu0 %v4876
    %7082 = vmatpush1.bf16.msra.mxu0 %v4875
    %7083 = vmatprep.subr.bf16.mxu0 %v4872
    %7084 = vmatpush1.bf16.msra.mxu0 %v4871
    %7085 = vmatprep.subr.bf16.mxu0 %v4868
    %7086 = vmatpush1.bf16.msra.mxu0 %v4867
    %7087 = vmatprep.subr.bf16.mxu0 %v4864
    %7088 = vmatpush1.bf16.msra.mxu0 %v4863
    %7089 = vmatprep.subr.bf16.mxu0 %v4860
    %7090 = vmatpush1.bf16.msra.mxu0 %v4859
    %7091 = vmatprep.subr.bf16.mxu0 %v4856
    %7092 = vmatpush1.bf16.msra.mxu0 %v4855
    %7093 = vmatprep.subr.bf16.mxu0 %v4852
    %7094 = vmatpush1.bf16.msra.mxu0 %v4851
    %7095 = vmatprep.subr.bf16.mxu0 %v4848
    %7096 = vmatpush1.bf16.msra.mxu0 %v4847
    %7097 = vmatprep.subr.bf16.mxu0 %v4908
    %7098 = vmatpush2.bf16.msra.mxu0 %v4907
    %7099 = vmatprep.subr.bf16.mxu0 %v4904
    %7100 = vmatpush2.bf16.msra.mxu0 %v4903
    %7101 = vmatprep.subr.bf16.mxu0 %v4900
    %7102 = vmatpush2.bf16.msra.mxu0 %v4899
    %7103 = vmatprep.subr.bf16.mxu0 %v4896
    %7104 = vmatpush2.bf16.msra.mxu0 %v4895
    %7105 = vmatprep.subr.bf16.mxu0 %v4892
    %7106 = vmatpush2.bf16.msra.mxu0 %v4891
    %7107 = vmatprep.subr.bf16.mxu0 %v4888
    %7108 = vmatpush2.bf16.msra.mxu0 %v4887
    %7109 = vmatprep.subr.bf16.mxu0 %v4884
    %7110 = vmatpush2.bf16.msra.mxu0 %v4883
    %7111 = vmatprep.subr.bf16.mxu0 %v4880
    %7112 = vmatpush2.bf16.msra.mxu0 %v4879
    %7113 = vmatprep.mubr.bf16.mxu0 %v148
    %7114 = vmatmul.mubr.bf16.gmra.mxu0 %v147
    %v7115 = vpop.f32.mrf.mxu0
    %v7116 = vadd.f32 %v7075, %v7115
    %v7117 = vpop.f32.mrf.mxu0
    %v7118 = vadd.f32 %v7077, %v7117
    %v7119 = vpop.f32.mrf.mxu0
    %v7120 = vpop.f32.mrf.mxu0
    %7121 = vdwg.mxu0
    %7122 = vmatprep.subr.bf16.mxu0 %v4940
    %7123 = vmatpush1.bf16.msra.mxu0 %v4939
    %7124 = vmatprep.subr.bf16.mxu0 %v4936
    %7125 = vmatpush1.bf16.msra.mxu0 %v4935
    %7126 = vmatprep.subr.bf16.mxu0 %v4932
    %7127 = vmatpush1.bf16.msra.mxu0 %v4931
    %7128 = vmatprep.subr.bf16.mxu0 %v4928
    %7129 = vmatpush1.bf16.msra.mxu0 %v4927
    %7130 = vmatprep.subr.bf16.mxu0 %v4924
    %7131 = vmatpush1.bf16.msra.mxu0 %v4923
    %7132 = vmatprep.subr.bf16.mxu0 %v4920
    %7133 = vmatpush1.bf16.msra.mxu0 %v4919
    %7134 = vmatprep.subr.bf16.mxu0 %v4916
    %7135 = vmatpush1.bf16.msra.mxu0 %v4915
    %7136 = vmatprep.subr.bf16.mxu0 %v4912
    %7137 = vmatpush1.bf16.msra.mxu0 %v4911
    %7138 = vmatprep.subr.bf16.mxu0 %v4972
    %7139 = vmatpush2.bf16.msra.mxu0 %v4971
    %7140 = vmatprep.subr.bf16.mxu0 %v4968
    %7141 = vmatpush2.bf16.msra.mxu0 %v4967
    %7142 = vmatprep.subr.bf16.mxu0 %v4964
    %7143 = vmatpush2.bf16.msra.mxu0 %v4963
    %7144 = vmatprep.subr.bf16.mxu0 %v4960
    %7145 = vmatpush2.bf16.msra.mxu0 %v4959
    %7146 = vmatprep.subr.bf16.mxu0 %v4956
    %7147 = vmatpush2.bf16.msra.mxu0 %v4955
    %7148 = vmatprep.subr.bf16.mxu0 %v4952
    %7149 = vmatpush2.bf16.msra.mxu0 %v4951
    %7150 = vmatprep.subr.bf16.mxu0 %v4948
    %7151 = vmatpush2.bf16.msra.mxu0 %v4947
    %7152 = vmatprep.subr.bf16.mxu0 %v4944
    %7153 = vmatpush2.bf16.msra.mxu0 %v4943
    %7154 = vmatprep.mubr.bf16.mxu0 %v150
    %7155 = vmatmul.mubr.bf16.gmra.mxu0 %v149
    %v7156 = vpop.f32.mrf.mxu0
    %v7157 = vadd.f32 %v7116, %v7156
    %v7158 = vpop.f32.mrf.mxu0
    %v7159 = vadd.f32 %v7118, %v7158
    %v7160 = vpop.f32.mrf.mxu0
    %v7161 = vpop.f32.mrf.mxu0
    %7162 = vdwg.mxu0
    %vm7163 = vcmp.gt.f32.partialorder %v6542, 0.0
    %vm7164 = vcmp.gt.f32.partialorder %v6544, 0.0
    %vm7165 = vcmp.gt.f32.partialorder %v7157, 0.0
    %vm7166 = vcmp.gt.f32.partialorder %v7159, 0.0
    %v7167 = vmul.f32 %v6542, 0.2
    %v7168 = vmul.f32 %v6544, 0.2
    %v7169 = vmul.f32 %v7157, 0.2
    %v7170 = vmul.f32 %v7159, 0.2
    %v7171 = vsel %vm7163, %v6542, %v7167
    %v7172 = vsel %vm7164, %v6544, %v7168
    %v7173 = vsel %vm7165, %v7157, %v7169
    %v7174 = vsel %vm7166, %v7159, %v7170
    %v7175 = vpack.c.bf16 %v7171, %v7171
    %v7176 = vpack.c.bf16 %v7172, %v7172
    %v7177 = vpack.c.bf16 %v7173, %v7173
    %v7178 = vpack.c.bf16 %v7174, %v7174
    %v7179 = vld [vmem:[#allocation8] sm:$0xff]
    %v7180 = vld [vmem:[#allocation8 + $0x8] sm:$0xff]
    %v7181 = vld [vmem:[#allocation8 + $0x10] sm:$0xff]
    %v7182 = vld [vmem:[#allocation8 + $0x18] sm:$0xff]
    %v7183 = vld [vmem:[#allocation8 + $0x20] sm:$0xff]
    %v7184 = vld [vmem:[#allocation8 + $0x28] sm:$0xff]
    %v7185 = vld [vmem:[#allocation8 + $0x30] sm:$0xff]
    %v7186 = vld [vmem:[#allocation8 + $0x38] sm:$0xff]
    %v7187 = vld [vmem:[#allocation8 + $0x40] sm:$0xff]
    %v7188 = vld [vmem:[#allocation8 + $0x48] sm:$0xff]
    %v7189 = vld [vmem:[#allocation8 + $0x50] sm:$0xff]
    %v7190 = vld [vmem:[#allocation8 + $0x58] sm:$0xff]
    %v7191 = vld [vmem:[#allocation8 + $0x60] sm:$0xff]
    %v7192 = vld [vmem:[#allocation8 + $0x68] sm:$0xff]
    %v7193 = vld [vmem:[#allocation8 + $0x70] sm:$0xff]
    %v7194 = vld [vmem:[#allocation8 + $0x78] sm:$0xff]
    %v7195 = vld [vmem:[#allocation8 + $0x80] sm:$0xff]
    %v7196 = vld [vmem:[#allocation8 + $0x88] sm:$0xff]
    %v7197 = vld [vmem:[#allocation8 + $0x90] sm:$0xff]
    %v7198 = vld [vmem:[#allocation8 + $0x98] sm:$0xff]
    %v7199 = vld [vmem:[#allocation8 + $0xa0] sm:$0xff]
    %v7200 = vld [vmem:[#allocation8 + $0xa8] sm:$0xff]
    %v7201 = vld [vmem:[#allocation8 + $0xb0] sm:$0xff]
    %v7202 = vld [vmem:[#allocation8 + $0xb8] sm:$0xff]
    %v7203 = vld [vmem:[#allocation8 + $0xc0] sm:$0xff]
    %v7204 = vld [vmem:[#allocation8 + $0xc8] sm:$0xff]
    %v7205 = vld [vmem:[#allocation8 + $0xd0] sm:$0xff]
    %v7206 = vld [vmem:[#allocation8 + $0xd8] sm:$0xff]
    %v7207 = vld [vmem:[#allocation8 + $0xe0] sm:$0xff]
    %v7208 = vld [vmem:[#allocation8 + $0xe8] sm:$0xff]
    %v7209 = vld [vmem:[#allocation8 + $0xf0] sm:$0xff]
    %v7210 = vld [vmem:[#allocation8 + $0xf8] sm:$0xff]
    %v7211 = vld [vmem:[#allocation8 + $0x100] sm:$0xff]
    %v7212 = vld [vmem:[#allocation8 + $0x108] sm:$0xff]
    %v7213 = vld [vmem:[#allocation8 + $0x110] sm:$0xff]
    %v7214 = vld [vmem:[#allocation8 + $0x118] sm:$0xff]
    %v7215 = vld [vmem:[#allocation8 + $0x120] sm:$0xff]
    %v7216 = vld [vmem:[#allocation8 + $0x128] sm:$0xff]
    %v7217 = vld [vmem:[#allocation8 + $0x130] sm:$0xff]
    %v7218 = vld [vmem:[#allocation8 + $0x138] sm:$0xff]
    %v7219 = vld [vmem:[#allocation8 + $0x140] sm:$0xff]
    %v7220 = vld [vmem:[#allocation8 + $0x148] sm:$0xff]
    %v7221 = vld [vmem:[#allocation8 + $0x150] sm:$0xff]
    %v7222 = vld [vmem:[#allocation8 + $0x158] sm:$0xff]
    %v7223 = vld [vmem:[#allocation8 + $0x160] sm:$0xff]
    %v7224 = vld [vmem:[#allocation8 + $0x168] sm:$0xff]
    %v7225 = vld [vmem:[#allocation8 + $0x170] sm:$0xff]
    %v7226 = vld [vmem:[#allocation8 + $0x178] sm:$0xff]
    %v7227 = vld [vmem:[#allocation8 + $0x180] sm:$0xff]
    %v7228 = vld [vmem:[#allocation8 + $0x188] sm:$0xff]
    %v7229 = vld [vmem:[#allocation8 + $0x190] sm:$0xff]
    %v7230 = vld [vmem:[#allocation8 + $0x198] sm:$0xff]
    %v7231 = vld [vmem:[#allocation8 + $0x1a0] sm:$0xff]
    %v7232 = vld [vmem:[#allocation8 + $0x1a8] sm:$0xff]
    %v7233 = vld [vmem:[#allocation8 + $0x1b0] sm:$0xff]
    %v7234 = vld [vmem:[#allocation8 + $0x1b8] sm:$0xff]
    %v7235 = vld [vmem:[#allocation8 + $0x1c0] sm:$0xff]
    %v7236 = vld [vmem:[#allocation8 + $0x1c8] sm:$0xff]
    %v7237 = vld [vmem:[#allocation8 + $0x1d0] sm:$0xff]
    %v7238 = vld [vmem:[#allocation8 + $0x1d8] sm:$0xff]
    %v7239 = vld [vmem:[#allocation8 + $0x1e0] sm:$0xff]
    %v7240 = vld [vmem:[#allocation8 + $0x1e8] sm:$0xff]
    %v7241 = vld [vmem:[#allocation8 + $0x1f0] sm:$0xff]
    %v7242 = vld [vmem:[#allocation8 + $0x1f8] sm:$0xff]
    %v7243 = vld [vmem:[#allocation10] sm:$0x3]
    %v7245 = vlaneseq
    %v7246 = vshrl.u32 %v7245, 7
    %v7247 = vsub.s32 0, %v7246
    %v7248 = vrot.slane %v7243, %v7247
    %v7249 = vlaneseq
    %v7250 = vshrl.u32 %v7249, 7
    %v7251 = vsub.s32 1, %v7250
    %v7252 = vrot.slane %v7243, %v7251
    %v7319 = vunpack.c.l.b16 %v7179
    %v7320 = vunpack.c.h.b16 %v7179
    %v7321 = vunpack.c.l.b16 %v7180
    %v7322 = vunpack.c.h.b16 %v7180
    %v7323 = vunpack.c.l.b16 %v7181
    %v7324 = vunpack.c.h.b16 %v7181
    %v7325 = vunpack.c.l.b16 %v7182
    %v7326 = vunpack.c.h.b16 %v7182
    %v7327 = vunpack.c.l.b16 %v7183
    %v7328 = vunpack.c.h.b16 %v7183
    %v7329 = vunpack.c.l.b16 %v7184
    %v7330 = vunpack.c.h.b16 %v7184
    %v7331 = vunpack.c.l.b16 %v7185
    %v7332 = vunpack.c.h.b16 %v7185
    %v7333 = vunpack.c.l.b16 %v7186
    %v7334 = vunpack.c.h.b16 %v7186
    %v7335 = vunpack.c.l.b16 %v7187
    %v7336 = vunpack.c.h.b16 %v7187
    %v7337 = vunpack.c.l.b16 %v7188
    %v7338 = vunpack.c.h.b16 %v7188
    %v7339 = vunpack.c.l.b16 %v7189
    %v7340 = vunpack.c.h.b16 %v7189
    %v7341 = vunpack.c.l.b16 %v7190
    %v7342 = vunpack.c.h.b16 %v7190
    %v7343 = vunpack.c.l.b16 %v7191
    %v7344 = vunpack.c.h.b16 %v7191
    %v7345 = vunpack.c.l.b16 %v7192
    %v7346 = vunpack.c.h.b16 %v7192
    %v7347 = vunpack.c.l.b16 %v7193
    %v7348 = vunpack.c.h.b16 %v7193
    %v7349 = vunpack.c.l.b16 %v7194
    %v7350 = vunpack.c.h.b16 %v7194
    %v7351 = vunpack.c.l.b16 %v7195
    %v7352 = vunpack.c.h.b16 %v7195
    %v7353 = vunpack.c.l.b16 %v7196
    %v7354 = vunpack.c.h.b16 %v7196
    %v7355 = vunpack.c.l.b16 %v7197
    %v7356 = vunpack.c.h.b16 %v7197
    %v7357 = vunpack.c.l.b16 %v7198
    %v7358 = vunpack.c.h.b16 %v7198
    %v7359 = vunpack.c.l.b16 %v7199
    %v7360 = vunpack.c.h.b16 %v7199
    %v7361 = vunpack.c.l.b16 %v7200
    %v7362 = vunpack.c.h.b16 %v7200
    %v7363 = vunpack.c.l.b16 %v7201
    %v7364 = vunpack.c.h.b16 %v7201
    %v7365 = vunpack.c.l.b16 %v7202
    %v7366 = vunpack.c.h.b16 %v7202
    %v7367 = vunpack.c.l.b16 %v7203
    %v7368 = vunpack.c.h.b16 %v7203
    %v7369 = vunpack.c.l.b16 %v7204
    %v7370 = vunpack.c.h.b16 %v7204
    %v7371 = vunpack.c.l.b16 %v7205
    %v7372 = vunpack.c.h.b16 %v7205
    %v7373 = vunpack.c.l.b16 %v7206
    %v7374 = vunpack.c.h.b16 %v7206
    %v7375 = vunpack.c.l.b16 %v7207
    %v7376 = vunpack.c.h.b16 %v7207
    %v7377 = vunpack.c.l.b16 %v7208
    %v7378 = vunpack.c.h.b16 %v7208
    %v7379 = vunpack.c.l.b16 %v7209
    %v7380 = vunpack.c.h.b16 %v7209
    %v7381 = vunpack.c.l.b16 %v7210
    %v7382 = vunpack.c.h.b16 %v7210
    %v7383 = vunpack.c.l.b16 %v7211
    %v7384 = vunpack.c.h.b16 %v7211
    %v7385 = vunpack.c.l.b16 %v7212
    %v7386 = vunpack.c.h.b16 %v7212
    %v7387 = vunpack.c.l.b16 %v7213
    %v7388 = vunpack.c.h.b16 %v7213
    %v7389 = vunpack.c.l.b16 %v7214
    %v7390 = vunpack.c.h.b16 %v7214
    %v7391 = vunpack.c.l.b16 %v7215
    %v7392 = vunpack.c.h.b16 %v7215
    %v7393 = vunpack.c.l.b16 %v7216
    %v7394 = vunpack.c.h.b16 %v7216
    %v7395 = vunpack.c.l.b16 %v7217
    %v7396 = vunpack.c.h.b16 %v7217
    %v7397 = vunpack.c.l.b16 %v7218
    %v7398 = vunpack.c.h.b16 %v7218
    %v7399 = vunpack.c.l.b16 %v7219
    %v7400 = vunpack.c.h.b16 %v7219
    %v7401 = vunpack.c.l.b16 %v7220
    %v7402 = vunpack.c.h.b16 %v7220
    %v7403 = vunpack.c.l.b16 %v7221
    %v7404 = vunpack.c.h.b16 %v7221
    %v7405 = vunpack.c.l.b16 %v7222
    %v7406 = vunpack.c.h.b16 %v7222
    %v7407 = vunpack.c.l.b16 %v7223
    %v7408 = vunpack.c.h.b16 %v7223
    %v7409 = vunpack.c.l.b16 %v7224
    %v7410 = vunpack.c.h.b16 %v7224
    %v7411 = vunpack.c.l.b16 %v7225
    %v7412 = vunpack.c.h.b16 %v7225
    %v7413 = vunpack.c.l.b16 %v7226
    %v7414 = vunpack.c.h.b16 %v7226
    %v7415 = vunpack.c.l.b16 %v7227
    %v7416 = vunpack.c.h.b16 %v7227
    %v7417 = vunpack.c.l.b16 %v7228
    %v7418 = vunpack.c.h.b16 %v7228
    %v7419 = vunpack.c.l.b16 %v7229
    %v7420 = vunpack.c.h.b16 %v7229
    %v7421 = vunpack.c.l.b16 %v7230
    %v7422 = vunpack.c.h.b16 %v7230
    %v7423 = vunpack.c.l.b16 %v7231
    %v7424 = vunpack.c.h.b16 %v7231
    %v7425 = vunpack.c.l.b16 %v7232
    %v7426 = vunpack.c.h.b16 %v7232
    %v7427 = vunpack.c.l.b16 %v7233
    %v7428 = vunpack.c.h.b16 %v7233
    %v7429 = vunpack.c.l.b16 %v7234
    %v7430 = vunpack.c.h.b16 %v7234
    %v7431 = vunpack.c.l.b16 %v7235
    %v7432 = vunpack.c.h.b16 %v7235
    %v7433 = vunpack.c.l.b16 %v7236
    %v7434 = vunpack.c.h.b16 %v7236
    %v7435 = vunpack.c.l.b16 %v7237
    %v7436 = vunpack.c.h.b16 %v7237
    %v7437 = vunpack.c.l.b16 %v7238
    %v7438 = vunpack.c.h.b16 %v7238
    %v7439 = vunpack.c.l.b16 %v7239
    %v7440 = vunpack.c.h.b16 %v7239
    %v7441 = vunpack.c.l.b16 %v7240
    %v7442 = vunpack.c.h.b16 %v7240
    %v7443 = vunpack.c.l.b16 %v7241
    %v7444 = vunpack.c.h.b16 %v7241
    %v7445 = vunpack.c.l.b16 %v7242
    %v7446 = vunpack.c.h.b16 %v7242
    %v7447 = vpack.c.b16 %v7321, %v7319
    %v7448 = vpack.c.b16 %v7322, %v7320
    %v7449 = vpack.c.b16 %v7325, %v7323
    %v7450 = vpack.c.b16 %v7326, %v7324
    %v7451 = vpack.c.b16 %v7329, %v7327
    %v7452 = vpack.c.b16 %v7330, %v7328
    %v7453 = vpack.c.b16 %v7333, %v7331
    %v7454 = vpack.c.b16 %v7334, %v7332
    %v7455 = vpack.c.b16 %v7337, %v7335
    %v7456 = vpack.c.b16 %v7338, %v7336
    %v7457 = vpack.c.b16 %v7341, %v7339
    %v7458 = vpack.c.b16 %v7342, %v7340
    %v7459 = vpack.c.b16 %v7345, %v7343
    %v7460 = vpack.c.b16 %v7346, %v7344
    %v7461 = vpack.c.b16 %v7349, %v7347
    %v7462 = vpack.c.b16 %v7350, %v7348
    %v7463 = vpack.c.b16 %v7353, %v7351
    %v7464 = vpack.c.b16 %v7354, %v7352
    %v7465 = vpack.c.b16 %v7357, %v7355
    %v7466 = vpack.c.b16 %v7358, %v7356
    %v7467 = vpack.c.b16 %v7361, %v7359
    %v7468 = vpack.c.b16 %v7362, %v7360
    %v7469 = vpack.c.b16 %v7365, %v7363
    %v7470 = vpack.c.b16 %v7366, %v7364
    %v7471 = vpack.c.b16 %v7369, %v7367
    %v7472 = vpack.c.b16 %v7370, %v7368
    %v7473 = vpack.c.b16 %v7373, %v7371
    %v7474 = vpack.c.b16 %v7374, %v7372
    %v7475 = vpack.c.b16 %v7377, %v7375
    %v7476 = vpack.c.b16 %v7378, %v7376
    %v7477 = vpack.c.b16 %v7381, %v7379
    %v7478 = vpack.c.b16 %v7382, %v7380
    %v7479 = vpack.c.b16 %v7385, %v7383
    %v7480 = vpack.c.b16 %v7386, %v7384
    %v7481 = vpack.c.b16 %v7389, %v7387
    %v7482 = vpack.c.b16 %v7390, %v7388
    %v7483 = vpack.c.b16 %v7393, %v7391
    %v7484 = vpack.c.b16 %v7394, %v7392
    %v7485 = vpack.c.b16 %v7397, %v7395
    %v7486 = vpack.c.b16 %v7398, %v7396
    %v7487 = vpack.c.b16 %v7401, %v7399
    %v7488 = vpack.c.b16 %v7402, %v7400
    %v7489 = vpack.c.b16 %v7405, %v7403
    %v7490 = vpack.c.b16 %v7406, %v7404
    %v7491 = vpack.c.b16 %v7409, %v7407
    %v7492 = vpack.c.b16 %v7410, %v7408
    %v7493 = vpack.c.b16 %v7413, %v7411
    %v7494 = vpack.c.b16 %v7414, %v7412
    %v7495 = vpack.c.b16 %v7417, %v7415
    %v7496 = vpack.c.b16 %v7418, %v7416
    %v7497 = vpack.c.b16 %v7421, %v7419
    %v7498 = vpack.c.b16 %v7422, %v7420
    %v7499 = vpack.c.b16 %v7425, %v7423
    %v7500 = vpack.c.b16 %v7426, %v7424
    %v7501 = vpack.c.b16 %v7429, %v7427
    %v7502 = vpack.c.b16 %v7430, %v7428
    %v7503 = vpack.c.b16 %v7433, %v7431
    %v7504 = vpack.c.b16 %v7434, %v7432
    %v7505 = vpack.c.b16 %v7437, %v7435
    %v7506 = vpack.c.b16 %v7438, %v7436
    %v7507 = vpack.c.b16 %v7441, %v7439
    %v7508 = vpack.c.b16 %v7442, %v7440
    %v7509 = vpack.c.b16 %v7445, %v7443
    %v7510 = vpack.c.b16 %v7446, %v7444
    %7575 = vmatprep.subr.bf16.mxu0 %v7462
    %7576 = vmatpush1.bf16.msra.mxu0 %v7461
    %7577 = vmatprep.subr.bf16.mxu0 %v7460
    %7578 = vmatpush1.bf16.msra.mxu0 %v7459
    %7579 = vmatprep.subr.bf16.mxu0 %v7458
    %7580 = vmatpush1.bf16.msra.mxu0 %v7457
    %7581 = vmatprep.subr.bf16.mxu0 %v7456
    %7582 = vmatpush1.bf16.msra.mxu0 %v7455
    %7583 = vmatprep.subr.bf16.mxu0 %v7454
    %7584 = vmatpush1.bf16.msra.mxu0 %v7453
    %7585 = vmatprep.subr.bf16.mxu0 %v7452
    %7586 = vmatpush1.bf16.msra.mxu0 %v7451
    %7587 = vmatprep.subr.bf16.mxu0 %v7450
    %7588 = vmatpush1.bf16.msra.mxu0 %v7449
    %7589 = vmatprep.subr.bf16.mxu0 %v7448
    %7590 = vmatpush1.bf16.msra.mxu0 %v7447
    %7591 = vmatprep.subr.bf16.mxu0 %v7478
    %7592 = vmatpush2.bf16.msra.mxu0 %v7477
    %7593 = vmatprep.subr.bf16.mxu0 %v7476
    %7594 = vmatpush2.bf16.msra.mxu0 %v7475
    %7595 = vmatprep.subr.bf16.mxu0 %v7474
    %7596 = vmatpush2.bf16.msra.mxu0 %v7473
    %7597 = vmatprep.subr.bf16.mxu0 %v7472
    %7598 = vmatpush2.bf16.msra.mxu0 %v7471
    %7599 = vmatprep.subr.bf16.mxu0 %v7470
    %7600 = vmatpush2.bf16.msra.mxu0 %v7469
    %7601 = vmatprep.subr.bf16.mxu0 %v7468
    %7602 = vmatpush2.bf16.msra.mxu0 %v7467
    %7603 = vmatprep.subr.bf16.mxu0 %v7466
    %7604 = vmatpush2.bf16.msra.mxu0 %v7465
    %7605 = vmatprep.subr.bf16.mxu0 %v7464
    %7606 = vmatpush2.bf16.msra.mxu0 %v7463
    %7607 = vmatprep.mubr.bf16.mxu0 %v7176
    %7608 = vmatmul.mubr.bf16.gmra.mxu0 %v7175
    %v7609 = vpop.f32.mrf.mxu0
    %v7610 = vadd.f32 %v7248, %v7609
    %v7611 = vpop.f32.mrf.mxu0
    %v7612 = vadd.f32 %v7252, %v7611
    %v7613 = vpop.f32.mrf.mxu0
    %v7614 = vpop.f32.mrf.mxu0
    %7615 = vdwg.mxu0
    %7616 = vmatprep.subr.bf16.mxu0 %v7494
    %7617 = vmatpush1.bf16.msra.mxu0 %v7493
    %7618 = vmatprep.subr.bf16.mxu0 %v7492
    %7619 = vmatpush1.bf16.msra.mxu0 %v7491
    %7620 = vmatprep.subr.bf16.mxu0 %v7490
    %7621 = vmatpush1.bf16.msra.mxu0 %v7489
    %7622 = vmatprep.subr.bf16.mxu0 %v7488
    %7623 = vmatpush1.bf16.msra.mxu0 %v7487
    %7624 = vmatprep.subr.bf16.mxu0 %v7486
    %7625 = vmatpush1.bf16.msra.mxu0 %v7485
    %7626 = vmatprep.subr.bf16.mxu0 %v7484
    %7627 = vmatpush1.bf16.msra.mxu0 %v7483
    %7628 = vmatprep.subr.bf16.mxu0 %v7482
    %7629 = vmatpush1.bf16.msra.mxu0 %v7481
    %7630 = vmatprep.subr.bf16.mxu0 %v7480
    %7631 = vmatpush1.bf16.msra.mxu0 %v7479
    %7632 = vmatprep.subr.bf16.mxu0 %v7510
    %7633 = vmatpush2.bf16.msra.mxu0 %v7509
    %7634 = vmatprep.subr.bf16.mxu0 %v7508
    %7635 = vmatpush2.bf16.msra.mxu0 %v7507
    %7636 = vmatprep.subr.bf16.mxu0 %v7506
    %7637 = vmatpush2.bf16.msra.mxu0 %v7505
    %7638 = vmatprep.subr.bf16.mxu0 %v7504
    %7639 = vmatpush2.bf16.msra.mxu0 %v7503
    %7640 = vmatprep.subr.bf16.mxu0 %v7502
    %7641 = vmatpush2.bf16.msra.mxu0 %v7501
    %7642 = vmatprep.subr.bf16.mxu0 %v7500
    %7643 = vmatpush2.bf16.msra.mxu0 %v7499
    %7644 = vmatprep.subr.bf16.mxu0 %v7498
    %7645 = vmatpush2.bf16.msra.mxu0 %v7497
    %7646 = vmatprep.subr.bf16.mxu0 %v7496
    %7647 = vmatpush2.bf16.msra.mxu0 %v7495
    %7648 = vmatprep.mubr.bf16.mxu0 %v7178
    %7649 = vmatmul.mubr.bf16.gmra.mxu0 %v7177
    %v7650 = vpop.f32.mrf.mxu0
    %v7651 = vadd.f32 %v7610, %v7650
    %v7652 = vpop.f32.mrf.mxu0
    %v7653 = vadd.f32 %v7612, %v7652
    %v7654 = vpop.f32.mrf.mxu0
    %v7655 = vpop.f32.mrf.mxu0
    %7656 = vdwg.mxu0
    %vm7657 = vcmp.gt.f32.partialorder %v7651, 0.0
    %vm7658 = vcmp.gt.f32.partialorder %v7653, 0.0
    %v7659 = vmul.f32 %v7651, 0.2
    %v7660 = vmul.f32 %v7653, 0.2
    %v7661 = vsel %vm7657, %v7651, %v7659
    %v7662 = vsel %vm7658, %v7653, %v7660
    %v7663 = vpack.c.bf16 %v7661, %v7661
    %v7664 = vpack.c.bf16 %v7662, %v7662
    %v7665 = vld [vmem:[%s5] sm:$0xf]
    %v7666 = vld [vmem:[%s5 + $0x4] sm:$0xf]
    %v7667 = vld [vmem:[%s5 + $0x8] sm:$0xf]
    %v7668 = vld [vmem:[%s5 + $0xc] sm:$0xf]
    %v7669 = vld [vmem:[%s5 + $0x10] sm:$0xf]
    %v7670 = vld [vmem:[%s5 + $0x14] sm:$0xf]
    %v7671 = vld [vmem:[%s5 + $0x18] sm:$0xf]
    %v7672 = vld [vmem:[%s5 + $0x1c] sm:$0xf]
    %v7673 = vld [vmem:[%s5 + $0x20] sm:$0xf]
    %v7674 = vld [vmem:[%s5 + $0x24] sm:$0xf]
    %v7675 = vld [vmem:[%s5 + $0x28] sm:$0xf]
    %v7676 = vld [vmem:[%s5 + $0x2c] sm:$0xf]
    %v7677 = vld [vmem:[%s5 + $0x30] sm:$0xf]
    %v7678 = vld [vmem:[%s5 + $0x34] sm:$0xf]
    %v7679 = vld [vmem:[%s5 + $0x38] sm:$0xf]
    %v7680 = vld [vmem:[%s5 + $0x3c] sm:$0xf]
    %v7681 = vld [vmem:[%s5 + $0x40] sm:$0xf]
    %v7682 = vld [vmem:[%s5 + $0x44] sm:$0xf]
    %v7683 = vld [vmem:[%s5 + $0x48] sm:$0xf]
    %v7684 = vld [vmem:[%s5 + $0x4c] sm:$0xf]
    %v7685 = vld [vmem:[%s5 + $0x50] sm:$0xf]
    %v7686 = vld [vmem:[%s5 + $0x54] sm:$0xf]
    %v7687 = vld [vmem:[%s5 + $0x58] sm:$0xf]
    %v7688 = vld [vmem:[%s5 + $0x5c] sm:$0xf]
    %v7689 = vld [vmem:[%s5 + $0x60] sm:$0xf]
    %v7690 = vld [vmem:[%s5 + $0x64] sm:$0xf]
    %v7691 = vld [vmem:[%s5 + $0x68] sm:$0xf]
    %v7692 = vld [vmem:[%s5 + $0x6c] sm:$0xf]
    %v7693 = vld [vmem:[%s5 + $0x70] sm:$0xf]
    %v7694 = vld [vmem:[%s5 + $0x74] sm:$0xf]
    %v7695 = vld [vmem:[%s5 + $0x78] sm:$0xf]
    %v7696 = vld [vmem:[%s5 + $0x7c] sm:$0xf]
    %v7697 = vld [vmem:[#allocation2] sm:$0x1]
    %v7699 = vlaneseq
    %v7700 = vshrl.u32 %v7699, 7
    %v7701 = vsub.s32 0, %v7700
    %v7702 = vrot.slane %v7697, %v7701
    %v7736 = vunpack.c.l.b16 %v7665
    %v7737 = vunpack.c.l.b16 %v7666
    %v7738 = vunpack.c.l.b16 %v7667
    %v7739 = vunpack.c.l.b16 %v7668
    %v7740 = vunpack.c.l.b16 %v7669
    %v7741 = vunpack.c.l.b16 %v7670
    %v7742 = vunpack.c.l.b16 %v7671
    %v7743 = vunpack.c.l.b16 %v7672
    %v7744 = vunpack.c.l.b16 %v7673
    %v7745 = vunpack.c.l.b16 %v7674
    %v7746 = vunpack.c.l.b16 %v7675
    %v7747 = vunpack.c.l.b16 %v7676
    %v7748 = vunpack.c.l.b16 %v7677
    %v7749 = vunpack.c.l.b16 %v7678
    %v7750 = vunpack.c.l.b16 %v7679
    %v7751 = vunpack.c.l.b16 %v7680
    %v7752 = vunpack.c.l.b16 %v7681
    %v7753 = vunpack.c.l.b16 %v7682
    %v7754 = vunpack.c.l.b16 %v7683
    %v7755 = vunpack.c.l.b16 %v7684
    %v7756 = vunpack.c.l.b16 %v7685
    %v7757 = vunpack.c.l.b16 %v7686
    %v7758 = vunpack.c.l.b16 %v7687
    %v7759 = vunpack.c.l.b16 %v7688
    %v7760 = vunpack.c.l.b16 %v7689
    %v7761 = vunpack.c.l.b16 %v7690
    %v7762 = vunpack.c.l.b16 %v7691
    %v7763 = vunpack.c.l.b16 %v7692
    %v7764 = vunpack.c.l.b16 %v7693
    %v7765 = vunpack.c.l.b16 %v7694
    %v7766 = vunpack.c.l.b16 %v7695
    %v7767 = vunpack.c.l.b16 %v7696
    %v7768 = vpack.c.b16 %v7737, %v7736
    %v7769 = vpack.c.b16 %v7739, %v7738
    %v7770 = vpack.c.b16 %v7741, %v7740
    %v7771 = vpack.c.b16 %v7743, %v7742
    %v7772 = vpack.c.b16 %v7745, %v7744
    %v7773 = vpack.c.b16 %v7747, %v7746
    %v7774 = vpack.c.b16 %v7749, %v7748
    %v7775 = vpack.c.b16 %v7751, %v7750
    %v7776 = vpack.c.b16 %v7753, %v7752
    %v7777 = vpack.c.b16 %v7755, %v7754
    %v7778 = vpack.c.b16 %v7757, %v7756
    %v7779 = vpack.c.b16 %v7759, %v7758
    %v7780 = vpack.c.b16 %v7761, %v7760
    %v7781 = vpack.c.b16 %v7763, %v7762
    %v7782 = vpack.c.b16 %v7765, %v7764
    %v7783 = vpack.c.b16 %v7767, %v7766
    %7800 = vmatprep.subr.bf16.mxu0 0
    %7801 = vmatpush1.bf16.msra.mxu0 %v7775
    %7802 = vmatprep.subr.bf16.mxu0 0
    %7803 = vmatpush1.bf16.msra.mxu0 %v7774
    %7804 = vmatprep.subr.bf16.mxu0 0
    %7805 = vmatpush1.bf16.msra.mxu0 %v7773
    %7806 = vmatprep.subr.bf16.mxu0 0
    %7807 = vmatpush1.bf16.msra.mxu0 %v7772
    %7808 = vmatprep.subr.bf16.mxu0 0
    %7809 = vmatpush1.bf16.msra.mxu0 %v7771
    %7810 = vmatprep.subr.bf16.mxu0 0
    %7811 = vmatpush1.bf16.msra.mxu0 %v7770
    %7812 = vmatprep.subr.bf16.mxu0 0
    %7813 = vmatpush1.bf16.msra.mxu0 %v7769
    %7814 = vmatprep.subr.bf16.mxu0 0
    %7815 = vmatpush1.bf16.msra.mxu0 %v7768
    %7816 = vmatprep.subr.bf16.mxu0 0
    %7817 = vmatpush2.bf16.msra.mxu0 %v7783
    %7818 = vmatprep.subr.bf16.mxu0 0
    %7819 = vmatpush2.bf16.msra.mxu0 %v7782
    %7820 = vmatprep.subr.bf16.mxu0 0
    %7821 = vmatpush2.bf16.msra.mxu0 %v7781
    %7822 = vmatprep.subr.bf16.mxu0 0
    %7823 = vmatpush2.bf16.msra.mxu0 %v7780
    %7824 = vmatprep.subr.bf16.mxu0 0
    %7825 = vmatpush2.bf16.msra.mxu0 %v7779
    %7826 = vmatprep.subr.bf16.mxu0 0
    %7827 = vmatpush2.bf16.msra.mxu0 %v7778
    %7828 = vmatprep.subr.bf16.mxu0 0
    %7829 = vmatpush2.bf16.msra.mxu0 %v7777
    %7830 = vmatprep.subr.bf16.mxu0 0
    %7831 = vmatpush2.bf16.msra.mxu0 %v7776
    %7832 = vmatprep.mubr.bf16.mxu0 %v7664
    %7833 = vmatmul.mubr.bf16.gmra.mxu0 %v7663
    %v7834 = vpop.f32.mrf.mxu0
    %v7835 = vadd.f32 %v7702, %v7834
    %v7836 = vpop.f32.mrf.mxu0
    %v7837 = vpop.f32.mrf.mxu0
    %v7838 = vpop.f32.mrf.mxu0
    %7839 = vdwg.mxu0
    %v7840 = vxor.u32 %v7835, 2147483648
    %v7841 = vmul.f32 %v7840, 1.442695
    %v7842 = vpow.pop %v7841
    %v7843 = vadd.f32 %v7842, 1.0
    %v7844 = vrcp.pop %v7843
    %v7845 = vmul.f32 1.0, %v7844
    %vm7846 = vcmask 7168
    %7847 = vst.msk [vmem:[%s7] sm:$0xff] %vm7846, %v7845
    // Predicated region
    $region50: #{tpu_custom_call.1} parent=1 // pred_check
      _
    $region51: #{tpu_custom_call.1} parent=1 // pred_check_branch
      %7849 = sbr.rel (0) target = $region53
    $region52: #{tpu_custom_call.1} parent=1 // pred_region
      _
    $region53: #{tpu_custom_call.1} parent=1 // pred_fallthru
      _
    // Predicated region
    $region54: #{tpu_custom_call.1} parent=1 // pred_check
      _
    $region55: #{tpu_custom_call.1} parent=1 // pred_check_branch
      %7851 = sbr.rel (0) target = $region57
    $region56: #{tpu_custom_call.1} parent=1 // pred_region
      _
    $region57: #{tpu_custom_call.1} parent=1 // pred_fallthru
      _
    %7852 = vsyncpa [#allocation4], 1
    %7853 = vsyncpa [#allocation6], 1
    %7854 = vsyncpa [#allocation9], 1

</llo_original>
